<compile_context>
chip_gen: v5e
topology: v5e:2x2
jax: 0.10.0
libtpu: 0.0.40
codegen_flags: <defaults>
</compile_context>

<pallas_src>
import functools

import jax
import jax.numpy as jnp
from jax.experimental import pallas as pl
from jax.experimental.pallas import tpu as pltpu


def _scratch_offset(w):
    # Shift the padded image inside the scratch so the big interior store starts
    # on a sublane boundary (start index = off + (W+2) + 1 is a multiple of 8).
    return (-(w + 3)) % 8


# ----------------------------- Pallas kernel -------------------------------

def _conv_block_kernel(x_ref, mask_ref, w1_ref, w2_ref, w3_ref,
                       b1_ref, b2_ref, b3_ref, o_ref, s_ref, *, H, W):
    """Fused bottleneck for one image; all intermediates stay in VMEM.

    Row space is "padded-width": each image row carries 2 trailing junk columns,
    so rows = H*(W+2).  Junk columns are zero on input, masked to zero after
    conv1, and simply discarded by the host after the call.

    x_ref   : (1, rows, Cin)        bf16  NHWC rows padded to width W+2 (zeros)
    mask_ref: (rows, 1)             f32   1.0 for real columns, 0.0 for pad cols
    w1_ref  : (Cin, Cmid)           bf16  1x1 conv, BN1 scale folded
    w2_ref  : (3, 3*Cmid, Cmid)     bf16  3x3 taps grouped by ky; K = kx*Cmid+cin
    w3_ref  : (Cmid, Cexp)          bf16  1x1 conv, BN3 scale folded
    b1/b2/b3: (1, Cmid|Cmid|Cexp)   f32   folded BN shifts
    o_ref   : (1, rows, Cexp)       bf16  output (padded-width rows)
    s_ref   : (off+(H+3)*(W+2), Cmid) bf16 flat zero-padded conv2-input scratch
    """
    Wp = W + 2
    rows = H * Wp
    c_mid = w1_ref.shape[1]
    off = _scratch_offset(W)

    x = x_ref[0]                                             # (rows, Cin) bf16

    # ---- conv1 (1x1) + bn1 + relu; zero the pad columns so they act as
    #      conv2's left/right zero padding when staged into the flat scratch ---
    h1 = jnp.dot(x, w1_ref[...], preferred_element_type=jnp.float32)
    h1 = jnp.maximum(h1 + b1_ref[...], 0.0) * mask_ref[...]
    h1 = h1.astype(jnp.bfloat16)                             # single cast

    # ---- stage conv2 input: s_ref[off + p] == zero-padded (H+2, W+2) image,
    #      flattened row-major.  One contiguous interior store; only the small
    #      top/bottom border strips are zeroed every step. ----------------------
    s_ref[pl.ds(0, off + Wp + 1), :] = jnp.zeros((off + Wp + 1, c_mid), jnp.bfloat16)
    s_ref[pl.ds(off + (H + 1) * Wp + 1, 2 * Wp - 1), :] = (
        jnp.zeros((2 * Wp - 1, c_mid), jnp.bfloat16))
    s_ref[pl.ds(off + Wp + 1, rows), :] = h1

    # ---- conv2 (3x3, pad=1, stride=1) + bn2 + relu --------------------------
    # K-grouped: per ky, lane-concat the 3 kx-shifted slices -> one K=3*Cmid
    # matmul.  Taps are pure leading-dim offsets into the flat scratch.
    acc = jnp.zeros((rows, c_mid), jnp.float32)
    for dy in range(3):                                      # unrolled
        base = off + dy * Wp
        lhs = jnp.concatenate(
            [s_ref[pl.ds(base + dx, rows), :] for dx in range(3)], axis=-1)
        acc = acc + jnp.dot(lhs, w2_ref[dy],
                            preferred_element_type=jnp.float32)
    h2 = jnp.maximum(acc + b2_ref[...], 0.0).astype(jnp.bfloat16)

    # ---- conv3 (1x1 expand) + bn3 + identity residual + relu ----------------
    y = jnp.dot(h2, w3_ref[...], preferred_element_type=jnp.float32)
    y = jnp.maximum(y + b3_ref[...] + x, 0.0)                # bf16 x promotes
    o_ref[0] = y.astype(o_ref.dtype)


# ------------------------------ wrapper -------------------------------------

@jax.jit
def conv_block_forward(params, x_nchw):
    """ConvBlock forward (stride=1, downsample=None) on NCHW input; returns bf16 NCHW."""
    n, c_in, h, w = x_nchw.shape
    wp = w + 2
    rows = h * wp
    c_mid = params["w1"].shape[1]
    c_exp = params["w3"].shape[1]
    if c_in != c_exp:
        raise ValueError("identity residual needs in_channels == 4*out_channels")

    # NCHW -> NHWC, pad each row with 2 trailing zero columns, flatten, bf16.
    x_nhwc = jnp.transpose(x_nchw, (0, 2, 3, 1))
    x_pw = jnp.pad(x_nhwc, ((0, 0), (0, 0), (0, 2), (0, 0)))
    x_flat = x_pw.reshape(n, rows, c_in).astype(jnp.bfloat16)

    # 1.0 on real columns, 0.0 on the 2 pad columns of every image row.
    mask = jnp.tile(jnp.arange(wp) < w, h).astype(jnp.float32).reshape(rows, 1)

    kernel = functools.partial(_conv_block_kernel, H=h, W=w)
    flops = 2 * n * rows * c_mid * (c_in + 9 * c_mid + c_exp)
    bytes_accessed = int(
        n * rows * c_in * 2
        + sum(int(v.size) * v.dtype.itemsize for v in params.values())
        + rows * 4
        + n * rows * c_exp * 2)

    scratch_rows = _scratch_offset(w) + (h + 3) * wp

    out = pl.pallas_call(
        kernel,
        out_shape=jax.ShapeDtypeStruct((n, rows, c_exp), jnp.bfloat16),
        grid_spec=pltpu.PrefetchScalarGridSpec(
            num_scalar_prefetch=0,
            grid=(n,),
            in_specs=[
                pl.BlockSpec((1, rows, c_in), lambda i: (i, 0, 0)),        # x
                pl.BlockSpec((rows, 1), lambda i: (0, 0)),                 # mask
                pl.BlockSpec((c_in, c_mid), lambda i: (0, 0)),             # w1
                pl.BlockSpec((3, 3 * c_mid, c_mid), lambda i: (0, 0, 0)),  # w2
                pl.BlockSpec((c_mid, c_exp), lambda i: (0, 0)),            # w3
                pl.BlockSpec((1, c_mid), lambda i: (0, 0)),                # b1
                pl.BlockSpec((1, c_mid), lambda i: (0, 0)),                # b2
                pl.BlockSpec((1, c_exp), lambda i: (0, 0)),                # b3
            ],
            out_specs=pl.BlockSpec((1, rows, c_exp), lambda i: (i, 0, 0)),
            scratch_shapes=[pltpu.VMEM((scratch_rows, c_mid), jnp.bfloat16)],
        ),
        compiler_params=pltpu.CompilerParams(
            dimension_semantics=("parallel",),
            vmem_limit_bytes=48 * 1024 * 1024),
        cost_estimate=pl.CostEstimate(flops=flops, transcendentals=0,
                                      bytes_accessed=bytes_accessed),
    )(x_flat, mask, params["w1"], params["w2"], params["w3"],
      params["b1"], params["b2"], params["b3"])

    # Drop the 2 junk columns per row and go back to NCHW.
    out = out.reshape(n, h, wp, c_exp)[:, :, :w, :]
    return jnp.transpose(out, (0, 3, 1, 2))


# ------------------------------- parameters --------------------------------

def _fold_bn(gamma, beta, mean, var, eps=1e-5):
    scale = gamma / jnp.sqrt(var + eps)
    shift = beta - mean * scale
    return scale, shift


def make_params(key, in_channels, out_channels):
    """Deterministic synthetic parameters in PyTorch layout + folded kernel layout."""
    c_exp = out_channels * 4
    ks = jax.random.split(key, 15)

    # conv weights, PyTorch layout (out, in, kh, kw), bias=False
    w1_t = 0.1 * jax.random.normal(ks[0], (out_channels, in_channels, 1, 1), jnp.float32)
    w2_t = 0.1 * jax.random.normal(ks[1], (out_channels, out_channels, 3, 3), jnp.float32)
    w3_t = 0.1 * jax.random.normal(ks[2], (c_exp, out_channels, 1, 1), jnp.float32)

    def bn_stats(kg, kb, km, kv, c):
        gamma = 1.0 + 0.1 * jax.random.normal(kg, (c,), jnp.float32)
        beta = 0.1 * jax.random.normal(kb, (c,), jnp.float32)
        mean = 0.1 * jax.random.normal(km, (c,), jnp.float32)
        var = 1.0 + 0.1 * jnp.abs(jax.random.normal(kv, (c,), jnp.float32))
        return gamma, beta, mean, var

    bn1 = bn_stats(ks[3], ks[4], ks[5], ks[6], out_channels)
    bn2 = bn_stats(ks[7], ks[8], ks[9], ks[10], out_channels)
    bn3 = bn_stats(ks[11], ks[12], ks[13], ks[14], c_exp)

    torch_layout = {"w1": w1_t, "w2": w2_t, "w3": w3_t,
                    "bn1": bn1, "bn2": bn2, "bn3": bn3}

    s1, sh1 = _fold_bn(*bn1)
    s2, sh2 = _fold_bn(*bn2)
    s3, sh3 = _fold_bn(*bn3)

    # Kernel layout: BN scale folded into weight output-columns (exact f32 fold,
    # then bf16 cast).  conv2 weights grouped per ky with K index = kx*Cmid+cin.
    w1_2d = jnp.transpose(w1_t[:, :, 0, 0], (1, 0))                   # (Cin, Cmid)
    w2_g = jnp.transpose(w2_t, (2, 3, 1, 0)).reshape(
        3, 3 * out_channels, out_channels)                            # (3, 3*Cmid, Cmid)
    w3_2d = jnp.transpose(w3_t[:, :, 0, 0], (1, 0))                   # (Cmid, Cexp)

    kernel_layout = {
        "w1": (w1_2d * s1[None, :]).astype(jnp.bfloat16),
        "w2": (w2_g * s2[None, None, :]).astype(jnp.bfloat16),
        "w3": (w3_2d * s3[None, :]).astype(jnp.bfloat16),
        "b1": sh1.reshape(1, -1).astype(jnp.float32),
        "b2": sh2.reshape(1, -1).astype(jnp.float32),
        "b3": sh3.reshape(1, -1).astype(jnp.float32),
    }
    return torch_layout, kernel_layout


# ------------------------------ JAX reference -------------------------------

def reference_forward(tw, x):
    def conv(x, w, stride=1, padding=0):
        return jax.lax.conv_general_dilated(
            x, w, window_strides=(stride, stride),
            padding=((padding, padding), (padding, padding)),
            dimension_numbers=("NCHW", "OIHW", "NCHW"))

    def bn(x, p, eps=1e-5):
        gamma, beta, mean, var = p
        s = gamma / jnp.sqrt(var + eps)
        return x * s[None, :, None, None] + (beta - mean * s)[None, :, None, None]

    out = jax.nn.relu(bn(conv(x, tw["w1"]), tw["bn1"]))
    out = jax.nn.relu(bn(conv(out, tw["w2"], padding=1), tw["bn2"]))
    out = bn(conv(out, tw["w3"]), tw["bn3"])
    out = out + x          # identity residual (downsample=None)
    return jax.nn.relu(out)


# ----------------------------------- main -----------------------------------

if __name__ == "__main__":
    key = jax.random.PRNGKey(0)
    k_x, k_p = jax.random.split(key)

    # Bottleneck config: in_channels == out_channels * 4 so the identity
    # residual is valid without a downsample module.  (Tiny demo shapes; use
    # Cmid >= 64 / Cexp multiple of 128 when benchmarking.)
    in_channels, out_channels = 16, 4
    N, H, W = 2, 16, 16

    x = jax.random.normal(k_x, (N, in_channels, H, W), jnp.float32)  # NCHW
    torch_params, kernel_params = make_params(k_p, in_channels, out_channels)

    out = jax.block_until_ready(conv_block_forward(kernel_params, x))
    assert out.shape == (N, out_channels * 4, H, W), out.shape

    ref = jax.block_until_ready(reference_forward(torch_params, x))
    # Loose tolerance: bf16 storage / bf16 output with f32 accumulation.
    assert jnp.allclose(out.astype(jnp.float32), ref, rtol=5e-2, atol=5e-2), \
        float(jnp.max(jnp.abs(out.astype(jnp.float32) - ref)))

    print("KERNEL_OK")
</pallas_src>

<mosaic_0001>
module attributes {stable_mosaic.version = 11 : i64} {
  func.func @_conv_block_kernel(%arg0: i32, %arg1: memref<1x288x16xbf16, #tpu.memory_space<vmem>>, %arg2: memref<288x1xf32, #tpu.memory_space<vmem>>, %arg3: memref<16x4xbf16, #tpu.memory_space<vmem>>, %arg4: memref<3x12x4xbf16, #tpu.memory_space<vmem>>, %arg5: memref<4x16xbf16, #tpu.memory_space<vmem>>, %arg6: memref<1x4xf32, #tpu.memory_space<vmem>>, %arg7: memref<1x4xf32, #tpu.memory_space<vmem>>, %arg8: memref<1x16xf32, #tpu.memory_space<vmem>>, %arg9: memref<1x288x16xbf16, #tpu.memory_space<vmem>>, %arg10: memref<347x4xbf16, #tpu.memory_space<vmem>>) attributes {dimension_semantics = [#tpu.dimension_semantics<parallel>], iteration_bounds = array<i64: 2>, scalar_prefetch = 0 : i64, scratch_operands = 1 : i64, tpu.core_type = #tpu.core_type<tc>, window_params = [{transform_indices = @transform_0, window_bounds = array<i64: 1, 288, 16>}, {pipeline_mode = #tpu.pipeline_mode<synchronous>, transform_indices = @transform_1, window_bounds = array<i64: 288, 1>}, {pipeline_mode = #tpu.pipeline_mode<synchronous>, transform_indices = @transform_2, window_bounds = array<i64: 16, 4>}, {pipeline_mode = #tpu.pipeline_mode<synchronous>, transform_indices = @transform_3, window_bounds = array<i64: 3, 12, 4>}, {pipeline_mode = #tpu.pipeline_mode<synchronous>, transform_indices = @transform_4, window_bounds = array<i64: 4, 16>}, {pipeline_mode = #tpu.pipeline_mode<synchronous>, transform_indices = @transform_5, window_bounds = array<i64: 1, 4>}, {pipeline_mode = #tpu.pipeline_mode<synchronous>, transform_indices = @transform_6, window_bounds = array<i64: 1, 4>}, {pipeline_mode = #tpu.pipeline_mode<synchronous>, transform_indices = @transform_7, window_bounds = array<i64: 1, 16>}, {transform_indices = @transform_8, window_bounds = array<i64: 1, 288, 16>}]} {
    %c0 = arith.constant 0 : index
    %c0_0 = arith.constant 0 : index
    %c0_1 = arith.constant 0 : index
    %0 = vector.load %arg1[%c0, %c0_0, %c0_1] : memref<1x288x16xbf16, #tpu.memory_space<vmem>>, vector<1x288x16xbf16>
    %1 = vector.shape_cast %0 : vector<1x288x16xbf16> to vector<288x16xbf16>
    %c0_2 = arith.constant 0 : index
    %c0_3 = arith.constant 0 : index
    %2 = vector.load %arg3[%c0_2, %c0_3] : memref<16x4xbf16, #tpu.memory_space<vmem>>, vector<16x4xbf16>
    %cst = arith.constant dense<0.000000e+00> : vector<288x4xf32>
    %3 = tpu.matmul %1, %2, %cst {dimension_numbers = #tpu.dot_dimension_numbers<[1], [0], [0], [1], [0, 0, 1, 1], [], []>} : vector<288x16xbf16>, vector<16x4xbf16>, vector<288x4xf32> -> vector<288x4xf32>
    %c0_4 = arith.constant 0 : index
    %c0_5 = arith.constant 0 : index
    %4 = vector.load %arg6[%c0_4, %c0_5] : memref<1x4xf32, #tpu.memory_space<vmem>>, vector<1x4xf32>
    %5 = vector.broadcast %4 : vector<1x4xf32> to vector<288x4xf32>
    %6 = arith.addf %3, %5 : vector<288x4xf32>
    %cst_6 = arith.constant 0.000000e+00 : f32
    %7 = vector.broadcast %cst_6 : f32 to vector<288x4xf32>
    %8 = arith.maximumf %6, %7 : vector<288x4xf32>
    %c0_7 = arith.constant 0 : index
    %c0_8 = arith.constant 0 : index
    %9 = vector.load %arg2[%c0_7, %c0_8] : memref<288x1xf32, #tpu.memory_space<vmem>>, vector<288x1xf32>
    %10 = vector.broadcast %9 : vector<288x1xf32> to vector<288x4xf32>
    %11 = arith.mulf %8, %10 : vector<288x4xf32>
    %12 = arith.truncf %11 : vector<288x4xf32> to vector<288x4xbf16>
    %cst_9 = arith.constant 0.000000e+00 : bf16
    %13 = vector.broadcast %cst_9 : bf16 to vector<24x4xbf16>
    %c0_10 = arith.constant 0 : index
    %c0_11 = arith.constant 0 : index
    %14 = vector.load %arg10[%c0_10, %c0_11] : memref<347x4xbf16, #tpu.memory_space<vmem>>, vector<24x4xbf16>
    tpu.vector_store %arg10[%c0_10, %c0_11], %13 {strides = array<i32>} : memref<347x4xbf16, #tpu.memory_space<vmem>>, vector<24x4xbf16>,
    %cst_12 = arith.constant 0.000000e+00 : bf16
    %15 = vector.broadcast %cst_12 : bf16 to vector<35x4xbf16>
    %c312 = arith.constant 312 : index
    %c0_13 = arith.constant 0 : index
    %16 = vector.load %arg10[%c312, %c0_13] : memref<347x4xbf16, #tpu.memory_space<vmem>>, vector<35x4xbf16>
    tpu.vector_store %arg10[%c312, %c0_13], %15 {strides = array<i32>} : memref<347x4xbf16, #tpu.memory_space<vmem>>, vector<35x4xbf16>,
    %c24 = arith.constant 24 : index
    %c0_14 = arith.constant 0 : index
    %17 = vector.load %arg10[%c24, %c0_14] : memref<347x4xbf16, #tpu.memory_space<vmem>>, vector<288x4xbf16>
    tpu.vector_store %arg10[%c24, %c0_14], %12 {strides = array<i32>} : memref<347x4xbf16, #tpu.memory_space<vmem>>, vector<288x4xbf16>,
    %cst_15 = arith.constant 0.000000e+00 : f32
    %18 = vector.broadcast %cst_15 : f32 to vector<288x4xf32>
    %c5 = arith.constant 5 : index
    %c0_16 = arith.constant 0 : index
    %19 = vector.load %arg10[%c5, %c0_16] : memref<347x4xbf16, #tpu.memory_space<vmem>>, vector<288x4xbf16>
    %c6 = arith.constant 6 : index
    %c0_17 = arith.constant 0 : index
    %20 = vector.load %arg10[%c6, %c0_17] : memref<347x4xbf16, #tpu.memory_space<vmem>>, vector<288x4xbf16>
    %c7 = arith.constant 7 : index
    %c0_18 = arith.constant 0 : index
    %21 = vector.load %arg10[%c7, %c0_18] : memref<347x4xbf16, #tpu.memory_space<vmem>>, vector<288x4xbf16>
    %22 = tpu.concatenate %19, %20, %21 in 1 : vector<288x4xbf16>, vector<288x4xbf16>, vector<288x4xbf16> -> vector<288x12xbf16>
    %c0_19 = arith.constant 0 : index
    %c0_20 = arith.constant 0 : index
    %c0_21 = arith.constant 0 : index
    %23 = vector.load %arg4[%c0_19, %c0_20, %c0_21] : memref<3x12x4xbf16, #tpu.memory_space<vmem>>, vector<1x12x4xbf16>
    %24 = vector.shape_cast %23 : vector<1x12x4xbf16> to vector<12x4xbf16>
    %cst_22 = arith.constant dense<0.000000e+00> : vector<288x4xf32>
    %25 = tpu.matmul %22, %24, %cst_22 {dimension_numbers = #tpu.dot_dimension_numbers<[1], [0], [0], [1], [0, 0, 1, 1], [], []>} : vector<288x12xbf16>, vector<12x4xbf16>, vector<288x4xf32> -> vector<288x4xf32>
    %26 = arith.addf %18, %25 : vector<288x4xf32>
    %c23 = arith.constant 23 : index
    %c0_23 = arith.constant 0 : index
    %27 = vector.load %arg10[%c23, %c0_23] : memref<347x4xbf16, #tpu.memory_space<vmem>>, vector<288x4xbf16>
    %c24_24 = arith.constant 24 : index
    %c0_25 = arith.constant 0 : index
    %28 = vector.load %arg10[%c24_24, %c0_25] : memref<347x4xbf16, #tpu.memory_space<vmem>>, vector<288x4xbf16>
    %c25 = arith.constant 25 : index
    %c0_26 = arith.constant 0 : index
    %29 = vector.load %arg10[%c25, %c0_26] : memref<347x4xbf16, #tpu.memory_space<vmem>>, vector<288x4xbf16>
    %30 = tpu.concatenate %27, %28, %29 in 1 : vector<288x4xbf16>, vector<288x4xbf16>, vector<288x4xbf16> -> vector<288x12xbf16>
    %c1 = arith.constant 1 : index
    %c0_27 = arith.constant 0 : index
    %c0_28 = arith.constant 0 : index
    %31 = vector.load %arg4[%c1, %c0_27, %c0_28] : memref<3x12x4xbf16, #tpu.memory_space<vmem>>, vector<1x12x4xbf16>
    %32 = vector.shape_cast %31 : vector<1x12x4xbf16> to vector<12x4xbf16>
    %cst_29 = arith.constant dense<0.000000e+00> : vector<288x4xf32>
    %33 = tpu.matmul %30, %32, %cst_29 {dimension_numbers = #tpu.dot_dimension_numbers<[1], [0], [0], [1], [0, 0, 1, 1], [], []>} : vector<288x12xbf16>, vector<12x4xbf16>, vector<288x4xf32> -> vector<288x4xf32>
    %34 = arith.addf %26, %33 : vector<288x4xf32>
    %c41 = arith.constant 41 : index
    %c0_30 = arith.constant 0 : index
    %35 = vector.load %arg10[%c41, %c0_30] : memref<347x4xbf16, #tpu.memory_space<vmem>>, vector<288x4xbf16>
    %c42 = arith.constant 42 : index
    %c0_31 = arith.constant 0 : index
    %36 = vector.load %arg10[%c42, %c0_31] : memref<347x4xbf16, #tpu.memory_space<vmem>>, vector<288x4xbf16>
    %c43 = arith.constant 43 : index
    %c0_32 = arith.constant 0 : index
    %37 = vector.load %arg10[%c43, %c0_32] : memref<347x4xbf16, #tpu.memory_space<vmem>>, vector<288x4xbf16>
    %38 = tpu.concatenate %35, %36, %37 in 1 : vector<288x4xbf16>, vector<288x4xbf16>, vector<288x4xbf16> -> vector<288x12xbf16>
    %c2 = arith.constant 2 : index
    %c0_33 = arith.constant 0 : index
    %c0_34 = arith.constant 0 : index
    %39 = vector.load %arg4[%c2, %c0_33, %c0_34] : memref<3x12x4xbf16, #tpu.memory_space<vmem>>, vector<1x12x4xbf16>
    %40 = vector.shape_cast %39 : vector<1x12x4xbf16> to vector<12x4xbf16>
    %cst_35 = arith.constant dense<0.000000e+00> : vector<288x4xf32>
    %41 = tpu.matmul %38, %40, %cst_35 {dimension_numbers = #tpu.dot_dimension_numbers<[1], [0], [0], [1], [0, 0, 1, 1], [], []>} : vector<288x12xbf16>, vector<12x4xbf16>, vector<288x4xf32> -> vector<288x4xf32>
    %42 = arith.addf %34, %41 : vector<288x4xf32>
    %c0_36 = arith.constant 0 : index
    %c0_37 = arith.constant 0 : index
    %43 = vector.load %arg7[%c0_36, %c0_37] : memref<1x4xf32, #tpu.memory_space<vmem>>, vector<1x4xf32>
    %44 = vector.broadcast %43 : vector<1x4xf32> to vector<288x4xf32>
    %45 = arith.addf %42, %44 : vector<288x4xf32>
    %cst_38 = arith.constant 0.000000e+00 : f32
    %46 = vector.broadcast %cst_38 : f32 to vector<288x4xf32>
    %47 = arith.maximumf %45, %46 : vector<288x4xf32>
    %48 = arith.truncf %47 : vector<288x4xf32> to vector<288x4xbf16>
    %c0_39 = arith.constant 0 : index
    %c0_40 = arith.constant 0 : index
    %49 = vector.load %arg5[%c0_39, %c0_40] : memref<4x16xbf16, #tpu.memory_space<vmem>>, vector<4x16xbf16>
    %cst_41 = arith.constant dense<0.000000e+00> : vector<288x16xf32>
    %50 = tpu.matmul %48, %49, %cst_41 {dimension_numbers = #tpu.dot_dimension_numbers<[1], [0], [0], [1], [0, 0, 1, 1], [], []>} : vector<288x4xbf16>, vector<4x16xbf16>, vector<288x16xf32> -> vector<288x16xf32>
    %c0_42 = arith.constant 0 : index
    %c0_43 = arith.constant 0 : index
    %51 = vector.load %arg8[%c0_42, %c0_43] : memref<1x16xf32, #tpu.memory_space<vmem>>, vector<1x16xf32>
    %52 = vector.broadcast %51 : vector<1x16xf32> to vector<288x16xf32>
    %53 = arith.addf %50, %52 : vector<288x16xf32>
    %54 = arith.extf %1 : vector<288x16xbf16> to vector<288x16xf32>
    %55 = arith.addf %53, %54 : vector<288x16xf32>
    %cst_44 = arith.constant 0.000000e+00 : f32
    %56 = vector.broadcast %cst_44 : f32 to vector<288x16xf32>
    %57 = arith.maximumf %55, %56 : vector<288x16xf32>
    %58 = arith.truncf %57 : vector<288x16xf32> to vector<288x16xbf16>
    %c0_45 = arith.constant 0 : index
    %c0_46 = arith.constant 0 : index
    %c0_47 = arith.constant 0 : index
    %59 = vector.load %arg9[%c0_45, %c0_46, %c0_47] : memref<1x288x16xbf16, #tpu.memory_space<vmem>>, vector<1x288x16xbf16>
    %60 = vector.shape_cast %59 : vector<1x288x16xbf16> to vector<288x16xbf16>
    %61 = vector.shape_cast %58 : vector<288x16xbf16> to vector<1x288x16xbf16>
    tpu.vector_store %arg9[%c0_45, %c0_46, %c0_47], %61 {strides = array<i32>} : memref<1x288x16xbf16, #tpu.memory_space<vmem>>, vector<1x288x16xbf16>,
    return
  }
  func.func @transform_0(%arg0: i32) -> (i32, i32, i32) {
    %c0_i32 = arith.constant 0 : i32
    %c0_i32_0 = arith.constant 0 : i32
    %c0_i32_1 = arith.constant 0 : i32
    return %arg0, %c0_i32, %c0_i32_0 : i32, i32, i32
  }
  func.func @transform_1(%arg0: i32) -> (i32, i32) {
    %c0_i32 = arith.constant 0 : i32
    %c0_i32_0 = arith.constant 0 : i32
    %c0_i32_1 = arith.constant 0 : i32
    return %c0_i32, %c0_i32_0 : i32, i32
  }
  func.func @transform_2(%arg0: i32) -> (i32, i32) {
    %c0_i32 = arith.constant 0 : i32
    %c0_i32_0 = arith.constant 0 : i32
    %c0_i32_1 = arith.constant 0 : i32
    return %c0_i32, %c0_i32_0 : i32, i32
  }
  func.func @transform_3(%arg0: i32) -> (i32, i32, i32) {
    %c0_i32 = arith.constant 0 : i32
    %c0_i32_0 = arith.constant 0 : i32
    %c0_i32_1 = arith.constant 0 : i32
    %c0_i32_2 = arith.constant 0 : i32
    return %c0_i32, %c0_i32_0, %c0_i32_1 : i32, i32, i32
  }
  func.func @transform_4(%arg0: i32) -> (i32, i32) {
    %c0_i32 = arith.constant 0 : i32
    %c0_i32_0 = arith.constant 0 : i32
    %c0_i32_1 = arith.constant 0 : i32
    return %c0_i32, %c0_i32_0 : i32, i32
  }
  func.func @transform_5(%arg0: i32) -> (i32, i32) {
    %c0_i32 = arith.constant 0 : i32
    %c0_i32_0 = arith.constant 0 : i32
    %c0_i32_1 = arith.constant 0 : i32
    return %c0_i32, %c0_i32_0 : i32, i32
  }
  func.func @transform_6(%arg0: i32) -> (i32, i32) {
    %c0_i32 = arith.constant 0 : i32
    %c0_i32_0 = arith.constant 0 : i32
    %c0_i32_1 = arith.constant 0 : i32
    return %c0_i32, %c0_i32_0 : i32, i32
  }
  func.func @transform_7(%arg0: i32) -> (i32, i32) {
    %c0_i32 = arith.constant 0 : i32
    %c0_i32_0 = arith.constant 0 : i32
    %c0_i32_1 = arith.constant 0 : i32
    return %c0_i32, %c0_i32_0 : i32, i32
  }
  func.func @transform_8(%arg0: i32) -> (i32, i32, i32) {
    %c0_i32 = arith.constant 0 : i32
    %c0_i32_0 = arith.constant 0 : i32
    %c0_i32_1 = arith.constant 0 : i32
    return %arg0, %c0_i32, %c0_i32_0 : i32, i32, i32
  }
}

</mosaic_0001>

<llo_original>
// kernel: conv_block_forward.1
$region0: #{conv_block_forward.1}
  #allocation0 [shape = 'u32[]', space=smem, size = 0x4, offset = 0x4, fixed_abs, tag = 'smem constant byte address 0x4 - core index']
  #allocation1 [shape = 'u32[72,128]{1,0:T(1,128)}', space=vmem, size = 0x9000, scoped, tag = 'internal scratch']
  #allocation2 [shape = 'bf16[347,4]{1,0:T(8,128)(2,1)}', space=vmem, size = 0x16000, scoped, tag = 'scratch operand']
  %s0 = inlined_call_operand.vmem [shape: bf16[2,288,16], index: 0, kind: input, shape index: {}]
  %s1 = inlined_call_operand.vmem [shape: f32[288,1], index: 1, kind: input, shape index: {}]
  %s2 = inlined_call_operand.vmem [shape: bf16[16,4], index: 2, kind: input, shape index: {}]
  %s3 = inlined_call_operand.vmem [shape: bf16[3,12,4], index: 3, kind: input, shape index: {}]
  %s4 = inlined_call_operand.vmem [shape: bf16[4,16], index: 4, kind: input, shape index: {}]
  %s5 = inlined_call_operand.vmem [shape: f32[1,4], index: 5, kind: input, shape index: {}]
  %s6 = inlined_call_operand.vmem [shape: f32[1,4], index: 6, kind: input, shape index: {}]
  %s7 = inlined_call_operand.vmem [shape: f32[1,16], index: 7, kind: input, shape index: {}]
  %s8 = inlined_call_operand.vmem [shape: bf16[2,288,16], index: 8, kind: output, shape index: {}]
  %s9 = sld [smem:[#allocation0]]
  $region65: #{conv_block_forward.1} parent=0
    _
  %s11 = ssub.s32 1, %s9
  %s12 = scalar_select 0, %s11, %s9
  loop: start=0, step=1, limit=4
  $region2: #{conv_block_forward.1} parent=0 // loop_pre_header
    _
  $region3: #{conv_block_forward.1} parent=0 // loop_header
    %s14 = sphi 0, %s18
    %p15 = scmp.ge.s32.totalorder %s14, 4
    %s24 = sphi 0, %s26
    %s27 = sphi 0, %s24
    %s28 = sphi 0, %s27
    %s44 = sphi 0, %s28
    %s48 = sphi 0, %s48
    %s50 = sphi 0, %s48
    %s51 = sphi 0, %s50
    %s65 = sphi 0, %s51
    %s69 = sphi 0, %s69
    %s71 = sphi 0, %s69
    %s72 = sphi 0, %s71
    %s86 = sphi 0, %s72
    %s90 = sphi 0, %s90
    %s92 = sphi 0, %s90
    %s93 = sphi 0, %s92
    %s107 = sphi 0, %s93
    %s111 = sphi 0, %s111
    %s113 = sphi 0, %s111
    %s114 = sphi 0, %s113
    %s128 = sphi 0, %s114
    %s132 = sphi 0, %s132
    %s134 = sphi 0, %s132
    %s135 = sphi 0, %s134
    %s149 = sphi 0, %s135
    %s153 = sphi 0, %s153
    %s155 = sphi 0, %s153
    %s156 = sphi 0, %s155
    %s170 = sphi 0, %s156
    %s174 = sphi 0, %s174
    %s176 = sphi 0, %s174
    %s177 = sphi 0, %s176
    %s191 = sphi 0, %s177
    %s197 = sphi 0, %s199
    %s200 = sphi 0, %s197
    %s201 = sphi 0, %s200
    %s217 = sphi 0, %s201
  $region4: #{conv_block_forward.1} parent=0 // loop_header_branch
    %17 = sbr.rel (%p15) target = $region8
  $region5: #{conv_block_forward.1} parent=0 // loop_body
    %s19 = ssub.s32 %s14, 1
    %s20 = ssub.s32 %s14, 2
    %s21 = sadd.s32 %s14, 1
    %s22 = ssub.s32 %s14, %s21
    %p23 = scmp.eq.s32.totalorder %s22, 0
    %s25 = sadd.s32 %s24, 1
    %s26 = scalar_select %p23, %s24, %s25
    %p29 = pneg %p23
    %p30 = scmp.eq.s32.totalorder %s14, 1
    %p31 = por %p29, %p30
    %p32 = scmp.ne.s32.totalorder %s24, %s27
    %p33 = scmp.eq.s32.totalorder %s14, 0
    %p34 = por %p32, %p33
    %p35 = scmp.ne.s32.totalorder %s24, %s27
    %p36 = scmp.eq.s32.totalorder %s19, 1
    %p37 = por %p35, %p36
    %p38 = scmp.ne.s32.totalorder %s27, %s28
    %p39 = scmp.eq.s32.totalorder %s19, 0
    %p40 = por %p38, %p39
    %p41 = scmp.ne.s32.totalorder %s27, %s28
    %p42 = scmp.eq.s32.totalorder %s20, 1
    %p43 = por %p41, %p42
    %p45 = scmp.ne.s32.totalorder %s28, %s44
    %p46 = scmp.eq.s32.totalorder %s20, 0
    %p47 = por %p45, %p46
    %s49 = sadd.s32 %s48, 1
    %p52 = scmp.eq.s32.totalorder %s14, 1
    %p53 = scmp.ne.s32.totalorder %s48, %s50
    %p54 = scmp.eq.s32.totalorder %s14, 0
    %p55 = por %p53, %p54
    %p56 = scmp.ne.s32.totalorder %s48, %s50
    %p57 = scmp.eq.s32.totalorder %s19, 1
    %p58 = por %p56, %p57
    %p59 = scmp.ne.s32.totalorder %s50, %s51
    %p60 = scmp.eq.s32.totalorder %s19, 0
    %p61 = por %p59, %p60
    %p62 = scmp.ne.s32.totalorder %s50, %s51
    %p63 = scmp.eq.s32.totalorder %s20, 1
    %p64 = por %p62, %p63
    %p66 = scmp.ne.s32.totalorder %s51, %s65
    %p67 = scmp.eq.s32.totalorder %s20, 0
    %p68 = por %p66, %p67
    %s70 = sadd.s32 %s69, 1
    %p73 = scmp.eq.s32.totalorder %s14, 1
    %p74 = scmp.ne.s32.totalorder %s69, %s71
    %p75 = scmp.eq.s32.totalorder %s14, 0
    %p76 = por %p74, %p75
    %p77 = scmp.ne.s32.totalorder %s69, %s71
    %p78 = scmp.eq.s32.totalorder %s19, 1
    %p79 = por %p77, %p78
    %p80 = scmp.ne.s32.totalorder %s71, %s72
    %p81 = scmp.eq.s32.totalorder %s19, 0
    %p82 = por %p80, %p81
    %p83 = scmp.ne.s32.totalorder %s71, %s72
    %p84 = scmp.eq.s32.totalorder %s20, 1
    %p85 = por %p83, %p84
    %p87 = scmp.ne.s32.totalorder %s72, %s86
    %p88 = scmp.eq.s32.totalorder %s20, 0
    %p89 = por %p87, %p88
    %s91 = sadd.s32 %s90, 1
    %p94 = scmp.eq.s32.totalorder %s14, 1
    %p95 = scmp.ne.s32.totalorder %s90, %s92
    %p96 = scmp.eq.s32.totalorder %s14, 0
    %p97 = por %p95, %p96
    %p98 = scmp.ne.s32.totalorder %s90, %s92
    %p99 = scmp.eq.s32.totalorder %s19, 1
    %p100 = por %p98, %p99
    %p101 = scmp.ne.s32.totalorder %s92, %s93
    %p102 = scmp.eq.s32.totalorder %s19, 0
    %p103 = por %p101, %p102
    %p104 = scmp.ne.s32.totalorder %s92, %s93
    %p105 = scmp.eq.s32.totalorder %s20, 1
    %p106 = por %p104, %p105
    %p108 = scmp.ne.s32.totalorder %s93, %s107
    %p109 = scmp.eq.s32.totalorder %s20, 0
    %p110 = por %p108, %p109
    %s112 = sadd.s32 %s111, 1
    %p115 = scmp.eq.s32.totalorder %s14, 1
    %p116 = scmp.ne.s32.totalorder %s111, %s113
    %p117 = scmp.eq.s32.totalorder %s14, 0
    %p118 = por %p116, %p117
    %p119 = scmp.ne.s32.totalorder %s111, %s113
    %p120 = scmp.eq.s32.totalorder %s19, 1
    %p121 = por %p119, %p120
    %p122 = scmp.ne.s32.totalorder %s113, %s114
    %p123 = scmp.eq.s32.totalorder %s19, 0
    %p124 = por %p122, %p123
    %p125 = scmp.ne.s32.totalorder %s113, %s114
    %p126 = scmp.eq.s32.totalorder %s20, 1
    %p127 = por %p125, %p126
    %p129 = scmp.ne.s32.totalorder %s114, %s128
    %p130 = scmp.eq.s32.totalorder %s20, 0
    %p131 = por %p129, %p130
    %s133 = sadd.s32 %s132, 1
    %p136 = scmp.eq.s32.totalorder %s14, 1
    %p137 = scmp.ne.s32.totalorder %s132, %s134
    %p138 = scmp.eq.s32.totalorder %s14, 0
    %p139 = por %p137, %p138
    %p140 = scmp.ne.s32.totalorder %s132, %s134
    %p141 = scmp.eq.s32.totalorder %s19, 1
    %p142 = por %p140, %p141
    %p143 = scmp.ne.s32.totalorder %s134, %s135
    %p144 = scmp.eq.s32.totalorder %s19, 0
    %p145 = por %p143, %p144
    %p146 = scmp.ne.s32.totalorder %s134, %s135
    %p147 = scmp.eq.s32.totalorder %s20, 1
    %p148 = por %p146, %p147
    %p150 = scmp.ne.s32.totalorder %s135, %s149
    %p151 = scmp.eq.s32.totalorder %s20, 0
    %p152 = por %p150, %p151
    %s154 = sadd.s32 %s153, 1
    %p157 = scmp.eq.s32.totalorder %s14, 1
    %p158 = scmp.ne.s32.totalorder %s153, %s155
    %p159 = scmp.eq.s32.totalorder %s14, 0
    %p160 = por %p158, %p159
    %p161 = scmp.ne.s32.totalorder %s153, %s155
    %p162 = scmp.eq.s32.totalorder %s19, 1
    %p163 = por %p161, %p162
    %p164 = scmp.ne.s32.totalorder %s155, %s156
    %p165 = scmp.eq.s32.totalorder %s19, 0
    %p166 = por %p164, %p165
    %p167 = scmp.ne.s32.totalorder %s155, %s156
    %p168 = scmp.eq.s32.totalorder %s20, 1
    %p169 = por %p167, %p168
    %p171 = scmp.ne.s32.totalorder %s156, %s170
    %p172 = scmp.eq.s32.totalorder %s20, 0
    %p173 = por %p171, %p172
    %s175 = sadd.s32 %s174, 1
    %p178 = scmp.eq.s32.totalorder %s14, 1
    %p179 = scmp.ne.s32.totalorder %s174, %s176
    %p180 = scmp.eq.s32.totalorder %s14, 0
    %p181 = por %p179, %p180
    %p182 = scmp.ne.s32.totalorder %s174, %s176
    %p183 = scmp.eq.s32.totalorder %s19, 1
    %p184 = por %p182, %p183
    %p185 = scmp.ne.s32.totalorder %s176, %s177
    %p186 = scmp.eq.s32.totalorder %s19, 0
    %p187 = por %p185, %p186
    %p188 = scmp.ne.s32.totalorder %s176, %s177
    %p189 = scmp.eq.s32.totalorder %s20, 1
    %p190 = por %p188, %p189
    %p192 = scmp.ne.s32.totalorder %s177, %s191
    %p193 = scmp.eq.s32.totalorder %s20, 0
    %p194 = por %p192, %p193
    %s195 = ssub.s32 %s14, %s21
    %p196 = scmp.eq.s32.totalorder %s195, 0
    %s198 = sadd.s32 %s197, 1
    %s199 = scalar_select %p196, %s197, %s198
    %p202 = pneg %p196
    %p203 = scmp.eq.s32.totalorder %s14, 1
    %p204 = por %p202, %p203
    %p205 = scmp.ne.s32.totalorder %s197, %s200
    %p206 = scmp.eq.s32.totalorder %s14, 0
    %p207 = por %p205, %p206
    %p208 = scmp.ne.s32.totalorder %s197, %s200
    %p209 = scmp.eq.s32.totalorder %s19, 1
    %p210 = por %p208, %p209
    %p211 = scmp.ne.s32.totalorder %s200, %s201
    %p212 = scmp.eq.s32.totalorder %s19, 0
    %p213 = por %p211, %p212
    %p214 = scmp.ne.s32.totalorder %s200, %s201
    %p215 = scmp.eq.s32.totalorder %s20, 1
    %p216 = por %p214, %p215
    %p218 = scmp.ne.s32.totalorder %s201, %s217
    %p219 = scmp.eq.s32.totalorder %s20, 0
    %p220 = por %p218, %p219
    %p221 = scmp.le.s32.totalorder 1, %s14
    %p222 = scmp.lt.s32.totalorder %s14, 3
    %p223 = pnand %p221, %p222
    %p224 = pneg %p223
    // Predicated region
    $region9: #{conv_block_forward.1} parent=5 // pred_check
      _
    $region10: #{conv_block_forward.1} parent=5 // pred_check_branch
      %226 = sbr.rel (%p223) target = $region12
    $region11: #{conv_block_forward.1} parent=5 // pred_region
      %s227 = ssub.s32 %s14, 1
      // Predicated region
      $region13: #{conv_block_forward.1} parent=11 // pred_check
        %p228 = pneg %p61
      $region14: #{conv_block_forward.1} parent=11 // pred_check_branch
        %230 = sbr.rel (%p228) target = $region16
      $region15: #{conv_block_forward.1} parent=11 // pred_region
        _
      $region16: #{conv_block_forward.1} parent=11 // pred_fallthru
        _
      // Predicated region
      $region17: #{conv_block_forward.1} parent=11 // pred_check
        %p231 = pneg %p82
      $region18: #{conv_block_forward.1} parent=11 // pred_check_branch
        %233 = sbr.rel (%p231) target = $region20
      $region19: #{conv_block_forward.1} parent=11 // pred_region
        _
      $region20: #{conv_block_forward.1} parent=11 // pred_fallthru
        _
      // Predicated region
      $region21: #{conv_block_forward.1} parent=11 // pred_check
        %p234 = pneg %p103
      $region22: #{conv_block_forward.1} parent=11 // pred_check_branch
        %236 = sbr.rel (%p234) target = $region24
      $region23: #{conv_block_forward.1} parent=11 // pred_region
        _
      $region24: #{conv_block_forward.1} parent=11 // pred_fallthru
        _
      // Predicated region
      $region25: #{conv_block_forward.1} parent=11 // pred_check
        %p237 = pneg %p124
      $region26: #{conv_block_forward.1} parent=11 // pred_check_branch
        %239 = sbr.rel (%p237) target = $region28
      $region27: #{conv_block_forward.1} parent=11 // pred_region
        _
      $region28: #{conv_block_forward.1} parent=11 // pred_fallthru
        _
      // Predicated region
      $region29: #{conv_block_forward.1} parent=11 // pred_check
        %p240 = pneg %p145
      $region30: #{conv_block_forward.1} parent=11 // pred_check_branch
        %242 = sbr.rel (%p240) target = $region32
      $region31: #{conv_block_forward.1} parent=11 // pred_region
        _
      $region32: #{conv_block_forward.1} parent=11 // pred_fallthru
        _
      // Predicated region
      $region33: #{conv_block_forward.1} parent=11 // pred_check
        %p243 = pneg %p166
      $region34: #{conv_block_forward.1} parent=11 // pred_check_branch
        %245 = sbr.rel (%p243) target = $region36
      $region35: #{conv_block_forward.1} parent=11 // pred_region
        _
      $region36: #{conv_block_forward.1} parent=11 // pred_fallthru
        _
      // Predicated region
      $region37: #{conv_block_forward.1} parent=11 // pred_check
        %p246 = pneg %p187
      $region38: #{conv_block_forward.1} parent=11 // pred_check_branch
        %248 = sbr.rel (%p246) target = $region40
      $region39: #{conv_block_forward.1} parent=11 // pred_region
        _
      $region40: #{conv_block_forward.1} parent=11 // pred_fallthru
        _
    $region12: #{conv_block_forward.1} parent=5 // pred_fallthru
      _
    %p249 = scmp.lt.s32.totalorder %s14, 2
    // Predicated region
    $region41: #{conv_block_forward.1} parent=5 // pred_check
      %p250 = pneg %p249
    $region42: #{conv_block_forward.1} parent=5 // pred_check_branch
      %252 = sbr.rel (%p250) target = $region44
    $region43: #{conv_block_forward.1} parent=5 // pred_region
      // Predicated region
      $region45: #{conv_block_forward.1} parent=43 // pred_check
        %p253 = pneg %p34
      $region46: #{conv_block_forward.1} parent=43 // pred_check_branch
        %255 = sbr.rel (%p253) target = $region48
      $region47: #{conv_block_forward.1} parent=43 // pred_region
        %p256 = scmp.lt.s32.totalorder %s14, 1
        %s257 = scalar_select %p256, %s14, 1
        %s258 = smul.addr %s257, 36
        %s259 = smul.addr %s258, 4
        %s260 = scalar_lea.vmem %s0, %s259
      $region48: #{conv_block_forward.1} parent=43 // pred_fallthru
        _
    $region44: #{conv_block_forward.1} parent=5 // pred_fallthru
      _
    %p261 = scmp.le.s32.totalorder 1, %s14
    %p262 = scmp.lt.s32.totalorder %s14, 3
    %p263 = pnand %p261, %p262
    %p264 = pneg %p263
    // Predicated region
    $region49: #{conv_block_forward.1} parent=5 // pred_check
      _
    $region50: #{conv_block_forward.1} parent=5 // pred_check_branch
      %266 = sbr.rel (%p263) target = $region52
    $region51: #{conv_block_forward.1} parent=5 // pred_region
      %s267 = ssub.s32 %s14, 1
      %p268 = scmp.lt.s32.totalorder %s19, 1
      %s269 = scalar_select %p268, %s19, 1
      %s270 = smul.addr %s269, 36
      %s271 = smul.addr %s270, 4
      %s272 = scalar_lea.vmem %s0, %s271
      %p273 = pneg %p40
      %p274 = pneg %p37
      %p275 = pneg %p61
      %p276 = pneg %p58
      %p277 = pneg %p82
      %p278 = pneg %p79
      %p279 = pneg %p103
      %p280 = pneg %p100
      %p281 = pneg %p124
      %p282 = pneg %p121
      %p283 = pneg %p145
      %p284 = pneg %p142
      %p285 = pneg %p166
      %p286 = pneg %p163
      %p287 = pneg %p187
      %p288 = pneg %p184
      %p289 = pneg %p213
      %p290 = pneg %p210
      %p291 = scmp.lt.s32.totalorder %s19, 1
      %s292 = scalar_select %p291, %s19, 1
      %s293 = smul.addr %s292, 36
      %s294 = smul.addr %s293, 4
      %s295 = scalar_lea.vmem %s8, %s294
      %p296 = scmp.lt.s32.totalorder %s19, 1
      %s297 = scalar_select %p296, %s19, 1
      %s298 = smul.addr %s297, 36
      %s299 = smul.addr %s298, 4
      %s300 = scalar_lea.vmem %s0, %s299
      %p301 = scmp.lt.s32.totalorder %s19, 1
      %s302 = scalar_select %p301, %s19, 1
      %s303 = smul.addr %s302, 36
      %s304 = smul.addr %s303, 4
      %s305 = scalar_lea.vmem %s8, %s304
      %v307 = vld [vmem:[%s300] sm:$0xf]
      %v308 = vld [vmem:[%s300 + $0x4] sm:$0xf]
      %v309 = vld [vmem:[%s300 + $0x8] sm:$0xf]
      %v310 = vld [vmem:[%s300 + $0xc] sm:$0xf]
      %v311 = vld [vmem:[%s300 + $0x10] sm:$0xf]
      %v312 = vld [vmem:[%s300 + $0x14] sm:$0xf]
      %v313 = vld [vmem:[%s300 + $0x18] sm:$0xf]
      %v314 = vld [vmem:[%s300 + $0x1c] sm:$0xf]
      %v315 = vld [vmem:[%s300 + $0x20] sm:$0xf]
      %v316 = vld [vmem:[%s300 + $0x24] sm:$0xf]
      %v317 = vld [vmem:[%s300 + $0x28] sm:$0xf]
      %v318 = vld [vmem:[%s300 + $0x2c] sm:$0xf]
      %v319 = vld [vmem:[%s300 + $0x30] sm:$0xf]
      %v320 = vld [vmem:[%s300 + $0x34] sm:$0xf]
      %v321 = vld [vmem:[%s300 + $0x38] sm:$0xf]
      %v322 = vld [vmem:[%s300 + $0x3c] sm:$0xf]
      %v323 = vld [vmem:[%s300 + $0x40] sm:$0xf]
      %v324 = vld [vmem:[%s300 + $0x44] sm:$0xf]
      %v325 = vld [vmem:[%s300 + $0x48] sm:$0xf]
      %v326 = vld [vmem:[%s300 + $0x4c] sm:$0xf]
      %v327 = vld [vmem:[%s300 + $0x50] sm:$0xf]
      %v328 = vld [vmem:[%s300 + $0x54] sm:$0xf]
      %v329 = vld [vmem:[%s300 + $0x58] sm:$0xf]
      %v330 = vld [vmem:[%s300 + $0x5c] sm:$0xf]
      %v331 = vld [vmem:[%s300 + $0x60] sm:$0xf]
      %v332 = vld [vmem:[%s300 + $0x64] sm:$0xf]
      %v333 = vld [vmem:[%s300 + $0x68] sm:$0xf]
      %v334 = vld [vmem:[%s300 + $0x6c] sm:$0xf]
      %v335 = vld [vmem:[%s300 + $0x70] sm:$0xf]
      %v336 = vld [vmem:[%s300 + $0x74] sm:$0xf]
      %v337 = vld [vmem:[%s300 + $0x78] sm:$0xf]
      %v338 = vld [vmem:[%s300 + $0x7c] sm:$0xf]
      %v339 = vld [vmem:[%s300 + $0x80] sm:$0xf]
      %v340 = vld [vmem:[%s300 + $0x84] sm:$0xf]
      %v341 = vld [vmem:[%s300 + $0x88] sm:$0xf]
      %v342 = vld [vmem:[%s300 + $0x8c] sm:$0xf]
      %v343 = vld [vmem:[%s2] sm:$0xf]
      %v344 = vld [vmem:[%s2 + $0x4] sm:$0xf]
      %v345 = vld [vmem:[%s5] sm:$0x1]
      %v347 = vperm.slane %v345, 0
      %v385 = vunpack.c.l.b16 %v307
      %v386 = vunpack.c.l.b16 %v308
      %v387 = vunpack.c.l.b16 %v309
      %v388 = vunpack.c.l.b16 %v310
      %v389 = vunpack.c.l.b16 %v311
      %v390 = vunpack.c.l.b16 %v312
      %v391 = vunpack.c.l.b16 %v313
      %v392 = vunpack.c.l.b16 %v314
      %v393 = vunpack.c.l.b16 %v315
      %v394 = vunpack.c.l.b16 %v316
      %v395 = vunpack.c.l.b16 %v317
      %v396 = vunpack.c.l.b16 %v318
      %v397 = vunpack.c.l.b16 %v319
      %v398 = vunpack.c.l.b16 %v320
      %v399 = vunpack.c.l.b16 %v321
      %v400 = vunpack.c.l.b16 %v322
      %v401 = vunpack.c.l.b16 %v323
      %v402 = vunpack.c.l.b16 %v324
      %v403 = vunpack.c.l.b16 %v325
      %v404 = vunpack.c.l.b16 %v326
      %v405 = vunpack.c.l.b16 %v327
      %v406 = vunpack.c.l.b16 %v328
      %v407 = vunpack.c.l.b16 %v329
      %v408 = vunpack.c.l.b16 %v330
      %v409 = vunpack.c.l.b16 %v331
      %v410 = vunpack.c.l.b16 %v332
      %v411 = vunpack.c.l.b16 %v333
      %v412 = vunpack.c.l.b16 %v334
      %v413 = vunpack.c.l.b16 %v335
      %v414 = vunpack.c.l.b16 %v336
      %v415 = vunpack.c.l.b16 %v337
      %v416 = vunpack.c.l.b16 %v338
      %v417 = vunpack.c.l.b16 %v339
      %v418 = vunpack.c.l.b16 %v340
      %v419 = vunpack.c.l.b16 %v341
      %v420 = vunpack.c.l.b16 %v342
      %v421 = vpack.c.b16 %v386, %v385
      %v422 = vpack.c.b16 %v388, %v387
      %v423 = vpack.c.b16 %v390, %v389
      %v424 = vpack.c.b16 %v392, %v391
      %v425 = vpack.c.b16 %v394, %v393
      %v426 = vpack.c.b16 %v396, %v395
      %v427 = vpack.c.b16 %v398, %v397
      %v428 = vpack.c.b16 %v400, %v399
      %v429 = vpack.c.b16 %v402, %v401
      %v430 = vpack.c.b16 %v404, %v403
      %v431 = vpack.c.b16 %v406, %v405
      %v432 = vpack.c.b16 %v408, %v407
      %v433 = vpack.c.b16 %v410, %v409
      %v434 = vpack.c.b16 %v412, %v411
      %v435 = vpack.c.b16 %v414, %v413
      %v436 = vpack.c.b16 %v416, %v415
      %v437 = vpack.c.b16 %v418, %v417
      %v438 = vpack.c.b16 %v420, %v419
      %v441 = vunpack.c.l.b16 %v343
      %v442 = vunpack.c.l.b16 %v344
      %v443 = vpack.c.b16 %v442, %v441
      %vm445 = vcmask 130048
      %v447 = vsel %vm445, %v421, 0
      %v450 = vsel %vm445, %v422, 0
      %v453 = vsel %vm445, %v423, 0
      %v456 = vsel %vm445, %v424, 0
      %v459 = vsel %vm445, %v425, 0
      %v462 = vsel %vm445, %v426, 0
      %v465 = vsel %vm445, %v427, 0
      %v468 = vsel %vm445, %v428, 0
      %v471 = vsel %vm445, %v429, 0
      %v474 = vsel %vm445, %v430, 0
      %v477 = vsel %vm445, %v431, 0
      %v480 = vsel %vm445, %v432, 0
      %v483 = vsel %vm445, %v433, 0
      %v486 = vsel %vm445, %v434, 0
      %v489 = vsel %vm445, %v435, 0
      %v492 = vsel %vm445, %v436, 0
      %v495 = vsel %vm445, %v437, 0
      %v498 = vsel %vm445, %v438, 0
      %500 = vmatpush.bf16.msra.mxu0 0
      %501 = vmatpush.bf16.msra.mxu0 0
      %502 = vmatpush.bf16.msra.mxu0 0
      %503 = vmatpush.bf16.msra.mxu0 0
      %504 = vmatpush.bf16.msra.mxu0 0
      %505 = vmatpush.bf16.msra.mxu0 0
      %506 = vmatpush.bf16.msra.mxu0 0
      %507 = vmatpush.bf16.msra.mxu0 %v443
      %508 = vmatmul.bf16.gmra.mxu0 %v447
      %v509 = vpop.f32.mrf.mxu0
      %v510 = vadd.f32 %v347, %v509
      %v511 = vpop.f32.mrf.mxu0
      %v512 = vadd.f32 %v347, %v511
      %513 = vmatmul.bf16.gmra.mxu0 %v450
      %v514 = vpop.f32.mrf.mxu0
      %v515 = vadd.f32 %v347, %v514
      %v516 = vpop.f32.mrf.mxu0
      %v517 = vadd.f32 %v347, %v516
      %518 = vmatmul.bf16.gmra.mxu0 %v453
      %v519 = vpop.f32.mrf.mxu0
      %v520 = vadd.f32 %v347, %v519
      %v521 = vpop.f32.mrf.mxu0
      %v522 = vadd.f32 %v347, %v521
      %523 = vmatmul.bf16.gmra.mxu0 %v456
      %v524 = vpop.f32.mrf.mxu0
      %v525 = vadd.f32 %v347, %v524
      %v526 = vpop.f32.mrf.mxu0
      %v527 = vadd.f32 %v347, %v526
      %528 = vmatmul.bf16.gmra.mxu0 %v459
      %v529 = vpop.f32.mrf.mxu0
      %v530 = vadd.f32 %v347, %v529
      %v531 = vpop.f32.mrf.mxu0
      %v532 = vadd.f32 %v347, %v531
      %533 = vmatmul.bf16.gmra.mxu0 %v462
      %v534 = vpop.f32.mrf.mxu0
      %v535 = vadd.f32 %v347, %v534
      %v536 = vpop.f32.mrf.mxu0
      %v537 = vadd.f32 %v347, %v536
      %538 = vmatmul.bf16.gmra.mxu0 %v465
      %v539 = vpop.f32.mrf.mxu0
      %v540 = vadd.f32 %v347, %v539
      %v541 = vpop.f32.mrf.mxu0
      %v542 = vadd.f32 %v347, %v541
      %543 = vmatmul.bf16.gmra.mxu0 %v468
      %v544 = vpop.f32.mrf.mxu0
      %v545 = vadd.f32 %v347, %v544
      %v546 = vpop.f32.mrf.mxu0
      %v547 = vadd.f32 %v347, %v546
      %548 = vmatmul.bf16.gmra.mxu0 %v471
      %v549 = vpop.f32.mrf.mxu0
      %v550 = vadd.f32 %v347, %v549
      %v551 = vpop.f32.mrf.mxu0
      %v552 = vadd.f32 %v347, %v551
      %553 = vmatmul.bf16.gmra.mxu0 %v474
      %v554 = vpop.f32.mrf.mxu0
      %v555 = vadd.f32 %v347, %v554
      %v556 = vpop.f32.mrf.mxu0
      %v557 = vadd.f32 %v347, %v556
      %558 = vmatmul.bf16.gmra.mxu0 %v477
      %v559 = vpop.f32.mrf.mxu0
      %v560 = vadd.f32 %v347, %v559
      %v561 = vpop.f32.mrf.mxu0
      %v562 = vadd.f32 %v347, %v561
      %563 = vmatmul.bf16.gmra.mxu0 %v480
      %v564 = vpop.f32.mrf.mxu0
      %v565 = vadd.f32 %v347, %v564
      %v566 = vpop.f32.mrf.mxu0
      %v567 = vadd.f32 %v347, %v566
      %568 = vmatmul.bf16.gmra.mxu0 %v483
      %v569 = vpop.f32.mrf.mxu0
      %v570 = vadd.f32 %v347, %v569
      %v571 = vpop.f32.mrf.mxu0
      %v572 = vadd.f32 %v347, %v571
      %573 = vmatmul.bf16.gmra.mxu0 %v486
      %v574 = vpop.f32.mrf.mxu0
      %v575 = vadd.f32 %v347, %v574
      %v576 = vpop.f32.mrf.mxu0
      %v577 = vadd.f32 %v347, %v576
      %578 = vmatmul.bf16.gmra.mxu0 %v489
      %v579 = vpop.f32.mrf.mxu0
      %v580 = vadd.f32 %v347, %v579
      %v581 = vpop.f32.mrf.mxu0
      %v582 = vadd.f32 %v347, %v581
      %583 = vmatmul.bf16.gmra.mxu0 %v492
      %v584 = vpop.f32.mrf.mxu0
      %v585 = vadd.f32 %v347, %v584
      %v586 = vpop.f32.mrf.mxu0
      %v587 = vadd.f32 %v347, %v586
      %588 = vmatmul.bf16.gmra.mxu0 %v495
      %v589 = vpop.f32.mrf.mxu0
      %v590 = vadd.f32 %v347, %v589
      %v591 = vpop.f32.mrf.mxu0
      %v592 = vadd.f32 %v347, %v591
      %593 = vmatmul.bf16.gmra.mxu0 %v498
      %v594 = vpop.f32.mrf.mxu0
      %v595 = vadd.f32 %v347, %v594
      %v596 = vpop.f32.mrf.mxu0
      %v597 = vadd.f32 %v347, %v596
      %598 = vdwg.mxu0
      %v599 = vmax.f32 %v510, 0.0
      %v600 = vmax.f32 %v512, 0.0
      %v601 = vmax.f32 %v515, 0.0
      %v602 = vmax.f32 %v517, 0.0
      %v603 = vmax.f32 %v520, 0.0
      %v604 = vmax.f32 %v522, 0.0
      %v605 = vmax.f32 %v525, 0.0
      %v606 = vmax.f32 %v527, 0.0
      %v607 = vmax.f32 %v530, 0.0
      %v608 = vmax.f32 %v532, 0.0
      %v609 = vmax.f32 %v535, 0.0
      %v610 = vmax.f32 %v537, 0.0
      %v611 = vmax.f32 %v540, 0.0
      %v612 = vmax.f32 %v542, 0.0
      %v613 = vmax.f32 %v545, 0.0
      %v614 = vmax.f32 %v547, 0.0
      %v615 = vmax.f32 %v550, 0.0
      %v616 = vmax.f32 %v552, 0.0
      %v617 = vmax.f32 %v555, 0.0
      %v618 = vmax.f32 %v557, 0.0
      %v619 = vmax.f32 %v560, 0.0
      %v620 = vmax.f32 %v562, 0.0
      %v621 = vmax.f32 %v565, 0.0
      %v622 = vmax.f32 %v567, 0.0
      %v623 = vmax.f32 %v570, 0.0
      %v624 = vmax.f32 %v572, 0.0
      %v625 = vmax.f32 %v575, 0.0
      %v626 = vmax.f32 %v577, 0.0
      %v627 = vmax.f32 %v580, 0.0
      %v628 = vmax.f32 %v582, 0.0
      %v629 = vmax.f32 %v585, 0.0
      %v630 = vmax.f32 %v587, 0.0
      %v631 = vmax.f32 %v590, 0.0
      %v632 = vmax.f32 %v592, 0.0
      %v633 = vmax.f32 %v595, 0.0
      %v634 = vmax.f32 %v597, 0.0
      %v635 = vld [vmem:[%s1] sm:$0xff]
      %v636 = vld [vmem:[%s1 + $0x8] sm:$0xff]
      %v637 = vld [vmem:[%s1 + $0x10] sm:$0xff]
      %v638 = vld [vmem:[%s1 + $0x18] sm:$0xff]
      %v639 = vld [vmem:[%s1 + $0x20] sm:$0xff]
      %v640 = vld [vmem:[%s1 + $0x28] sm:$0xff]
      %v641 = vld [vmem:[%s1 + $0x30] sm:$0xff]
      %v642 = vld [vmem:[%s1 + $0x38] sm:$0xff]
      %v643 = vld [vmem:[%s1 + $0x40] sm:$0xff]
      %v644 = vld [vmem:[%s1 + $0x48] sm:$0xff]
      %v645 = vld [vmem:[%s1 + $0x50] sm:$0xff]
      %v646 = vld [vmem:[%s1 + $0x58] sm:$0xff]
      %v647 = vld [vmem:[%s1 + $0x60] sm:$0xff]
      %v648 = vld [vmem:[%s1 + $0x68] sm:$0xff]
      %v649 = vld [vmem:[%s1 + $0x70] sm:$0xff]
      %v650 = vld [vmem:[%s1 + $0x78] sm:$0xff]
      %v651 = vld [vmem:[%s1 + $0x80] sm:$0xff]
      %v652 = vld [vmem:[%s1 + $0x88] sm:$0xff]
      %v653 = vld [vmem:[%s1 + $0x90] sm:$0xff]
      %v654 = vld [vmem:[%s1 + $0x98] sm:$0xff]
      %v655 = vld [vmem:[%s1 + $0xa0] sm:$0xff]
      %v656 = vld [vmem:[%s1 + $0xa8] sm:$0xff]
      %v657 = vld [vmem:[%s1 + $0xb0] sm:$0xff]
      %v658 = vld [vmem:[%s1 + $0xb8] sm:$0xff]
      %v659 = vld [vmem:[%s1 + $0xc0] sm:$0xff]
      %v660 = vld [vmem:[%s1 + $0xc8] sm:$0xff]
      %v661 = vld [vmem:[%s1 + $0xd0] sm:$0xff]
      %v662 = vld [vmem:[%s1 + $0xd8] sm:$0xff]
      %v663 = vld [vmem:[%s1 + $0xe0] sm:$0xff]
      %v664 = vld [vmem:[%s1 + $0xe8] sm:$0xff]
      %v665 = vld [vmem:[%s1 + $0xf0] sm:$0xff]
      %v666 = vld [vmem:[%s1 + $0xf8] sm:$0xff]
      %v667 = vld [vmem:[%s1 + $0x100] sm:$0xff]
      %v668 = vld [vmem:[%s1 + $0x108] sm:$0xff]
      %v669 = vld [vmem:[%s1 + $0x110] sm:$0xff]
      %v670 = vld [vmem:[%s1 + $0x118] sm:$0xff]
      %672 = vset.pattern.permute.xlu0 0
      %673 = vperm.xlu0 %672, %v635
      %v674 = vpop.permute.xlu0 %673
      %677 = vset.pattern.permute.xlu0 0
      %678 = vperm.xlu0 %677, %v636
      %v679 = vpop.permute.xlu0 %678
      %682 = vset.pattern.permute.xlu0 0
      %683 = vperm.xlu0 %682, %v637
      %v684 = vpop.permute.xlu0 %683
      %687 = vset.pattern.permute.xlu0 0
      %688 = vperm.xlu0 %687, %v638
      %v689 = vpop.permute.xlu0 %688
      %692 = vset.pattern.permute.xlu0 0
      %693 = vperm.xlu0 %692, %v639
      %v694 = vpop.permute.xlu0 %693
      %697 = vset.pattern.permute.xlu0 0
      %698 = vperm.xlu0 %697, %v640
      %v699 = vpop.permute.xlu0 %698
      %702 = vset.pattern.permute.xlu0 0
      %703 = vperm.xlu0 %702, %v641
      %v704 = vpop.permute.xlu0 %703
      %707 = vset.pattern.permute.xlu0 0
      %708 = vperm.xlu0 %707, %v642
      %v709 = vpop.permute.xlu0 %708
      %712 = vset.pattern.permute.xlu0 0
      %713 = vperm.xlu0 %712, %v643
      %v714 = vpop.permute.xlu0 %713
      %717 = vset.pattern.permute.xlu0 0
      %718 = vperm.xlu0 %717, %v644
      %v719 = vpop.permute.xlu0 %718
      %722 = vset.pattern.permute.xlu0 0
      %723 = vperm.xlu0 %722, %v645
      %v724 = vpop.permute.xlu0 %723
      %727 = vset.pattern.permute.xlu0 0
      %728 = vperm.xlu0 %727, %v646
      %v729 = vpop.permute.xlu0 %728
      %732 = vset.pattern.permute.xlu0 0
      %733 = vperm.xlu0 %732, %v647
      %v734 = vpop.permute.xlu0 %733
      %737 = vset.pattern.permute.xlu0 0
      %738 = vperm.xlu0 %737, %v648
      %v739 = vpop.permute.xlu0 %738
      %742 = vset.pattern.permute.xlu0 0
      %743 = vperm.xlu0 %742, %v649
      %v744 = vpop.permute.xlu0 %743
      %747 = vset.pattern.permute.xlu0 0
      %748 = vperm.xlu0 %747, %v650
      %v749 = vpop.permute.xlu0 %748
      %752 = vset.pattern.permute.xlu0 0
      %753 = vperm.xlu0 %752, %v651
      %v754 = vpop.permute.xlu0 %753
      %757 = vset.pattern.permute.xlu0 0
      %758 = vperm.xlu0 %757, %v652
      %v759 = vpop.permute.xlu0 %758
      %762 = vset.pattern.permute.xlu0 0
      %763 = vperm.xlu0 %762, %v653
      %v764 = vpop.permute.xlu0 %763
      %767 = vset.pattern.permute.xlu0 0
      %768 = vperm.xlu0 %767, %v654
      %v769 = vpop.permute.xlu0 %768
      %772 = vset.pattern.permute.xlu0 0
      %773 = vperm.xlu0 %772, %v655
      %v774 = vpop.permute.xlu0 %773
      %777 = vset.pattern.permute.xlu0 0
      %778 = vperm.xlu0 %777, %v656
      %v779 = vpop.permute.xlu0 %778
      %782 = vset.pattern.permute.xlu0 0
      %783 = vperm.xlu0 %782, %v657
      %v784 = vpop.permute.xlu0 %783
      %787 = vset.pattern.permute.xlu0 0
      %788 = vperm.xlu0 %787, %v658
      %v789 = vpop.permute.xlu0 %788
      %792 = vset.pattern.permute.xlu0 0
      %793 = vperm.xlu0 %792, %v659
      %v794 = vpop.permute.xlu0 %793
      %797 = vset.pattern.permute.xlu0 0
      %798 = vperm.xlu0 %797, %v660
      %v799 = vpop.permute.xlu0 %798
      %802 = vset.pattern.permute.xlu0 0
      %803 = vperm.xlu0 %802, %v661
      %v804 = vpop.permute.xlu0 %803
      %807 = vset.pattern.permute.xlu0 0
      %808 = vperm.xlu0 %807, %v662
      %v809 = vpop.permute.xlu0 %808
      %812 = vset.pattern.permute.xlu0 0
      %813 = vperm.xlu0 %812, %v663
      %v814 = vpop.permute.xlu0 %813
      %817 = vset.pattern.permute.xlu0 0
      %818 = vperm.xlu0 %817, %v664
      %v819 = vpop.permute.xlu0 %818
      %822 = vset.pattern.permute.xlu0 0
      %823 = vperm.xlu0 %822, %v665
      %v824 = vpop.permute.xlu0 %823
      %827 = vset.pattern.permute.xlu0 0
      %828 = vperm.xlu0 %827, %v666
      %v829 = vpop.permute.xlu0 %828
      %832 = vset.pattern.permute.xlu0 0
      %833 = vperm.xlu0 %832, %v667
      %v834 = vpop.permute.xlu0 %833
      %837 = vset.pattern.permute.xlu0 0
      %838 = vperm.xlu0 %837, %v668
      %v839 = vpop.permute.xlu0 %838
      %842 = vset.pattern.permute.xlu0 0
      %843 = vperm.xlu0 %842, %v669
      %v844 = vpop.permute.xlu0 %843
      %847 = vset.pattern.permute.xlu0 0
      %848 = vperm.xlu0 %847, %v670
      %v849 = vpop.permute.xlu0 %848
      %v851 = vmul.f32 %v599, %v674
      %v852 = vmul.f32 %v600, %v679
      %v853 = vmul.f32 %v601, %v684
      %v854 = vmul.f32 %v602, %v689
      %v855 = vmul.f32 %v603, %v694
      %v856 = vmul.f32 %v604, %v699
      %v857 = vmul.f32 %v605, %v704
      %v858 = vmul.f32 %v606, %v709
      %v859 = vmul.f32 %v607, %v714
      %v860 = vmul.f32 %v608, %v719
      %v861 = vmul.f32 %v609, %v724
      %v862 = vmul.f32 %v610, %v729
      %v863 = vmul.f32 %v611, %v734
      %v864 = vmul.f32 %v612, %v739
      %v865 = vmul.f32 %v613, %v744
      %v866 = vmul.f32 %v614, %v749
      %v867 = vmul.f32 %v615, %v754
      %v868 = vmul.f32 %v616, %v759
      %v869 = vmul.f32 %v617, %v764
      %v870 = vmul.f32 %v618, %v769
      %v871 = vmul.f32 %v619, %v774
      %v872 = vmul.f32 %v620, %v779
      %v873 = vmul.f32 %v621, %v784
      %v874 = vmul.f32 %v622, %v789
      %v875 = vmul.f32 %v623, %v794
      %v876 = vmul.f32 %v624, %v799
      %v877 = vmul.f32 %v625, %v804
      %v878 = vmul.f32 %v626, %v809
      %v879 = vmul.f32 %v627, %v814
      %v880 = vmul.f32 %v628, %v819
      %v881 = vmul.f32 %v629, %v824
      %v882 = vmul.f32 %v630, %v829
      %v883 = vmul.f32 %v631, %v834
      %v884 = vmul.f32 %v632, %v839
      %v885 = vmul.f32 %v633, %v844
      %v886 = vmul.f32 %v634, %v849
      %v887 = vpack.c.bf16 %v851, %v851
      %v888 = vpack.c.bf16 %v852, %v852
      %v889 = vpack.c.bf16 %v853, %v853
      %v890 = vpack.c.bf16 %v854, %v854
      %v891 = vpack.c.bf16 %v855, %v855
      %v892 = vpack.c.bf16 %v856, %v856
      %v893 = vpack.c.bf16 %v857, %v857
      %v894 = vpack.c.bf16 %v858, %v858
      %v895 = vpack.c.bf16 %v859, %v859
      %v896 = vpack.c.bf16 %v860, %v860
      %v897 = vpack.c.bf16 %v861, %v861
      %v898 = vpack.c.bf16 %v862, %v862
      %v899 = vpack.c.bf16 %v863, %v863
      %v900 = vpack.c.bf16 %v864, %v864
      %v901 = vpack.c.bf16 %v865, %v865
      %v902 = vpack.c.bf16 %v866, %v866
      %v903 = vpack.c.bf16 %v867, %v867
      %v904 = vpack.c.bf16 %v868, %v868
      %v905 = vpack.c.bf16 %v869, %v869
      %v906 = vpack.c.bf16 %v870, %v870
      %v907 = vpack.c.bf16 %v871, %v871
      %v908 = vpack.c.bf16 %v872, %v872
      %v909 = vpack.c.bf16 %v873, %v873
      %v910 = vpack.c.bf16 %v874, %v874
      %v911 = vpack.c.bf16 %v875, %v875
      %v912 = vpack.c.bf16 %v876, %v876
      %v913 = vpack.c.bf16 %v877, %v877
      %v914 = vpack.c.bf16 %v878, %v878
      %v915 = vpack.c.bf16 %v879, %v879
      %v916 = vpack.c.bf16 %v880, %v880
      %v917 = vpack.c.bf16 %v881, %v881
      %v918 = vpack.c.bf16 %v882, %v882
      %v919 = vpack.c.bf16 %v883, %v883
      %v920 = vpack.c.bf16 %v884, %v884
      %v921 = vpack.c.bf16 %v885, %v885
      %v922 = vpack.c.bf16 %v886, %v886
      %vm923 = vcmask 27648
      %924 = vst.msk [vmem:[#allocation2] sm:$0xf] %vm923, 0
      %925 = vst.msk [vmem:[#allocation2 + $0x4] sm:$0xf] %vm923, 0
      %926 = vst.msk [vmem:[#allocation2 + $0x8] sm:$0xf] %vm923, 0
      %927 = vst.msk [vmem:[#allocation2 + $0x9c] sm:$0xf] %vm923, 0
      %928 = vst.msk [vmem:[#allocation2 + $0xa0] sm:$0xf] %vm923, 0
      %929 = vst.msk [vmem:[#allocation2 + $0xa4] sm:$0xf] %vm923, 0
      %930 = vst.msk [vmem:[#allocation2 + $0xa8] sm:$0xf] %vm923, 0
      %vm931 = vcmask 25600
      %vm932 = vsmask.f32 1280
      %vm933 = vmand %vm931, %vm932
      %v934 = vld [vmem:[#allocation2 + $0xac] sm:$0x3]
      %v935 = vsel %vm933, 0, %v934
      %936 = vst [vmem:[#allocation2 + $0xac] sm:$0x3] %v935
      %937 = vst.msk [vmem:[#allocation2 + $0xc] sm:$0xf] %vm923, %v887
      %938 = vst.msk [vmem:[#allocation2 + $0x10] sm:$0xf] %vm923, %v888
      %939 = vst.msk [vmem:[#allocation2 + $0x14] sm:$0xf] %vm923, %v889
      %940 = vst.msk [vmem:[#allocation2 + $0x18] sm:$0xf] %vm923, %v890
      %941 = vst.msk [vmem:[#allocation2 + $0x1c] sm:$0xf] %vm923, %v891
      %942 = vst.msk [vmem:[#allocation2 + $0x20] sm:$0xf] %vm923, %v892
      %943 = vst.msk [vmem:[#allocation2 + $0x24] sm:$0xf] %vm923, %v893
      %944 = vst.msk [vmem:[#allocation2 + $0x28] sm:$0xf] %vm923, %v894
      %945 = vst.msk [vmem:[#allocation2 + $0x2c] sm:$0xf] %vm923, %v895
      %946 = vst.msk [vmem:[#allocation2 + $0x30] sm:$0xf] %vm923, %v896
      %947 = vst.msk [vmem:[#allocation2 + $0x34] sm:$0xf] %vm923, %v897
      %948 = vst.msk [vmem:[#allocation2 + $0x38] sm:$0xf] %vm923, %v898
      %949 = vst.msk [vmem:[#allocation2 + $0x3c] sm:$0xf] %vm923, %v899
      %950 = vst.msk [vmem:[#allocation2 + $0x40] sm:$0xf] %vm923, %v900
      %951 = vst.msk [vmem:[#allocation2 + $0x44] sm:$0xf] %vm923, %v901
      %952 = vst.msk [vmem:[#allocation2 + $0x48] sm:$0xf] %vm923, %v902
      %953 = vst.msk [vmem:[#allocation2 + $0x4c] sm:$0xf] %vm923, %v903
      %954 = vst.msk [vmem:[#allocation2 + $0x50] sm:$0xf] %vm923, %v904
      %955 = vst.msk [vmem:[#allocation2 + $0x54] sm:$0xf] %vm923, %v905
      %956 = vst.msk [vmem:[#allocation2 + $0x58] sm:$0xf] %vm923, %v906
      %957 = vst.msk [vmem:[#allocation2 + $0x5c] sm:$0xf] %vm923, %v907
      %958 = vst.msk [vmem:[#allocation2 + $0x60] sm:$0xf] %vm923, %v908
      %959 = vst.msk [vmem:[#allocation2 + $0x64] sm:$0xf] %vm923, %v909
      %960 = vst.msk [vmem:[#allocation2 + $0x68] sm:$0xf] %vm923, %v910
      %961 = vst.msk [vmem:[#allocation2 + $0x6c] sm:$0xf] %vm923, %v911
      %962 = vst.msk [vmem:[#allocation2 + $0x70] sm:$0xf] %vm923, %v912
      %963 = vst.msk [vmem:[#allocation2 + $0x74] sm:$0xf] %vm923, %v913
      %964 = vst.msk [vmem:[#allocation2 + $0x78] sm:$0xf] %vm923, %v914
      %965 = vst.msk [vmem:[#allocation2 + $0x7c] sm:$0xf] %vm923, %v915
      %966 = vst.msk [vmem:[#allocation2 + $0x80] sm:$0xf] %vm923, %v916
      %967 = vst.msk [vmem:[#allocation2 + $0x84] sm:$0xf] %vm923, %v917
      %968 = vst.msk [vmem:[#allocation2 + $0x88] sm:$0xf] %vm923, %v918
      %969 = vst.msk [vmem:[#allocation2 + $0x8c] sm:$0xf] %vm923, %v919
      %970 = vst.msk [vmem:[#allocation2 + $0x90] sm:$0xf] %vm923, %v920
      %971 = vst.msk [vmem:[#allocation2 + $0x94] sm:$0xf] %vm923, %v921
      %972 = vst.msk [vmem:[#allocation2 + $0x98] sm:$0xf] %vm923, %v922
      %v973 = vld [vmem:[#allocation2] sm:$0xc]
      %v974 = vld [vmem:[#allocation2 + $0x4] sm:$0xf]
      %v975 = vld [vmem:[#allocation2 + $0x8] sm:$0xf]
      %v976 = vld [vmem:[#allocation2 + $0xc] sm:$0xf]
      %v977 = vld [vmem:[#allocation2 + $0x10] sm:$0xf]
      %v978 = vld [vmem:[#allocation2 + $0x14] sm:$0xf]
      %v979 = vld [vmem:[#allocation2 + $0x18] sm:$0xf]
      %v980 = vld [vmem:[#allocation2 + $0x1c] sm:$0xf]
      %v981 = vld [vmem:[#allocation2 + $0x20] sm:$0xf]
      %v982 = vld [vmem:[#allocation2 + $0x24] sm:$0xf]
      %v983 = vld [vmem:[#allocation2 + $0x28] sm:$0xf]
      %v984 = vld [vmem:[#allocation2 + $0x2c] sm:$0xf]
      %v985 = vld [vmem:[#allocation2 + $0x30] sm:$0xf]
      %v986 = vld [vmem:[#allocation2 + $0x34] sm:$0xf]
      %v987 = vld [vmem:[#allocation2 + $0x38] sm:$0xf]
      %v988 = vld [vmem:[#allocation2 + $0x3c] sm:$0xf]
      %v989 = vld [vmem:[#allocation2 + $0x40] sm:$0xf]
      %v990 = vld [vmem:[#allocation2 + $0x44] sm:$0xf]
      %v991 = vld [vmem:[#allocation2 + $0x48] sm:$0xf]
      %v992 = vld [vmem:[#allocation2 + $0x4c] sm:$0xf]
      %v993 = vld [vmem:[#allocation2 + $0x50] sm:$0xf]
      %v994 = vld [vmem:[#allocation2 + $0x54] sm:$0xf]
      %v995 = vld [vmem:[#allocation2 + $0x58] sm:$0xf]
      %v996 = vld [vmem:[#allocation2 + $0x5c] sm:$0xf]
      %v997 = vld [vmem:[#allocation2 + $0x60] sm:$0xf]
      %v998 = vld [vmem:[#allocation2 + $0x64] sm:$0xf]
      %v999 = vld [vmem:[#allocation2 + $0x68] sm:$0xf]
      %v1000 = vld [vmem:[#allocation2 + $0x6c] sm:$0xf]
      %v1001 = vld [vmem:[#allocation2 + $0x70] sm:$0xf]
      %v1002 = vld [vmem:[#allocation2 + $0x74] sm:$0xf]
      %v1003 = vld [vmem:[#allocation2 + $0x78] sm:$0xf]
      %v1004 = vld [vmem:[#allocation2 + $0x7c] sm:$0xf]
      %v1005 = vld [vmem:[#allocation2 + $0x80] sm:$0xf]
      %v1006 = vld [vmem:[#allocation2 + $0x84] sm:$0xf]
      %v1007 = vld [vmem:[#allocation2 + $0x88] sm:$0xf]
      %v1008 = vld [vmem:[#allocation2 + $0x8c] sm:$0xf]
      %v1009 = vld [vmem:[#allocation2 + $0x90] sm:$0x7]
      %v1010 = vld [vmem:[#allocation2] sm:$0x8]
      %v1011 = vld [vmem:[#allocation2 + $0x90] sm:$0xf]
      %v1049 = vunpack.c.l.b16 %v973
      %v1050 = vunpack.c.l.b16 %v974
      %v1051 = vunpack.c.l.b16 %v975
      %v1052 = vunpack.c.l.b16 %v976
      %v1053 = vunpack.c.l.b16 %v977
      %v1054 = vunpack.c.l.b16 %v978
      %v1055 = vunpack.c.l.b16 %v979
      %v1056 = vunpack.c.l.b16 %v980
      %v1057 = vunpack.c.l.b16 %v981
      %v1058 = vunpack.c.l.b16 %v982
      %v1059 = vunpack.c.l.b16 %v983
      %v1060 = vunpack.c.l.b16 %v984
      %v1061 = vunpack.c.l.b16 %v985
      %v1062 = vunpack.c.l.b16 %v986
      %v1063 = vunpack.c.l.b16 %v987
      %v1064 = vunpack.c.l.b16 %v988
      %v1065 = vunpack.c.l.b16 %v989
      %v1066 = vunpack.c.l.b16 %v990
      %v1067 = vunpack.c.l.b16 %v991
      %v1068 = vunpack.c.l.b16 %v992
      %v1069 = vunpack.c.l.b16 %v993
      %v1070 = vunpack.c.l.b16 %v994
      %v1071 = vunpack.c.l.b16 %v995
      %v1072 = vunpack.c.l.b16 %v996
      %v1073 = vunpack.c.l.b16 %v997
      %v1074 = vunpack.c.l.b16 %v998
      %v1075 = vunpack.c.l.b16 %v999
      %v1076 = vunpack.c.l.b16 %v1000
      %v1077 = vunpack.c.l.b16 %v1001
      %v1078 = vunpack.c.l.b16 %v1002
      %v1079 = vunpack.c.l.b16 %v1003
      %v1080 = vunpack.c.l.b16 %v1004
      %v1081 = vunpack.c.l.b16 %v1005
      %v1082 = vunpack.c.l.b16 %v1006
      %v1083 = vunpack.c.l.b16 %v1007
      %v1084 = vunpack.c.l.b16 %v1008
      %v1085 = vunpack.c.l.b16 %v1009
      %v1086 = vpack.c.b16 %v1050, %v1049
      %v1087 = vpack.c.b16 %v1052, %v1051
      %v1088 = vpack.c.b16 %v1054, %v1053
      %v1089 = vpack.c.b16 %v1056, %v1055
      %v1090 = vpack.c.b16 %v1058, %v1057
      %v1091 = vpack.c.b16 %v1060, %v1059
      %v1092 = vpack.c.b16 %v1062, %v1061
      %v1093 = vpack.c.b16 %v1064, %v1063
      %v1094 = vpack.c.b16 %v1066, %v1065
      %v1095 = vpack.c.b16 %v1068, %v1067
      %v1096 = vpack.c.b16 %v1070, %v1069
      %v1097 = vpack.c.b16 %v1072, %v1071
      %v1098 = vpack.c.b16 %v1074, %v1073
      %v1099 = vpack.c.b16 %v1076, %v1075
      %v1100 = vpack.c.b16 %v1078, %v1077
      %v1101 = vpack.c.b16 %v1080, %v1079
      %v1102 = vpack.c.b16 %v1082, %v1081
      %v1103 = vpack.c.b16 %v1084, %v1083
      %v1104 = vpack.c.b16 %v1085, %v1085
      %v1106 = vunpack.c.l.b16 %v1010
      %v1107 = vpack.c.b16 %v1050, %v1106
      %vm1108 = vsmask.f32 7424
      %v1110 = vshrl.u32 %v1107, 16
      %v1112 = vshll.u32 %v1107, 16
      %v1114 = vrot.slane %v1112, 1
      %v1115 = vor.u32 %v1110, %v1114
      %v1117 = vshll.u32 %v1087, 16
      %v1119 = vrot.slane %v1117, 1
      %v1120 = vsel %vm1108, %v1115, %v1119
      %v1121 = vshrl.u32 %v1087, 16
      %v1123 = vor.u32 %v1121, %v1119
      %v1125 = vshll.u32 %v1088, 16
      %v1127 = vrot.slane %v1125, 1
      %v1128 = vsel %vm1108, %v1123, %v1127
      %v1129 = vshrl.u32 %v1088, 16
      %v1131 = vor.u32 %v1129, %v1127
      %v1133 = vshll.u32 %v1089, 16
      %v1135 = vrot.slane %v1133, 1
      %v1136 = vsel %vm1108, %v1131, %v1135
      %v1137 = vshrl.u32 %v1089, 16
      %v1139 = vor.u32 %v1137, %v1135
      %v1141 = vshll.u32 %v1090, 16
      %v1143 = vrot.slane %v1141, 1
      %v1144 = vsel %vm1108, %v1139, %v1143
      %v1145 = vshrl.u32 %v1090, 16
      %v1147 = vor.u32 %v1145, %v1143
      %v1149 = vshll.u32 %v1091, 16
      %v1151 = vrot.slane %v1149, 1
      %v1152 = vsel %vm1108, %v1147, %v1151
      %v1153 = vshrl.u32 %v1091, 16
      %v1155 = vor.u32 %v1153, %v1151
      %v1157 = vshll.u32 %v1092, 16
      %v1159 = vrot.slane %v1157, 1
      %v1160 = vsel %vm1108, %v1155, %v1159
      %v1161 = vshrl.u32 %v1092, 16
      %v1163 = vor.u32 %v1161, %v1159
      %v1165 = vshll.u32 %v1093, 16
      %v1167 = vrot.slane %v1165, 1
      %v1168 = vsel %vm1108, %v1163, %v1167
      %v1169 = vshrl.u32 %v1093, 16
      %v1171 = vor.u32 %v1169, %v1167
      %v1173 = vshll.u32 %v1094, 16
      %v1175 = vrot.slane %v1173, 1
      %v1176 = vsel %vm1108, %v1171, %v1175
      %v1177 = vshrl.u32 %v1094, 16
      %v1179 = vor.u32 %v1177, %v1175
      %v1181 = vshll.u32 %v1095, 16
      %v1183 = vrot.slane %v1181, 1
      %v1184 = vsel %vm1108, %v1179, %v1183
      %v1185 = vshrl.u32 %v1095, 16
      %v1187 = vor.u32 %v1185, %v1183
      %v1189 = vshll.u32 %v1096, 16
      %v1191 = vrot.slane %v1189, 1
      %v1192 = vsel %vm1108, %v1187, %v1191
      %v1193 = vshrl.u32 %v1096, 16
      %v1195 = vor.u32 %v1193, %v1191
      %v1197 = vshll.u32 %v1097, 16
      %v1199 = vrot.slane %v1197, 1
      %v1200 = vsel %vm1108, %v1195, %v1199
      %v1201 = vshrl.u32 %v1097, 16
      %v1203 = vor.u32 %v1201, %v1199
      %v1205 = vshll.u32 %v1098, 16
      %v1207 = vrot.slane %v1205, 1
      %v1208 = vsel %vm1108, %v1203, %v1207
      %v1209 = vshrl.u32 %v1098, 16
      %v1211 = vor.u32 %v1209, %v1207
      %v1213 = vshll.u32 %v1099, 16
      %v1215 = vrot.slane %v1213, 1
      %v1216 = vsel %vm1108, %v1211, %v1215
      %v1217 = vshrl.u32 %v1099, 16
      %v1219 = vor.u32 %v1217, %v1215
      %v1221 = vshll.u32 %v1100, 16
      %v1223 = vrot.slane %v1221, 1
      %v1224 = vsel %vm1108, %v1219, %v1223
      %v1225 = vshrl.u32 %v1100, 16
      %v1227 = vor.u32 %v1225, %v1223
      %v1229 = vshll.u32 %v1101, 16
      %v1231 = vrot.slane %v1229, 1
      %v1232 = vsel %vm1108, %v1227, %v1231
      %v1233 = vshrl.u32 %v1101, 16
      %v1235 = vor.u32 %v1233, %v1231
      %v1237 = vshll.u32 %v1102, 16
      %v1239 = vrot.slane %v1237, 1
      %v1240 = vsel %vm1108, %v1235, %v1239
      %v1241 = vshrl.u32 %v1102, 16
      %v1243 = vor.u32 %v1241, %v1239
      %v1245 = vshll.u32 %v1103, 16
      %v1247 = vrot.slane %v1245, 1
      %v1248 = vsel %vm1108, %v1243, %v1247
      %v1249 = vshrl.u32 %v1103, 16
      %v1251 = vor.u32 %v1249, %v1247
      %v1253 = vshll.u32 %v1104, 16
      %v1255 = vrot.slane %v1253, 1
      %v1256 = vsel %vm1108, %v1251, %v1255
      %v1257 = vshrl.u32 %v1104, 16
      %v1259 = vor.u32 %v1257, %v1255
      %1260 = vrot.lane.b32.xlu0 %v1120, 4
      %v1261 = vpop.permute.xlu0 %1260
      %1262 = vrot.lane.b32.xlu0 %v1128, 4
      %v1263 = vpop.permute.xlu0 %1262
      %1264 = vrot.lane.b32.xlu0 %v1136, 4
      %v1265 = vpop.permute.xlu0 %1264
      %1266 = vrot.lane.b32.xlu0 %v1144, 4
      %v1267 = vpop.permute.xlu0 %1266
      %1268 = vrot.lane.b32.xlu0 %v1152, 4
      %v1269 = vpop.permute.xlu0 %1268
      %1270 = vrot.lane.b32.xlu0 %v1160, 4
      %v1271 = vpop.permute.xlu0 %1270
      %1272 = vrot.lane.b32.xlu0 %v1168, 4
      %v1273 = vpop.permute.xlu0 %1272
      %1274 = vrot.lane.b32.xlu0 %v1176, 4
      %v1275 = vpop.permute.xlu0 %1274
      %1276 = vrot.lane.b32.xlu0 %v1184, 4
      %v1277 = vpop.permute.xlu0 %1276
      %1278 = vrot.lane.b32.xlu0 %v1192, 4
      %v1279 = vpop.permute.xlu0 %1278
      %1280 = vrot.lane.b32.xlu0 %v1200, 4
      %v1281 = vpop.permute.xlu0 %1280
      %1282 = vrot.lane.b32.xlu0 %v1208, 4
      %v1283 = vpop.permute.xlu0 %1282
      %1284 = vrot.lane.b32.xlu0 %v1216, 4
      %v1285 = vpop.permute.xlu0 %1284
      %1286 = vrot.lane.b32.xlu0 %v1224, 4
      %v1287 = vpop.permute.xlu0 %1286
      %1288 = vrot.lane.b32.xlu0 %v1232, 4
      %v1289 = vpop.permute.xlu0 %1288
      %1290 = vrot.lane.b32.xlu0 %v1240, 4
      %v1291 = vpop.permute.xlu0 %1290
      %1292 = vrot.lane.b32.xlu0 %v1248, 4
      %v1293 = vpop.permute.xlu0 %1292
      %1294 = vrot.lane.b32.xlu0 %v1256, 4
      %v1295 = vpop.permute.xlu0 %1294
      %1296 = vrot.lane.b32.xlu0 %v1259, 4
      %v1297 = vpop.permute.xlu0 %1296
      %v1299 = vunpack.c.l.b16 %v1011
      %v1300 = vpack.c.b16 %v1299, %v1299
      %vm1301 = vcmask 1046528
      %v1302 = vrot.slane %v1107, 1
      %v1303 = vrot.slane %v1087, 1
      %v1304 = vsel %vm1301, %v1302, %v1303
      %v1305 = vrot.slane %v1088, 1
      %v1306 = vsel %vm1301, %v1303, %v1305
      %v1307 = vrot.slane %v1089, 1
      %v1308 = vsel %vm1301, %v1305, %v1307
      %v1309 = vrot.slane %v1090, 1
      %v1310 = vsel %vm1301, %v1307, %v1309
      %v1311 = vrot.slane %v1091, 1
      %v1312 = vsel %vm1301, %v1309, %v1311
      %v1313 = vrot.slane %v1092, 1
      %v1314 = vsel %vm1301, %v1311, %v1313
      %v1315 = vrot.slane %v1093, 1
      %v1316 = vsel %vm1301, %v1313, %v1315
      %v1317 = vrot.slane %v1094, 1
      %v1318 = vsel %vm1301, %v1315, %v1317
      %v1319 = vrot.slane %v1095, 1
      %v1320 = vsel %vm1301, %v1317, %v1319
      %v1321 = vrot.slane %v1096, 1
      %v1322 = vsel %vm1301, %v1319, %v1321
      %v1323 = vrot.slane %v1097, 1
      %v1324 = vsel %vm1301, %v1321, %v1323
      %v1325 = vrot.slane %v1098, 1
      %v1326 = vsel %vm1301, %v1323, %v1325
      %v1327 = vrot.slane %v1099, 1
      %v1328 = vsel %vm1301, %v1325, %v1327
      %v1329 = vrot.slane %v1100, 1
      %v1330 = vsel %vm1301, %v1327, %v1329
      %v1331 = vrot.slane %v1101, 1
      %v1332 = vsel %vm1301, %v1329, %v1331
      %v1333 = vrot.slane %v1102, 1
      %v1334 = vsel %vm1301, %v1331, %v1333
      %v1335 = vrot.slane %v1103, 1
      %v1336 = vsel %vm1301, %v1333, %v1335
      %v1337 = vrot.slane %v1300, 1
      %v1338 = vsel %vm1301, %v1335, %v1337
      %1339 = vrot.lane.b32.xlu0 %v1304, 8
      %v1340 = vpop.permute.xlu0 %1339
      %1341 = vrot.lane.b32.xlu0 %v1306, 8
      %v1342 = vpop.permute.xlu0 %1341
      %1343 = vrot.lane.b32.xlu0 %v1308, 8
      %v1344 = vpop.permute.xlu0 %1343
      %1345 = vrot.lane.b32.xlu0 %v1310, 8
      %v1346 = vpop.permute.xlu0 %1345
      %1347 = vrot.lane.b32.xlu0 %v1312, 8
      %v1348 = vpop.permute.xlu0 %1347
      %1349 = vrot.lane.b32.xlu0 %v1314, 8
      %v1350 = vpop.permute.xlu0 %1349
      %1351 = vrot.lane.b32.xlu0 %v1316, 8
      %v1352 = vpop.permute.xlu0 %1351
      %1353 = vrot.lane.b32.xlu0 %v1318, 8
      %v1354 = vpop.permute.xlu0 %1353
      %1355 = vrot.lane.b32.xlu0 %v1320, 8
      %v1356 = vpop.permute.xlu0 %1355
      %1357 = vrot.lane.b32.xlu0 %v1322, 8
      %v1358 = vpop.permute.xlu0 %1357
      %1359 = vrot.lane.b32.xlu0 %v1324, 8
      %v1360 = vpop.permute.xlu0 %1359
      %1361 = vrot.lane.b32.xlu0 %v1326, 8
      %v1362 = vpop.permute.xlu0 %1361
      %1363 = vrot.lane.b32.xlu0 %v1328, 8
      %v1364 = vpop.permute.xlu0 %1363
      %1365 = vrot.lane.b32.xlu0 %v1330, 8
      %v1366 = vpop.permute.xlu0 %1365
      %1367 = vrot.lane.b32.xlu0 %v1332, 8
      %v1368 = vpop.permute.xlu0 %1367
      %1369 = vrot.lane.b32.xlu0 %v1334, 8
      %v1370 = vpop.permute.xlu0 %1369
      %1371 = vrot.lane.b32.xlu0 %v1336, 8
      %v1372 = vpop.permute.xlu0 %1371
      %1373 = vrot.lane.b32.xlu0 %v1338, 8
      %v1374 = vpop.permute.xlu0 %1373
      %1375 = vrot.lane.b32.xlu0 %v1337, 8
      %v1376 = vpop.permute.xlu0 %1375
      %vm1377 = vcmask 31744
      %v1380 = vsel %vm1377, %v1086, %v1261
      %v1382 = vsel %vm1377, %v1087, %v1263
      %v1384 = vsel %vm1377, %v1088, %v1265
      %v1386 = vsel %vm1377, %v1089, %v1267
      %v1388 = vsel %vm1377, %v1090, %v1269
      %v1390 = vsel %vm1377, %v1091, %v1271
      %v1392 = vsel %vm1377, %v1092, %v1273
      %v1394 = vsel %vm1377, %v1093, %v1275
      %v1396 = vsel %vm1377, %v1094, %v1277
      %v1398 = vsel %vm1377, %v1095, %v1279
      %v1400 = vsel %vm1377, %v1096, %v1281
      %v1402 = vsel %vm1377, %v1097, %v1283
      %v1404 = vsel %vm1377, %v1098, %v1285
      %v1406 = vsel %vm1377, %v1099, %v1287
      %v1408 = vsel %vm1377, %v1100, %v1289
      %v1410 = vsel %vm1377, %v1101, %v1291
      %v1412 = vsel %vm1377, %v1102, %v1293
      %v1414 = vsel %vm1377, %v1103, %v1295
      %v1416 = vsel %vm1377, %v1104, %v1297
      %vm1417 = vcmask 64512
      %v1419 = vsel %vm1417, %v1380, %v1340
      %v1421 = vsel %vm1417, %v1382, %v1342
      %v1423 = vsel %vm1417, %v1384, %v1344
      %v1425 = vsel %vm1417, %v1386, %v1346
      %v1427 = vsel %vm1417, %v1388, %v1348
      %v1429 = vsel %vm1417, %v1390, %v1350
      %v1431 = vsel %vm1417, %v1392, %v1352
      %v1433 = vsel %vm1417, %v1394, %v1354
      %v1435 = vsel %vm1417, %v1396, %v1356
      %v1437 = vsel %vm1417, %v1398, %v1358
      %v1439 = vsel %vm1417, %v1400, %v1360
      %v1441 = vsel %vm1417, %v1402, %v1362
      %v1443 = vsel %vm1417, %v1404, %v1364
      %v1445 = vsel %vm1417, %v1406, %v1366
      %v1447 = vsel %vm1417, %v1408, %v1368
      %v1449 = vsel %vm1417, %v1410, %v1370
      %v1451 = vsel %vm1417, %v1412, %v1372
      %v1453 = vsel %vm1417, %v1414, %v1374
      %v1455 = vsel %vm1417, %v1416, %v1376
      %v1456 = vld [vmem:[%s3] sm:$0xf]
      %v1457 = vld [vmem:[%s3 + $0x4] sm:$0x3]
      %v1458 = vld [vmem:[#allocation2 + $0x8] sm:$0x8]
      %v1459 = vld [vmem:[#allocation2 + $0x94] sm:$0xf]
      %v1460 = vld [vmem:[#allocation2 + $0x98] sm:$0xf]
      %v1461 = vld [vmem:[#allocation2 + $0x9c] sm:$0x1]
      %v1465 = vunpack.c.l.b16 %v1458
      %v1466 = vunpack.c.l.b16 %v1459
      %v1467 = vunpack.c.l.b16 %v1460
      %v1468 = vpack.c.b16 %v1052, %v1465
      %v1469 = vpack.c.b16 %v1466, %v1299
      %v1470 = vpack.c.b16 %v1467, %v1467
      %v1471 = vpack.c.b16 %v1053, %v1052
      %v1472 = vpack.c.b16 %v1055, %v1054
      %v1473 = vpack.c.b16 %v1057, %v1056
      %v1474 = vpack.c.b16 %v1059, %v1058
      %v1475 = vpack.c.b16 %v1061, %v1060
      %v1476 = vpack.c.b16 %v1063, %v1062
      %v1477 = vpack.c.b16 %v1065, %v1064
      %v1478 = vpack.c.b16 %v1067, %v1066
      %v1479 = vpack.c.b16 %v1069, %v1068
      %v1480 = vpack.c.b16 %v1071, %v1070
      %v1481 = vpack.c.b16 %v1073, %v1072
      %v1482 = vpack.c.b16 %v1075, %v1074
      %v1483 = vpack.c.b16 %v1077, %v1076
      %v1484 = vpack.c.b16 %v1079, %v1078
      %v1485 = vpack.c.b16 %v1081, %v1080
      %v1486 = vpack.c.b16 %v1083, %v1082
      %v1487 = vpack.c.b16 %v1299, %v1084
      %v1488 = vpack.c.b16 %v1467, %v1466
      %vm1489 = vsmask.f32 3328
      %v1491 = vshrl.u32 %v1471, 16
      %v1493 = vrot.slane %v1491, 4
      %v1494 = vshll.u32 %v1471, 16
      %v1496 = vrot.slane %v1494, 5
      %v1497 = vor.u32 %v1493, %v1496
      %v1499 = vshrl.u32 %v1472, 16
      %v1501 = vrot.slane %v1499, 4
      %v1502 = vshll.u32 %v1472, 16
      %v1504 = vrot.slane %v1502, 5
      %v1505 = vor.u32 %v1501, %v1504
      %v1506 = vsel %vm1489, %v1497, %v1505
      %v1508 = vshrl.u32 %v1473, 16
      %v1510 = vrot.slane %v1508, 4
      %v1511 = vshll.u32 %v1473, 16
      %v1513 = vrot.slane %v1511, 5
      %v1514 = vor.u32 %v1510, %v1513
      %v1515 = vsel %vm1489, %v1505, %v1514
      %v1517 = vshrl.u32 %v1474, 16
      %v1519 = vrot.slane %v1517, 4
      %v1520 = vshll.u32 %v1474, 16
      %v1522 = vrot.slane %v1520, 5
      %v1523 = vor.u32 %v1519, %v1522
      %v1524 = vsel %vm1489, %v1514, %v1523
      %v1526 = vshrl.u32 %v1475, 16
      %v1528 = vrot.slane %v1526, 4
      %v1529 = vshll.u32 %v1475, 16
      %v1531 = vrot.slane %v1529, 5
      %v1532 = vor.u32 %v1528, %v1531
      %v1533 = vsel %vm1489, %v1523, %v1532
      %v1535 = vshrl.u32 %v1476, 16
      %v1537 = vrot.slane %v1535, 4
      %v1538 = vshll.u32 %v1476, 16
      %v1540 = vrot.slane %v1538, 5
      %v1541 = vor.u32 %v1537, %v1540
      %v1542 = vsel %vm1489, %v1532, %v1541
      %v1544 = vshrl.u32 %v1477, 16
      %v1546 = vrot.slane %v1544, 4
      %v1547 = vshll.u32 %v1477, 16
      %v1549 = vrot.slane %v1547, 5
      %v1550 = vor.u32 %v1546, %v1549
      %v1551 = vsel %vm1489, %v1541, %v1550
      %v1553 = vshrl.u32 %v1478, 16
      %v1555 = vrot.slane %v1553, 4
      %v1556 = vshll.u32 %v1478, 16
      %v1558 = vrot.slane %v1556, 5
      %v1559 = vor.u32 %v1555, %v1558
      %v1560 = vsel %vm1489, %v1550, %v1559
      %v1562 = vshrl.u32 %v1479, 16
      %v1564 = vrot.slane %v1562, 4
      %v1565 = vshll.u32 %v1479, 16
      %v1567 = vrot.slane %v1565, 5
      %v1568 = vor.u32 %v1564, %v1567
      %v1569 = vsel %vm1489, %v1559, %v1568
      %v1571 = vshrl.u32 %v1480, 16
      %v1573 = vrot.slane %v1571, 4
      %v1574 = vshll.u32 %v1480, 16
      %v1576 = vrot.slane %v1574, 5
      %v1577 = vor.u32 %v1573, %v1576
      %v1578 = vsel %vm1489, %v1568, %v1577
      %v1580 = vshrl.u32 %v1481, 16
      %v1582 = vrot.slane %v1580, 4
      %v1583 = vshll.u32 %v1481, 16
      %v1585 = vrot.slane %v1583, 5
      %v1586 = vor.u32 %v1582, %v1585
      %v1587 = vsel %vm1489, %v1577, %v1586
      %v1589 = vshrl.u32 %v1482, 16
      %v1591 = vrot.slane %v1589, 4
      %v1592 = vshll.u32 %v1482, 16
      %v1594 = vrot.slane %v1592, 5
      %v1595 = vor.u32 %v1591, %v1594
      %v1596 = vsel %vm1489, %v1586, %v1595
      %v1598 = vshrl.u32 %v1483, 16
      %v1600 = vrot.slane %v1598, 4
      %v1601 = vshll.u32 %v1483, 16
      %v1603 = vrot.slane %v1601, 5
      %v1604 = vor.u32 %v1600, %v1603
      %v1605 = vsel %vm1489, %v1595, %v1604
      %v1607 = vshrl.u32 %v1484, 16
      %v1609 = vrot.slane %v1607, 4
      %v1610 = vshll.u32 %v1484, 16
      %v1612 = vrot.slane %v1610, 5
      %v1613 = vor.u32 %v1609, %v1612
      %v1614 = vsel %vm1489, %v1604, %v1613
      %v1616 = vshrl.u32 %v1485, 16
      %v1618 = vrot.slane %v1616, 4
      %v1619 = vshll.u32 %v1485, 16
      %v1621 = vrot.slane %v1619, 5
      %v1622 = vor.u32 %v1618, %v1621
      %v1623 = vsel %vm1489, %v1613, %v1622
      %v1625 = vshrl.u32 %v1486, 16
      %v1627 = vrot.slane %v1625, 4
      %v1628 = vshll.u32 %v1486, 16
      %v1630 = vrot.slane %v1628, 5
      %v1631 = vor.u32 %v1627, %v1630
      %v1632 = vsel %vm1489, %v1622, %v1631
      %v1634 = vshrl.u32 %v1487, 16
      %v1636 = vrot.slane %v1634, 4
      %v1637 = vshll.u32 %v1487, 16
      %v1639 = vrot.slane %v1637, 5
      %v1640 = vor.u32 %v1636, %v1639
      %v1641 = vsel %vm1489, %v1631, %v1640
      %v1643 = vshrl.u32 %v1488, 16
      %v1645 = vrot.slane %v1643, 4
      %v1646 = vshll.u32 %v1488, 16
      %v1648 = vrot.slane %v1646, 5
      %v1649 = vor.u32 %v1645, %v1648
      %v1650 = vsel %vm1489, %v1640, %v1649
      %1651 = vrot.lane.b32.xlu0 %v1497, 4
      %v1652 = vpop.permute.xlu0 %1651
      %1653 = vrot.lane.b32.xlu0 %v1506, 4
      %v1654 = vpop.permute.xlu0 %1653
      %1655 = vrot.lane.b32.xlu0 %v1515, 4
      %v1656 = vpop.permute.xlu0 %1655
      %1657 = vrot.lane.b32.xlu0 %v1524, 4
      %v1658 = vpop.permute.xlu0 %1657
      %1659 = vrot.lane.b32.xlu0 %v1533, 4
      %v1660 = vpop.permute.xlu0 %1659
      %1661 = vrot.lane.b32.xlu0 %v1542, 4
      %v1662 = vpop.permute.xlu0 %1661
      %1663 = vrot.lane.b32.xlu0 %v1551, 4
      %v1664 = vpop.permute.xlu0 %1663
      %1665 = vrot.lane.b32.xlu0 %v1560, 4
      %v1666 = vpop.permute.xlu0 %1665
      %1667 = vrot.lane.b32.xlu0 %v1569, 4
      %v1668 = vpop.permute.xlu0 %1667
      %1669 = vrot.lane.b32.xlu0 %v1578, 4
      %v1670 = vpop.permute.xlu0 %1669
      %1671 = vrot.lane.b32.xlu0 %v1587, 4
      %v1672 = vpop.permute.xlu0 %1671
      %1673 = vrot.lane.b32.xlu0 %v1596, 4
      %v1674 = vpop.permute.xlu0 %1673
      %1675 = vrot.lane.b32.xlu0 %v1605, 4
      %v1676 = vpop.permute.xlu0 %1675
      %1677 = vrot.lane.b32.xlu0 %v1614, 4
      %v1678 = vpop.permute.xlu0 %1677
      %1679 = vrot.lane.b32.xlu0 %v1623, 4
      %v1680 = vpop.permute.xlu0 %1679
      %1681 = vrot.lane.b32.xlu0 %v1632, 4
      %v1682 = vpop.permute.xlu0 %1681
      %1683 = vrot.lane.b32.xlu0 %v1641, 4
      %v1684 = vpop.permute.xlu0 %1683
      %1685 = vrot.lane.b32.xlu0 %v1650, 4
      %v1686 = vpop.permute.xlu0 %1685
      %1687 = vrot.lane.b32.xlu0 %v1649, 4
      %v1688 = vpop.permute.xlu0 %1687
      %v1690 = vunpack.c.l.b16 %v1461
      %v1691 = vpack.c.b16 %v1690, %v1690
      %vm1692 = vcmask 1042432
      %v1693 = vrot.slane %v1471, 5
      %v1694 = vrot.slane %v1472, 5
      %v1695 = vsel %vm1692, %v1693, %v1694
      %v1696 = vrot.slane %v1473, 5
      %v1697 = vsel %vm1692, %v1694, %v1696
      %v1698 = vrot.slane %v1474, 5
      %v1699 = vsel %vm1692, %v1696, %v1698
      %v1700 = vrot.slane %v1475, 5
      %v1701 = vsel %vm1692, %v1698, %v1700
      %v1702 = vrot.slane %v1476, 5
      %v1703 = vsel %vm1692, %v1700, %v1702
      %v1704 = vrot.slane %v1477, 5
      %v1705 = vsel %vm1692, %v1702, %v1704
      %v1706 = vrot.slane %v1478, 5
      %v1707 = vsel %vm1692, %v1704, %v1706
      %v1708 = vrot.slane %v1479, 5
      %v1709 = vsel %vm1692, %v1706, %v1708
      %v1710 = vrot.slane %v1480, 5
      %v1711 = vsel %vm1692, %v1708, %v1710
      %v1712 = vrot.slane %v1481, 5
      %v1713 = vsel %vm1692, %v1710, %v1712
      %v1714 = vrot.slane %v1482, 5
      %v1715 = vsel %vm1692, %v1712, %v1714
      %v1716 = vrot.slane %v1483, 5
      %v1717 = vsel %vm1692, %v1714, %v1716
      %v1718 = vrot.slane %v1484, 5
      %v1719 = vsel %vm1692, %v1716, %v1718
      %v1720 = vrot.slane %v1485, 5
      %v1721 = vsel %vm1692, %v1718, %v1720
      %v1722 = vrot.slane %v1486, 5
      %v1723 = vsel %vm1692, %v1720, %v1722
      %v1724 = vrot.slane %v1487, 5
      %v1725 = vsel %vm1692, %v1722, %v1724
      %v1726 = vrot.slane %v1488, 5
      %v1727 = vsel %vm1692, %v1724, %v1726
      %v1728 = vrot.slane %v1691, 5
      %v1729 = vsel %vm1692, %v1726, %v1728
      %1730 = vrot.lane.b32.xlu0 %v1693, 8
      %v1731 = vpop.permute.xlu0 %1730
      %1732 = vrot.lane.b32.xlu0 %v1695, 8
      %v1733 = vpop.permute.xlu0 %1732
      %1734 = vrot.lane.b32.xlu0 %v1697, 8
      %v1735 = vpop.permute.xlu0 %1734
      %1736 = vrot.lane.b32.xlu0 %v1699, 8
      %v1737 = vpop.permute.xlu0 %1736
      %1738 = vrot.lane.b32.xlu0 %v1701, 8
      %v1739 = vpop.permute.xlu0 %1738
      %1740 = vrot.lane.b32.xlu0 %v1703, 8
      %v1741 = vpop.permute.xlu0 %1740
      %1742 = vrot.lane.b32.xlu0 %v1705, 8
      %v1743 = vpop.permute.xlu0 %1742
      %1744 = vrot.lane.b32.xlu0 %v1707, 8
      %v1745 = vpop.permute.xlu0 %1744
      %1746 = vrot.lane.b32.xlu0 %v1709, 8
      %v1747 = vpop.permute.xlu0 %1746
      %1748 = vrot.lane.b32.xlu0 %v1711, 8
      %v1749 = vpop.permute.xlu0 %1748
      %1750 = vrot.lane.b32.xlu0 %v1713, 8
      %v1751 = vpop.permute.xlu0 %1750
      %1752 = vrot.lane.b32.xlu0 %v1715, 8
      %v1753 = vpop.permute.xlu0 %1752
      %1754 = vrot.lane.b32.xlu0 %v1717, 8
      %v1755 = vpop.permute.xlu0 %1754
      %1756 = vrot.lane.b32.xlu0 %v1719, 8
      %v1757 = vpop.permute.xlu0 %1756
      %1758 = vrot.lane.b32.xlu0 %v1721, 8
      %v1759 = vpop.permute.xlu0 %1758
      %1760 = vrot.lane.b32.xlu0 %v1723, 8
      %v1761 = vpop.permute.xlu0 %1760
      %1762 = vrot.lane.b32.xlu0 %v1725, 8
      %v1763 = vpop.permute.xlu0 %1762
      %1764 = vrot.lane.b32.xlu0 %v1727, 8
      %v1765 = vpop.permute.xlu0 %1764
      %1766 = vrot.lane.b32.xlu0 %v1729, 8
      %v1767 = vpop.permute.xlu0 %1766
      %v1770 = vsel %vm1377, %v1468, %v1652
      %v1772 = vsel %vm1377, %v1088, %v1654
      %v1774 = vsel %vm1377, %v1089, %v1656
      %v1776 = vsel %vm1377, %v1090, %v1658
      %v1778 = vsel %vm1377, %v1091, %v1660
      %v1780 = vsel %vm1377, %v1092, %v1662
      %v1782 = vsel %vm1377, %v1093, %v1664
      %v1784 = vsel %vm1377, %v1094, %v1666
      %v1786 = vsel %vm1377, %v1095, %v1668
      %v1788 = vsel %vm1377, %v1096, %v1670
      %v1790 = vsel %vm1377, %v1097, %v1672
      %v1792 = vsel %vm1377, %v1098, %v1674
      %v1794 = vsel %vm1377, %v1099, %v1676
      %v1796 = vsel %vm1377, %v1100, %v1678
      %v1798 = vsel %vm1377, %v1101, %v1680
      %v1800 = vsel %vm1377, %v1102, %v1682
      %v1802 = vsel %vm1377, %v1103, %v1684
      %v1805 = vsel %vm1377, %v1469, %v1686
      %v1808 = vsel %vm1377, %v1470, %v1688
      %v1810 = vsel %vm1417, %v1770, %v1731
      %v1812 = vsel %vm1417, %v1772, %v1733
      %v1814 = vsel %vm1417, %v1774, %v1735
      %v1816 = vsel %vm1417, %v1776, %v1737
      %v1818 = vsel %vm1417, %v1778, %v1739
      %v1820 = vsel %vm1417, %v1780, %v1741
      %v1822 = vsel %vm1417, %v1782, %v1743
      %v1824 = vsel %vm1417, %v1784, %v1745
      %v1826 = vsel %vm1417, %v1786, %v1747
      %v1828 = vsel %vm1417, %v1788, %v1749
      %v1830 = vsel %vm1417, %v1790, %v1751
      %v1832 = vsel %vm1417, %v1792, %v1753
      %v1834 = vsel %vm1417, %v1794, %v1755
      %v1836 = vsel %vm1417, %v1796, %v1757
      %v1838 = vsel %vm1417, %v1798, %v1759
      %v1840 = vsel %vm1417, %v1800, %v1761
      %v1842 = vsel %vm1417, %v1802, %v1763
      %v1844 = vsel %vm1417, %v1805, %v1765
      %v1846 = vsel %vm1417, %v1808, %v1767
      %s1847 = scalar_lea.vmem %s3, 8
      %v1848 = vld [vmem:[%s1847] sm:$0xf]
      %v1849 = vld [vmem:[%s1847 + $0x4] sm:$0x3]
      %vm1850 = vsmask.f32 4352
      %v1851 = vshrl.u32 %v1810, 16
      %v1853 = vrot.slane %v1851, 3
      %v1854 = vshll.u32 %v1810, 16
      %v1856 = vrot.slane %v1854, 4
      %v1857 = vor.u32 %v1853, %v1856
      %v1858 = vshrl.u32 %v1812, 16
      %v1860 = vrot.slane %v1858, 3
      %v1861 = vshll.u32 %v1812, 16
      %v1863 = vrot.slane %v1861, 4
      %v1864 = vor.u32 %v1860, %v1863
      %v1865 = vsel %vm1850, %v1857, %v1864
      %v1866 = vshrl.u32 %v1814, 16
      %v1868 = vrot.slane %v1866, 3
      %v1869 = vshll.u32 %v1814, 16
      %v1871 = vrot.slane %v1869, 4
      %v1872 = vor.u32 %v1868, %v1871
      %v1873 = vsel %vm1850, %v1864, %v1872
      %v1874 = vshrl.u32 %v1816, 16
      %v1876 = vrot.slane %v1874, 3
      %v1877 = vshll.u32 %v1816, 16
      %v1879 = vrot.slane %v1877, 4
      %v1880 = vor.u32 %v1876, %v1879
      %v1881 = vsel %vm1850, %v1872, %v1880
      %v1882 = vshrl.u32 %v1818, 16
      %v1884 = vrot.slane %v1882, 3
      %v1885 = vshll.u32 %v1818, 16
      %v1887 = vrot.slane %v1885, 4
      %v1888 = vor.u32 %v1884, %v1887
      %v1889 = vsel %vm1850, %v1880, %v1888
      %v1890 = vshrl.u32 %v1820, 16
      %v1892 = vrot.slane %v1890, 3
      %v1893 = vshll.u32 %v1820, 16
      %v1895 = vrot.slane %v1893, 4
      %v1896 = vor.u32 %v1892, %v1895
      %v1897 = vsel %vm1850, %v1888, %v1896
      %v1898 = vshrl.u32 %v1822, 16
      %v1900 = vrot.slane %v1898, 3
      %v1901 = vshll.u32 %v1822, 16
      %v1903 = vrot.slane %v1901, 4
      %v1904 = vor.u32 %v1900, %v1903
      %v1905 = vsel %vm1850, %v1896, %v1904
      %v1906 = vshrl.u32 %v1824, 16
      %v1908 = vrot.slane %v1906, 3
      %v1909 = vshll.u32 %v1824, 16
      %v1911 = vrot.slane %v1909, 4
      %v1912 = vor.u32 %v1908, %v1911
      %v1913 = vsel %vm1850, %v1904, %v1912
      %v1914 = vshrl.u32 %v1826, 16
      %v1916 = vrot.slane %v1914, 3
      %v1917 = vshll.u32 %v1826, 16
      %v1919 = vrot.slane %v1917, 4
      %v1920 = vor.u32 %v1916, %v1919
      %v1921 = vsel %vm1850, %v1912, %v1920
      %v1922 = vshrl.u32 %v1828, 16
      %v1924 = vrot.slane %v1922, 3
      %v1925 = vshll.u32 %v1828, 16
      %v1927 = vrot.slane %v1925, 4
      %v1928 = vor.u32 %v1924, %v1927
      %v1929 = vsel %vm1850, %v1920, %v1928
      %v1930 = vshrl.u32 %v1830, 16
      %v1932 = vrot.slane %v1930, 3
      %v1933 = vshll.u32 %v1830, 16
      %v1935 = vrot.slane %v1933, 4
      %v1936 = vor.u32 %v1932, %v1935
      %v1937 = vsel %vm1850, %v1928, %v1936
      %v1938 = vshrl.u32 %v1832, 16
      %v1940 = vrot.slane %v1938, 3
      %v1941 = vshll.u32 %v1832, 16
      %v1943 = vrot.slane %v1941, 4
      %v1944 = vor.u32 %v1940, %v1943
      %v1945 = vsel %vm1850, %v1936, %v1944
      %v1946 = vshrl.u32 %v1834, 16
      %v1948 = vrot.slane %v1946, 3
      %v1949 = vshll.u32 %v1834, 16
      %v1951 = vrot.slane %v1949, 4
      %v1952 = vor.u32 %v1948, %v1951
      %v1953 = vsel %vm1850, %v1944, %v1952
      %v1954 = vshrl.u32 %v1836, 16
      %v1956 = vrot.slane %v1954, 3
      %v1957 = vshll.u32 %v1836, 16
      %v1959 = vrot.slane %v1957, 4
      %v1960 = vor.u32 %v1956, %v1959
      %v1961 = vsel %vm1850, %v1952, %v1960
      %v1962 = vshrl.u32 %v1838, 16
      %v1964 = vrot.slane %v1962, 3
      %v1965 = vshll.u32 %v1838, 16
      %v1967 = vrot.slane %v1965, 4
      %v1968 = vor.u32 %v1964, %v1967
      %v1969 = vsel %vm1850, %v1960, %v1968
      %v1970 = vshrl.u32 %v1840, 16
      %v1972 = vrot.slane %v1970, 3
      %v1973 = vshll.u32 %v1840, 16
      %v1975 = vrot.slane %v1973, 4
      %v1976 = vor.u32 %v1972, %v1975
      %v1977 = vsel %vm1850, %v1968, %v1976
      %v1978 = vshrl.u32 %v1842, 16
      %v1980 = vrot.slane %v1978, 3
      %v1981 = vshll.u32 %v1842, 16
      %v1983 = vrot.slane %v1981, 4
      %v1984 = vor.u32 %v1980, %v1983
      %v1985 = vsel %vm1850, %v1976, %v1984
      %v1986 = vshrl.u32 %v1844, 16
      %v1988 = vrot.slane %v1986, 3
      %v1989 = vshll.u32 %v1844, 16
      %v1991 = vrot.slane %v1989, 4
      %v1992 = vor.u32 %v1988, %v1991
      %v1993 = vsel %vm1850, %v1984, %v1992
      %v1994 = vshrl.u32 %v1846, 16
      %v1996 = vrot.slane %v1994, 3
      %v1997 = vshll.u32 %v1846, 16
      %v1999 = vrot.slane %v1997, 4
      %v2000 = vor.u32 %v1996, %v1999
      %v2001 = vsel %vm1850, %v1992, %v2000
      %v2004 = vunpack.c.l.b16 %v1848
      %v2005 = vunpack.c.l.b16 %v1849
      %v2006 = vpack.c.b16 %v2005, %v2004
      %vm2007 = vcmask 97280
      %v2009 = vsel %vm2007, %v1865, 0
      %v2012 = vsel %vm2007, %v1873, 0
      %v2015 = vsel %vm2007, %v1881, 0
      %v2018 = vsel %vm2007, %v1889, 0
      %v2021 = vsel %vm2007, %v1897, 0
      %v2024 = vsel %vm2007, %v1905, 0
      %v2027 = vsel %vm2007, %v1913, 0
      %v2030 = vsel %vm2007, %v1921, 0
      %v2033 = vsel %vm2007, %v1929, 0
      %v2036 = vsel %vm2007, %v1937, 0
      %v2039 = vsel %vm2007, %v1945, 0
      %v2042 = vsel %vm2007, %v1953, 0
      %v2045 = vsel %vm2007, %v1961, 0
      %v2048 = vsel %vm2007, %v1969, 0
      %v2051 = vsel %vm2007, %v1977, 0
      %v2054 = vsel %vm2007, %v1985, 0
      %v2057 = vsel %vm2007, %v1993, 0
      %v2060 = vsel %vm2007, %v2001, 0
      %vm2062 = vcmask 1045504
      %v2064 = vsel %vm2062, %v2006, 0
      %2066 = vmatpush.bf16.msra.mxu0 0
      %2067 = vmatpush.bf16.msra.mxu0 0
      %2068 = vmatpush.bf16.msra.mxu0 0
      %2069 = vmatpush.bf16.msra.mxu0 0
      %2070 = vmatpush.bf16.msra.mxu0 0
      %2071 = vmatpush.bf16.msra.mxu0 0
      %2072 = vmatpush.bf16.msra.mxu0 0
      %2073 = vmatpush.bf16.msra.mxu0 %v2064
      %2074 = vmatmul.bf16.gmra.mxu0 %v2009
      %v2075 = vpop.f32.mrf.mxu0
      %v2076 = vadd.f32 0.0, %v2075
      %v2077 = vpop.f32.mrf.mxu0
      %v2078 = vadd.f32 0.0, %v2077
      %2079 = vmatmul.bf16.gmra.mxu0 %v2012
      %v2080 = vpop.f32.mrf.mxu0
      %v2081 = vadd.f32 0.0, %v2080
      %v2082 = vpop.f32.mrf.mxu0
      %v2083 = vadd.f32 0.0, %v2082
      %2084 = vmatmul.bf16.gmra.mxu0 %v2015
      %v2085 = vpop.f32.mrf.mxu0
      %v2086 = vadd.f32 0.0, %v2085
      %v2087 = vpop.f32.mrf.mxu0
      %v2088 = vadd.f32 0.0, %v2087
      %2089 = vmatmul.bf16.gmra.mxu0 %v2018
      %v2090 = vpop.f32.mrf.mxu0
      %v2091 = vadd.f32 0.0, %v2090
      %v2092 = vpop.f32.mrf.mxu0
      %v2093 = vadd.f32 0.0, %v2092
      %2094 = vmatmul.bf16.gmra.mxu0 %v2021
      %v2095 = vpop.f32.mrf.mxu0
      %v2096 = vadd.f32 0.0, %v2095
      %v2097 = vpop.f32.mrf.mxu0
      %v2098 = vadd.f32 0.0, %v2097
      %2099 = vmatmul.bf16.gmra.mxu0 %v2024
      %v2100 = vpop.f32.mrf.mxu0
      %v2101 = vadd.f32 0.0, %v2100
      %v2102 = vpop.f32.mrf.mxu0
      %v2103 = vadd.f32 0.0, %v2102
      %2104 = vmatmul.bf16.gmra.mxu0 %v2027
      %v2105 = vpop.f32.mrf.mxu0
      %v2106 = vadd.f32 0.0, %v2105
      %v2107 = vpop.f32.mrf.mxu0
      %v2108 = vadd.f32 0.0, %v2107
      %2109 = vmatmul.bf16.gmra.mxu0 %v2030
      %v2110 = vpop.f32.mrf.mxu0
      %v2111 = vadd.f32 0.0, %v2110
      %v2112 = vpop.f32.mrf.mxu0
      %v2113 = vadd.f32 0.0, %v2112
      %2114 = vmatmul.bf16.gmra.mxu0 %v2033
      %v2115 = vpop.f32.mrf.mxu0
      %v2116 = vadd.f32 0.0, %v2115
      %v2117 = vpop.f32.mrf.mxu0
      %v2118 = vadd.f32 0.0, %v2117
      %2119 = vmatmul.bf16.gmra.mxu0 %v2036
      %v2120 = vpop.f32.mrf.mxu0
      %v2121 = vadd.f32 0.0, %v2120
      %v2122 = vpop.f32.mrf.mxu0
      %v2123 = vadd.f32 0.0, %v2122
      %2124 = vmatmul.bf16.gmra.mxu0 %v2039
      %v2125 = vpop.f32.mrf.mxu0
      %v2126 = vadd.f32 0.0, %v2125
      %v2127 = vpop.f32.mrf.mxu0
      %v2128 = vadd.f32 0.0, %v2127
      %2129 = vmatmul.bf16.gmra.mxu0 %v2042
      %v2130 = vpop.f32.mrf.mxu0
      %v2131 = vadd.f32 0.0, %v2130
      %v2132 = vpop.f32.mrf.mxu0
      %v2133 = vadd.f32 0.0, %v2132
      %2134 = vmatmul.bf16.gmra.mxu0 %v2045
      %v2135 = vpop.f32.mrf.mxu0
      %v2136 = vadd.f32 0.0, %v2135
      %v2137 = vpop.f32.mrf.mxu0
      %v2138 = vadd.f32 0.0, %v2137
      %2139 = vmatmul.bf16.gmra.mxu0 %v2048
      %v2140 = vpop.f32.mrf.mxu0
      %v2141 = vadd.f32 0.0, %v2140
      %v2142 = vpop.f32.mrf.mxu0
      %v2143 = vadd.f32 0.0, %v2142
      %2144 = vmatmul.bf16.gmra.mxu0 %v2051
      %v2145 = vpop.f32.mrf.mxu0
      %v2146 = vadd.f32 0.0, %v2145
      %v2147 = vpop.f32.mrf.mxu0
      %v2148 = vadd.f32 0.0, %v2147
      %2149 = vmatmul.bf16.gmra.mxu0 %v2054
      %v2150 = vpop.f32.mrf.mxu0
      %v2151 = vadd.f32 0.0, %v2150
      %v2152 = vpop.f32.mrf.mxu0
      %v2153 = vadd.f32 0.0, %v2152
      %2154 = vmatmul.bf16.gmra.mxu0 %v2057
      %v2155 = vpop.f32.mrf.mxu0
      %v2156 = vadd.f32 0.0, %v2155
      %v2157 = vpop.f32.mrf.mxu0
      %v2158 = vadd.f32 0.0, %v2157
      %2159 = vmatmul.bf16.gmra.mxu0 %v2060
      %v2160 = vpop.f32.mrf.mxu0
      %v2161 = vadd.f32 0.0, %v2160
      %v2162 = vpop.f32.mrf.mxu0
      %v2163 = vadd.f32 0.0, %v2162
      %2164 = vdwg.mxu0
      %vm2165 = vsmask.f32 5376
      %v2166 = vshrl.u32 %v1419, 16
      %v2168 = vrot.slane %v2166, 2
      %v2169 = vshll.u32 %v1419, 16
      %v2171 = vrot.slane %v2169, 3
      %v2172 = vor.u32 %v2168, %v2171
      %v2173 = vshrl.u32 %v1421, 16
      %v2175 = vrot.slane %v2173, 2
      %v2176 = vshll.u32 %v1421, 16
      %v2178 = vrot.slane %v2176, 3
      %v2179 = vor.u32 %v2175, %v2178
      %v2180 = vsel %vm2165, %v2172, %v2179
      %v2181 = vshrl.u32 %v1423, 16
      %v2183 = vrot.slane %v2181, 2
      %v2184 = vshll.u32 %v1423, 16
      %v2186 = vrot.slane %v2184, 3
      %v2187 = vor.u32 %v2183, %v2186
      %v2188 = vsel %vm2165, %v2179, %v2187
      %v2189 = vshrl.u32 %v1425, 16
      %v2191 = vrot.slane %v2189, 2
      %v2192 = vshll.u32 %v1425, 16
      %v2194 = vrot.slane %v2192, 3
      %v2195 = vor.u32 %v2191, %v2194
      %v2196 = vsel %vm2165, %v2187, %v2195
      %v2197 = vshrl.u32 %v1427, 16
      %v2199 = vrot.slane %v2197, 2
      %v2200 = vshll.u32 %v1427, 16
      %v2202 = vrot.slane %v2200, 3
      %v2203 = vor.u32 %v2199, %v2202
      %v2204 = vsel %vm2165, %v2195, %v2203
      %v2205 = vshrl.u32 %v1429, 16
      %v2207 = vrot.slane %v2205, 2
      %v2208 = vshll.u32 %v1429, 16
      %v2210 = vrot.slane %v2208, 3
      %v2211 = vor.u32 %v2207, %v2210
      %v2212 = vsel %vm2165, %v2203, %v2211
      %v2213 = vshrl.u32 %v1431, 16
      %v2215 = vrot.slane %v2213, 2
      %v2216 = vshll.u32 %v1431, 16
      %v2218 = vrot.slane %v2216, 3
      %v2219 = vor.u32 %v2215, %v2218
      %v2220 = vsel %vm2165, %v2211, %v2219
      %v2221 = vshrl.u32 %v1433, 16
      %v2223 = vrot.slane %v2221, 2
      %v2224 = vshll.u32 %v1433, 16
      %v2226 = vrot.slane %v2224, 3
      %v2227 = vor.u32 %v2223, %v2226
      %v2228 = vsel %vm2165, %v2219, %v2227
      %v2229 = vshrl.u32 %v1435, 16
      %v2231 = vrot.slane %v2229, 2
      %v2232 = vshll.u32 %v1435, 16
      %v2234 = vrot.slane %v2232, 3
      %v2235 = vor.u32 %v2231, %v2234
      %v2236 = vsel %vm2165, %v2227, %v2235
      %v2237 = vshrl.u32 %v1437, 16
      %v2239 = vrot.slane %v2237, 2
      %v2240 = vshll.u32 %v1437, 16
      %v2242 = vrot.slane %v2240, 3
      %v2243 = vor.u32 %v2239, %v2242
      %v2244 = vsel %vm2165, %v2235, %v2243
      %v2245 = vshrl.u32 %v1439, 16
      %v2247 = vrot.slane %v2245, 2
      %v2248 = vshll.u32 %v1439, 16
      %v2250 = vrot.slane %v2248, 3
      %v2251 = vor.u32 %v2247, %v2250
      %v2252 = vsel %vm2165, %v2243, %v2251
      %v2253 = vshrl.u32 %v1441, 16
      %v2255 = vrot.slane %v2253, 2
      %v2256 = vshll.u32 %v1441, 16
      %v2258 = vrot.slane %v2256, 3
      %v2259 = vor.u32 %v2255, %v2258
      %v2260 = vsel %vm2165, %v2251, %v2259
      %v2261 = vshrl.u32 %v1443, 16
      %v2263 = vrot.slane %v2261, 2
      %v2264 = vshll.u32 %v1443, 16
      %v2266 = vrot.slane %v2264, 3
      %v2267 = vor.u32 %v2263, %v2266
      %v2268 = vsel %vm2165, %v2259, %v2267
      %v2269 = vshrl.u32 %v1445, 16
      %v2271 = vrot.slane %v2269, 2
      %v2272 = vshll.u32 %v1445, 16
      %v2274 = vrot.slane %v2272, 3
      %v2275 = vor.u32 %v2271, %v2274
      %v2276 = vsel %vm2165, %v2267, %v2275
      %v2277 = vshrl.u32 %v1447, 16
      %v2279 = vrot.slane %v2277, 2
      %v2280 = vshll.u32 %v1447, 16
      %v2282 = vrot.slane %v2280, 3
      %v2283 = vor.u32 %v2279, %v2282
      %v2284 = vsel %vm2165, %v2275, %v2283
      %v2285 = vshrl.u32 %v1449, 16
      %v2287 = vrot.slane %v2285, 2
      %v2288 = vshll.u32 %v1449, 16
      %v2290 = vrot.slane %v2288, 3
      %v2291 = vor.u32 %v2287, %v2290
      %v2292 = vsel %vm2165, %v2283, %v2291
      %v2293 = vshrl.u32 %v1451, 16
      %v2295 = vrot.slane %v2293, 2
      %v2296 = vshll.u32 %v1451, 16
      %v2298 = vrot.slane %v2296, 3
      %v2299 = vor.u32 %v2295, %v2298
      %v2300 = vsel %vm2165, %v2291, %v2299
      %v2301 = vshrl.u32 %v1453, 16
      %v2303 = vrot.slane %v2301, 2
      %v2304 = vshll.u32 %v1453, 16
      %v2306 = vrot.slane %v2304, 3
      %v2307 = vor.u32 %v2303, %v2306
      %v2308 = vsel %vm2165, %v2299, %v2307
      %v2309 = vshrl.u32 %v1455, 16
      %v2311 = vrot.slane %v2309, 2
      %v2312 = vshll.u32 %v1455, 16
      %v2314 = vrot.slane %v2312, 3
      %v2315 = vor.u32 %v2311, %v2314
      %v2316 = vsel %vm2165, %v2307, %v2315
      %v2319 = vunpack.c.l.b16 %v1456
      %v2320 = vunpack.c.l.b16 %v1457
      %v2321 = vpack.c.b16 %v2320, %v2319
      %v2323 = vsel %vm2007, %v2180, 0
      %v2326 = vsel %vm2007, %v2188, 0
      %v2329 = vsel %vm2007, %v2196, 0
      %v2332 = vsel %vm2007, %v2204, 0
      %v2335 = vsel %vm2007, %v2212, 0
      %v2338 = vsel %vm2007, %v2220, 0
      %v2341 = vsel %vm2007, %v2228, 0
      %v2344 = vsel %vm2007, %v2236, 0
      %v2347 = vsel %vm2007, %v2244, 0
      %v2350 = vsel %vm2007, %v2252, 0
      %v2353 = vsel %vm2007, %v2260, 0
      %v2356 = vsel %vm2007, %v2268, 0
      %v2359 = vsel %vm2007, %v2276, 0
      %v2362 = vsel %vm2007, %v2284, 0
      %v2365 = vsel %vm2007, %v2292, 0
      %v2368 = vsel %vm2007, %v2300, 0
      %v2371 = vsel %vm2007, %v2308, 0
      %v2374 = vsel %vm2007, %v2316, 0
      %v2377 = vsel %vm2062, %v2321, 0
      %2379 = vmatpush.bf16.msra.mxu0 0
      %2380 = vmatpush.bf16.msra.mxu0 0
      %2381 = vmatpush.bf16.msra.mxu0 0
      %2382 = vmatpush.bf16.msra.mxu0 0
      %2383 = vmatpush.bf16.msra.mxu0 0
      %2384 = vmatpush.bf16.msra.mxu0 0
      %2385 = vmatpush.bf16.msra.mxu0 0
      %2386 = vmatpush.bf16.msra.mxu0 %v2377
      %2387 = vmatmul.bf16.gmra.mxu0 %v2323
      %v2388 = vpop.f32.mrf.mxu0
      %v2389 = vadd.f32 %v2076, %v2388
      %v2390 = vpop.f32.mrf.mxu0
      %v2391 = vadd.f32 %v2078, %v2390
      %2392 = vmatmul.bf16.gmra.mxu0 %v2326
      %v2393 = vpop.f32.mrf.mxu0
      %v2394 = vadd.f32 %v2081, %v2393
      %v2395 = vpop.f32.mrf.mxu0
      %v2396 = vadd.f32 %v2083, %v2395
      %2397 = vmatmul.bf16.gmra.mxu0 %v2329
      %v2398 = vpop.f32.mrf.mxu0
      %v2399 = vadd.f32 %v2086, %v2398
      %v2400 = vpop.f32.mrf.mxu0
      %v2401 = vadd.f32 %v2088, %v2400
      %2402 = vmatmul.bf16.gmra.mxu0 %v2332
      %v2403 = vpop.f32.mrf.mxu0
      %v2404 = vadd.f32 %v2091, %v2403
      %v2405 = vpop.f32.mrf.mxu0
      %v2406 = vadd.f32 %v2093, %v2405
      %2407 = vmatmul.bf16.gmra.mxu0 %v2335
      %v2408 = vpop.f32.mrf.mxu0
      %v2409 = vadd.f32 %v2096, %v2408
      %v2410 = vpop.f32.mrf.mxu0
      %v2411 = vadd.f32 %v2098, %v2410
      %2412 = vmatmul.bf16.gmra.mxu0 %v2338
      %v2413 = vpop.f32.mrf.mxu0
      %v2414 = vadd.f32 %v2101, %v2413
      %v2415 = vpop.f32.mrf.mxu0
      %v2416 = vadd.f32 %v2103, %v2415
      %2417 = vmatmul.bf16.gmra.mxu0 %v2341
      %v2418 = vpop.f32.mrf.mxu0
      %v2419 = vadd.f32 %v2106, %v2418
      %v2420 = vpop.f32.mrf.mxu0
      %v2421 = vadd.f32 %v2108, %v2420
      %2422 = vmatmul.bf16.gmra.mxu0 %v2344
      %v2423 = vpop.f32.mrf.mxu0
      %v2424 = vadd.f32 %v2111, %v2423
      %v2425 = vpop.f32.mrf.mxu0
      %v2426 = vadd.f32 %v2113, %v2425
      %2427 = vmatmul.bf16.gmra.mxu0 %v2347
      %v2428 = vpop.f32.mrf.mxu0
      %v2429 = vadd.f32 %v2116, %v2428
      %v2430 = vpop.f32.mrf.mxu0
      %v2431 = vadd.f32 %v2118, %v2430
      %2432 = vmatmul.bf16.gmra.mxu0 %v2350
      %v2433 = vpop.f32.mrf.mxu0
      %v2434 = vadd.f32 %v2121, %v2433
      %v2435 = vpop.f32.mrf.mxu0
      %v2436 = vadd.f32 %v2123, %v2435
      %2437 = vmatmul.bf16.gmra.mxu0 %v2353
      %v2438 = vpop.f32.mrf.mxu0
      %v2439 = vadd.f32 %v2126, %v2438
      %v2440 = vpop.f32.mrf.mxu0
      %v2441 = vadd.f32 %v2128, %v2440
      %2442 = vmatmul.bf16.gmra.mxu0 %v2356
      %v2443 = vpop.f32.mrf.mxu0
      %v2444 = vadd.f32 %v2131, %v2443
      %v2445 = vpop.f32.mrf.mxu0
      %v2446 = vadd.f32 %v2133, %v2445
      %2447 = vmatmul.bf16.gmra.mxu0 %v2359
      %v2448 = vpop.f32.mrf.mxu0
      %v2449 = vadd.f32 %v2136, %v2448
      %v2450 = vpop.f32.mrf.mxu0
      %v2451 = vadd.f32 %v2138, %v2450
      %2452 = vmatmul.bf16.gmra.mxu0 %v2362
      %v2453 = vpop.f32.mrf.mxu0
      %v2454 = vadd.f32 %v2141, %v2453
      %v2455 = vpop.f32.mrf.mxu0
      %v2456 = vadd.f32 %v2143, %v2455
      %2457 = vmatmul.bf16.gmra.mxu0 %v2365
      %v2458 = vpop.f32.mrf.mxu0
      %v2459 = vadd.f32 %v2146, %v2458
      %v2460 = vpop.f32.mrf.mxu0
      %v2461 = vadd.f32 %v2148, %v2460
      %2462 = vmatmul.bf16.gmra.mxu0 %v2368
      %v2463 = vpop.f32.mrf.mxu0
      %v2464 = vadd.f32 %v2151, %v2463
      %v2465 = vpop.f32.mrf.mxu0
      %v2466 = vadd.f32 %v2153, %v2465
      %2467 = vmatmul.bf16.gmra.mxu0 %v2371
      %v2468 = vpop.f32.mrf.mxu0
      %v2469 = vadd.f32 %v2156, %v2468
      %v2470 = vpop.f32.mrf.mxu0
      %v2471 = vadd.f32 %v2158, %v2470
      %2472 = vmatmul.bf16.gmra.mxu0 %v2374
      %v2473 = vpop.f32.mrf.mxu0
      %v2474 = vadd.f32 %v2161, %v2473
      %v2475 = vpop.f32.mrf.mxu0
      %v2476 = vadd.f32 %v2163, %v2475
      %2477 = vdwg.mxu0
      %v2478 = vld [vmem:[#allocation2 + $0x14] sm:$0xf]
      %v2479 = vld [vmem:[#allocation2 + $0x18] sm:$0xf]
      %v2480 = vld [vmem:[#allocation2 + $0x1c] sm:$0xf]
      %v2481 = vld [vmem:[#allocation2 + $0x20] sm:$0xf]
      %v2482 = vld [vmem:[#allocation2 + $0x24] sm:$0xf]
      %v2483 = vld [vmem:[#allocation2 + $0x28] sm:$0xf]
      %v2484 = vld [vmem:[#allocation2 + $0x2c] sm:$0xf]
      %v2485 = vld [vmem:[#allocation2 + $0x30] sm:$0xf]
      %v2486 = vld [vmem:[#allocation2 + $0x34] sm:$0xf]
      %v2487 = vld [vmem:[#allocation2 + $0x38] sm:$0xf]
      %v2488 = vld [vmem:[#allocation2 + $0x3c] sm:$0xf]
      %v2489 = vld [vmem:[#allocation2 + $0x40] sm:$0xf]
      %v2490 = vld [vmem:[#allocation2 + $0x44] sm:$0xf]
      %v2491 = vld [vmem:[#allocation2 + $0x48] sm:$0xf]
      %v2492 = vld [vmem:[#allocation2 + $0x4c] sm:$0xf]
      %v2493 = vld [vmem:[#allocation2 + $0x50] sm:$0xf]
      %v2494 = vld [vmem:[#allocation2 + $0x54] sm:$0xf]
      %v2495 = vld [vmem:[#allocation2 + $0x58] sm:$0xf]
      %v2496 = vld [vmem:[#allocation2 + $0x5c] sm:$0xf]
      %v2497 = vld [vmem:[#allocation2 + $0x60] sm:$0xf]
      %v2498 = vld [vmem:[#allocation2 + $0x64] sm:$0xf]
      %v2499 = vld [vmem:[#allocation2 + $0x68] sm:$0xf]
      %v2500 = vld [vmem:[#allocation2 + $0x6c] sm:$0xf]
      %v2501 = vld [vmem:[#allocation2 + $0x70] sm:$0xf]
      %v2502 = vld [vmem:[#allocation2 + $0x74] sm:$0xf]
      %v2503 = vld [vmem:[#allocation2 + $0x78] sm:$0xf]
      %v2504 = vld [vmem:[#allocation2 + $0x7c] sm:$0xf]
      %v2505 = vld [vmem:[#allocation2 + $0x80] sm:$0xf]
      %v2506 = vld [vmem:[#allocation2 + $0x84] sm:$0xf]
      %v2507 = vld [vmem:[#allocation2 + $0x88] sm:$0xf]
      %v2508 = vld [vmem:[#allocation2 + $0x8c] sm:$0xf]
      %v2509 = vld [vmem:[#allocation2 + $0x90] sm:$0xf]
      %v2510 = vld [vmem:[#allocation2 + $0x94] sm:$0xf]
      %v2511 = vld [vmem:[#allocation2 + $0x98] sm:$0xf]
      %v2512 = vld [vmem:[#allocation2 + $0x9c] sm:$0xf]
      %v2513 = vld [vmem:[#allocation2 + $0xa0] sm:$0xf]
      %v2514 = vld [vmem:[#allocation2 + $0xa4] sm:$0x1]
      %v2515 = vld [vmem:[#allocation2 + $0x14] sm:$0xe]
      %v2516 = vld [vmem:[#allocation2 + $0xa4] sm:$0x3]
      %v2554 = vunpack.c.l.b16 %v2478
      %v2555 = vunpack.c.l.b16 %v2479
      %v2556 = vunpack.c.l.b16 %v2480
      %v2557 = vunpack.c.l.b16 %v2481
      %v2558 = vunpack.c.l.b16 %v2482
      %v2559 = vunpack.c.l.b16 %v2483
      %v2560 = vunpack.c.l.b16 %v2484
      %v2561 = vunpack.c.l.b16 %v2485
      %v2562 = vunpack.c.l.b16 %v2486
      %v2563 = vunpack.c.l.b16 %v2487
      %v2564 = vunpack.c.l.b16 %v2488
      %v2565 = vunpack.c.l.b16 %v2489
      %v2566 = vunpack.c.l.b16 %v2490
      %v2567 = vunpack.c.l.b16 %v2491
      %v2568 = vunpack.c.l.b16 %v2492
      %v2569 = vunpack.c.l.b16 %v2493
      %v2570 = vunpack.c.l.b16 %v2494
      %v2571 = vunpack.c.l.b16 %v2495
      %v2572 = vunpack.c.l.b16 %v2496
      %v2573 = vunpack.c.l.b16 %v2497
      %v2574 = vunpack.c.l.b16 %v2498
      %v2575 = vunpack.c.l.b16 %v2499
      %v2576 = vunpack.c.l.b16 %v2500
      %v2577 = vunpack.c.l.b16 %v2501
      %v2578 = vunpack.c.l.b16 %v2502
      %v2579 = vunpack.c.l.b16 %v2503
      %v2580 = vunpack.c.l.b16 %v2504
      %v2581 = vunpack.c.l.b16 %v2505
      %v2582 = vunpack.c.l.b16 %v2506
      %v2583 = vunpack.c.l.b16 %v2507
      %v2584 = vunpack.c.l.b16 %v2508
      %v2585 = vunpack.c.l.b16 %v2509
      %v2586 = vunpack.c.l.b16 %v2510
      %v2587 = vunpack.c.l.b16 %v2511
      %v2588 = vunpack.c.l.b16 %v2512
      %v2589 = vunpack.c.l.b16 %v2513
      %v2590 = vunpack.c.l.b16 %v2514
      %v2591 = vpack.c.b16 %v2555, %v2554
      %v2592 = vpack.c.b16 %v2557, %v2556
      %v2593 = vpack.c.b16 %v2559, %v2558
      %v2594 = vpack.c.b16 %v2561, %v2560
      %v2595 = vpack.c.b16 %v2563, %v2562
      %v2596 = vpack.c.b16 %v2565, %v2564
      %v2597 = vpack.c.b16 %v2567, %v2566
      %v2598 = vpack.c.b16 %v2569, %v2568
      %v2599 = vpack.c.b16 %v2571, %v2570
      %v2600 = vpack.c.b16 %v2573, %v2572
      %v2601 = vpack.c.b16 %v2575, %v2574
      %v2602 = vpack.c.b16 %v2577, %v2576
      %v2603 = vpack.c.b16 %v2579, %v2578
      %v2604 = vpack.c.b16 %v2581, %v2580
      %v2605 = vpack.c.b16 %v2583, %v2582
      %v2606 = vpack.c.b16 %v2585, %v2584
      %v2607 = vpack.c.b16 %v2587, %v2586
      %v2608 = vpack.c.b16 %v2589, %v2588
      %v2609 = vpack.c.b16 %v2590, %v2590
      %v2611 = vunpack.c.l.b16 %v2515
      %v2612 = vpack.c.b16 %v2555, %v2611
      %v2614 = vshrl.u32 %v2612, 16
      %v2616 = vshll.u32 %v2612, 16
      %v2618 = vrot.slane %v2616, 1
      %v2619 = vor.u32 %v2614, %v2618
      %v2621 = vshll.u32 %v2592, 16
      %v2623 = vrot.slane %v2621, 1
      %v2624 = vsel %vm1108, %v2619, %v2623
      %v2625 = vshrl.u32 %v2592, 16
      %v2627 = vor.u32 %v2625, %v2623
      %v2629 = vshll.u32 %v2593, 16
      %v2631 = vrot.slane %v2629, 1
      %v2632 = vsel %vm1108, %v2627, %v2631
      %v2633 = vshrl.u32 %v2593, 16
      %v2635 = vor.u32 %v2633, %v2631
      %v2637 = vshll.u32 %v2594, 16
      %v2639 = vrot.slane %v2637, 1
      %v2640 = vsel %vm1108, %v2635, %v2639
      %v2641 = vshrl.u32 %v2594, 16
      %v2643 = vor.u32 %v2641, %v2639
      %v2645 = vshll.u32 %v2595, 16
      %v2647 = vrot.slane %v2645, 1
      %v2648 = vsel %vm1108, %v2643, %v2647
      %v2649 = vshrl.u32 %v2595, 16
      %v2651 = vor.u32 %v2649, %v2647
      %v2653 = vshll.u32 %v2596, 16
      %v2655 = vrot.slane %v2653, 1
      %v2656 = vsel %vm1108, %v2651, %v2655
      %v2657 = vshrl.u32 %v2596, 16
      %v2659 = vor.u32 %v2657, %v2655
      %v2661 = vshll.u32 %v2597, 16
      %v2663 = vrot.slane %v2661, 1
      %v2664 = vsel %vm1108, %v2659, %v2663
      %v2665 = vshrl.u32 %v2597, 16
      %v2667 = vor.u32 %v2665, %v2663
      %v2669 = vshll.u32 %v2598, 16
      %v2671 = vrot.slane %v2669, 1
      %v2672 = vsel %vm1108, %v2667, %v2671
      %v2673 = vshrl.u32 %v2598, 16
      %v2675 = vor.u32 %v2673, %v2671
      %v2677 = vshll.u32 %v2599, 16
      %v2679 = vrot.slane %v2677, 1
      %v2680 = vsel %vm1108, %v2675, %v2679
      %v2681 = vshrl.u32 %v2599, 16
      %v2683 = vor.u32 %v2681, %v2679
      %v2685 = vshll.u32 %v2600, 16
      %v2687 = vrot.slane %v2685, 1
      %v2688 = vsel %vm1108, %v2683, %v2687
      %v2689 = vshrl.u32 %v2600, 16
      %v2691 = vor.u32 %v2689, %v2687
      %v2693 = vshll.u32 %v2601, 16
      %v2695 = vrot.slane %v2693, 1
      %v2696 = vsel %vm1108, %v2691, %v2695
      %v2697 = vshrl.u32 %v2601, 16
      %v2699 = vor.u32 %v2697, %v2695
      %v2701 = vshll.u32 %v2602, 16
      %v2703 = vrot.slane %v2701, 1
      %v2704 = vsel %vm1108, %v2699, %v2703
      %v2705 = vshrl.u32 %v2602, 16
      %v2707 = vor.u32 %v2705, %v2703
      %v2709 = vshll.u32 %v2603, 16
      %v2711 = vrot.slane %v2709, 1
      %v2712 = vsel %vm1108, %v2707, %v2711
      %v2713 = vshrl.u32 %v2603, 16
      %v2715 = vor.u32 %v2713, %v2711
      %v2717 = vshll.u32 %v2604, 16
      %v2719 = vrot.slane %v2717, 1
      %v2720 = vsel %vm1108, %v2715, %v2719
      %v2721 = vshrl.u32 %v2604, 16
      %v2723 = vor.u32 %v2721, %v2719
      %v2725 = vshll.u32 %v2605, 16
      %v2727 = vrot.slane %v2725, 1
      %v2728 = vsel %vm1108, %v2723, %v2727
      %v2729 = vshrl.u32 %v2605, 16
      %v2731 = vor.u32 %v2729, %v2727
      %v2733 = vshll.u32 %v2606, 16
      %v2735 = vrot.slane %v2733, 1
      %v2736 = vsel %vm1108, %v2731, %v2735
      %v2737 = vshrl.u32 %v2606, 16
      %v2739 = vor.u32 %v2737, %v2735
      %v2741 = vshll.u32 %v2607, 16
      %v2743 = vrot.slane %v2741, 1
      %v2744 = vsel %vm1108, %v2739, %v2743
      %v2745 = vshrl.u32 %v2607, 16
      %v2747 = vor.u32 %v2745, %v2743
      %v2749 = vshll.u32 %v2608, 16
      %v2751 = vrot.slane %v2749, 1
      %v2752 = vsel %vm1108, %v2747, %v2751
      %v2753 = vshrl.u32 %v2608, 16
      %v2755 = vor.u32 %v2753, %v2751
      %v2757 = vshll.u32 %v2609, 16
      %v2759 = vrot.slane %v2757, 1
      %v2760 = vsel %vm1108, %v2755, %v2759
      %v2761 = vshrl.u32 %v2609, 16
      %2763 = vrot.lane.b32.xlu0 %v2624, 4
      %v2764 = vpop.permute.xlu0 %2763
      %2765 = vrot.lane.b32.xlu0 %v2632, 4
      %v2766 = vpop.permute.xlu0 %2765
      %2767 = vrot.lane.b32.xlu0 %v2640, 4
      %v2768 = vpop.permute.xlu0 %2767
      %2769 = vrot.lane.b32.xlu0 %v2648, 4
      %v2770 = vpop.permute.xlu0 %2769
      %2771 = vrot.lane.b32.xlu0 %v2656, 4
      %v2772 = vpop.permute.xlu0 %2771
      %2773 = vrot.lane.b32.xlu0 %v2664, 4
      %v2774 = vpop.permute.xlu0 %2773
      %2775 = vrot.lane.b32.xlu0 %v2672, 4
      %v2776 = vpop.permute.xlu0 %2775
      %2777 = vrot.lane.b32.xlu0 %v2680, 4
      %v2778 = vpop.permute.xlu0 %2777
      %2779 = vrot.lane.b32.xlu0 %v2688, 4
      %v2780 = vpop.permute.xlu0 %2779
      %2781 = vrot.lane.b32.xlu0 %v2696, 4
      %v2782 = vpop.permute.xlu0 %2781
      %2783 = vrot.lane.b32.xlu0 %v2704, 4
      %v2784 = vpop.permute.xlu0 %2783
      %2785 = vrot.lane.b32.xlu0 %v2712, 4
      %v2786 = vpop.permute.xlu0 %2785
      %2787 = vrot.lane.b32.xlu0 %v2720, 4
      %v2788 = vpop.permute.xlu0 %2787
      %2789 = vrot.lane.b32.xlu0 %v2728, 4
      %v2790 = vpop.permute.xlu0 %2789
      %2791 = vrot.lane.b32.xlu0 %v2736, 4
      %v2792 = vpop.permute.xlu0 %2791
      %2793 = vrot.lane.b32.xlu0 %v2744, 4
      %v2794 = vpop.permute.xlu0 %2793
      %2795 = vrot.lane.b32.xlu0 %v2752, 4
      %v2796 = vpop.permute.xlu0 %2795
      %2797 = vrot.lane.b32.xlu0 %v2760, 4
      %v2798 = vpop.permute.xlu0 %2797
      %2799 = vrot.lane.b32.xlu0 %v2761, 4
      %v2800 = vpop.permute.xlu0 %2799
      %v2802 = vunpack.c.l.b16 %v2516
      %v2803 = vpack.c.b16 %v2802, %v2802
      %v2804 = vrot.slane %v2612, 1
      %v2805 = vrot.slane %v2592, 1
      %v2806 = vsel %vm1301, %v2804, %v2805
      %v2807 = vrot.slane %v2593, 1
      %v2808 = vsel %vm1301, %v2805, %v2807
      %v2809 = vrot.slane %v2594, 1
      %v2810 = vsel %vm1301, %v2807, %v2809
      %v2811 = vrot.slane %v2595, 1
      %v2812 = vsel %vm1301, %v2809, %v2811
      %v2813 = vrot.slane %v2596, 1
      %v2814 = vsel %vm1301, %v2811, %v2813
      %v2815 = vrot.slane %v2597, 1
      %v2816 = vsel %vm1301, %v2813, %v2815
      %v2817 = vrot.slane %v2598, 1
      %v2818 = vsel %vm1301, %v2815, %v2817
      %v2819 = vrot.slane %v2599, 1
      %v2820 = vsel %vm1301, %v2817, %v2819
      %v2821 = vrot.slane %v2600, 1
      %v2822 = vsel %vm1301, %v2819, %v2821
      %v2823 = vrot.slane %v2601, 1
      %v2824 = vsel %vm1301, %v2821, %v2823
      %v2825 = vrot.slane %v2602, 1
      %v2826 = vsel %vm1301, %v2823, %v2825
      %v2827 = vrot.slane %v2603, 1
      %v2828 = vsel %vm1301, %v2825, %v2827
      %v2829 = vrot.slane %v2604, 1
      %v2830 = vsel %vm1301, %v2827, %v2829
      %v2831 = vrot.slane %v2605, 1
      %v2832 = vsel %vm1301, %v2829, %v2831
      %v2833 = vrot.slane %v2606, 1
      %v2834 = vsel %vm1301, %v2831, %v2833
      %v2835 = vrot.slane %v2607, 1
      %v2836 = vsel %vm1301, %v2833, %v2835
      %v2837 = vrot.slane %v2608, 1
      %v2838 = vsel %vm1301, %v2835, %v2837
      %v2839 = vrot.slane %v2803, 1
      %v2840 = vsel %vm1301, %v2837, %v2839
      %2841 = vrot.lane.b32.xlu0 %v2806, 8
      %v2842 = vpop.permute.xlu0 %2841
      %2843 = vrot.lane.b32.xlu0 %v2808, 8
      %v2844 = vpop.permute.xlu0 %2843
      %2845 = vrot.lane.b32.xlu0 %v2810, 8
      %v2846 = vpop.permute.xlu0 %2845
      %2847 = vrot.lane.b32.xlu0 %v2812, 8
      %v2848 = vpop.permute.xlu0 %2847
      %2849 = vrot.lane.b32.xlu0 %v2814, 8
      %v2850 = vpop.permute.xlu0 %2849
      %2851 = vrot.lane.b32.xlu0 %v2816, 8
      %v2852 = vpop.permute.xlu0 %2851
      %2853 = vrot.lane.b32.xlu0 %v2818, 8
      %v2854 = vpop.permute.xlu0 %2853
      %2855 = vrot.lane.b32.xlu0 %v2820, 8
      %v2856 = vpop.permute.xlu0 %2855
      %2857 = vrot.lane.b32.xlu0 %v2822, 8
      %v2858 = vpop.permute.xlu0 %2857
      %2859 = vrot.lane.b32.xlu0 %v2824, 8
      %v2860 = vpop.permute.xlu0 %2859
      %2861 = vrot.lane.b32.xlu0 %v2826, 8
      %v2862 = vpop.permute.xlu0 %2861
      %2863 = vrot.lane.b32.xlu0 %v2828, 8
      %v2864 = vpop.permute.xlu0 %2863
      %2865 = vrot.lane.b32.xlu0 %v2830, 8
      %v2866 = vpop.permute.xlu0 %2865
      %2867 = vrot.lane.b32.xlu0 %v2832, 8
      %v2868 = vpop.permute.xlu0 %2867
      %2869 = vrot.lane.b32.xlu0 %v2834, 8
      %v2870 = vpop.permute.xlu0 %2869
      %2871 = vrot.lane.b32.xlu0 %v2836, 8
      %v2872 = vpop.permute.xlu0 %2871
      %2873 = vrot.lane.b32.xlu0 %v2838, 8
      %v2874 = vpop.permute.xlu0 %2873
      %2875 = vrot.lane.b32.xlu0 %v2840, 8
      %v2876 = vpop.permute.xlu0 %2875
      %2877 = vrot.lane.b32.xlu0 %v2839, 8
      %v2878 = vpop.permute.xlu0 %2877
      %v2881 = vsel %vm1377, %v2591, %v2764
      %v2883 = vsel %vm1377, %v2592, %v2766
      %v2885 = vsel %vm1377, %v2593, %v2768
      %v2887 = vsel %vm1377, %v2594, %v2770
      %v2889 = vsel %vm1377, %v2595, %v2772
      %v2891 = vsel %vm1377, %v2596, %v2774
      %v2893 = vsel %vm1377, %v2597, %v2776
      %v2895 = vsel %vm1377, %v2598, %v2778
      %v2897 = vsel %vm1377, %v2599, %v2780
      %v2899 = vsel %vm1377, %v2600, %v2782
      %v2901 = vsel %vm1377, %v2601, %v2784
      %v2903 = vsel %vm1377, %v2602, %v2786
      %v2905 = vsel %vm1377, %v2603, %v2788
      %v2907 = vsel %vm1377, %v2604, %v2790
      %v2909 = vsel %vm1377, %v2605, %v2792
      %v2911 = vsel %vm1377, %v2606, %v2794
      %v2913 = vsel %vm1377, %v2607, %v2796
      %v2915 = vsel %vm1377, %v2608, %v2798
      %v2917 = vsel %vm1377, %v2609, %v2800
      %v2919 = vsel %vm1417, %v2881, %v2842
      %v2921 = vsel %vm1417, %v2883, %v2844
      %v2923 = vsel %vm1417, %v2885, %v2846
      %v2925 = vsel %vm1417, %v2887, %v2848
      %v2927 = vsel %vm1417, %v2889, %v2850
      %v2929 = vsel %vm1417, %v2891, %v2852
      %v2931 = vsel %vm1417, %v2893, %v2854
      %v2933 = vsel %vm1417, %v2895, %v2856
      %v2935 = vsel %vm1417, %v2897, %v2858
      %v2937 = vsel %vm1417, %v2899, %v2860
      %v2939 = vsel %vm1417, %v2901, %v2862
      %v2941 = vsel %vm1417, %v2903, %v2864
      %v2943 = vsel %vm1417, %v2905, %v2866
      %v2945 = vsel %vm1417, %v2907, %v2868
      %v2947 = vsel %vm1417, %v2909, %v2870
      %v2949 = vsel %vm1417, %v2911, %v2872
      %v2951 = vsel %vm1417, %v2913, %v2874
      %v2953 = vsel %vm1417, %v2915, %v2876
      %v2955 = vsel %vm1417, %v2917, %v2878
      %s2956 = scalar_lea.vmem %s3, 16
      %v2957 = vld [vmem:[%s2956] sm:$0xf]
      %v2958 = vld [vmem:[%s2956 + $0x4] sm:$0x3]
      %v2959 = vshrl.u32 %v2919, 16
      %v2961 = vshll.u32 %v2919, 16
      %v2963 = vrot.slane %v2961, 1
      %v2964 = vor.u32 %v2959, %v2963
      %v2965 = vshll.u32 %v2921, 16
      %v2967 = vrot.slane %v2965, 1
      %v2968 = vsel %vm1108, %v2964, %v2967
      %v2969 = vshrl.u32 %v2921, 16
      %v2971 = vor.u32 %v2969, %v2967
      %v2972 = vshll.u32 %v2923, 16
      %v2974 = vrot.slane %v2972, 1
      %v2975 = vsel %vm1108, %v2971, %v2974
      %v2976 = vshrl.u32 %v2923, 16
      %v2978 = vor.u32 %v2976, %v2974
      %v2979 = vshll.u32 %v2925, 16
      %v2981 = vrot.slane %v2979, 1
      %v2982 = vsel %vm1108, %v2978, %v2981
      %v2983 = vshrl.u32 %v2925, 16
      %v2985 = vor.u32 %v2983, %v2981
      %v2986 = vshll.u32 %v2927, 16
      %v2988 = vrot.slane %v2986, 1
      %v2989 = vsel %vm1108, %v2985, %v2988
      %v2990 = vshrl.u32 %v2927, 16
      %v2992 = vor.u32 %v2990, %v2988
      %v2993 = vshll.u32 %v2929, 16
      %v2995 = vrot.slane %v2993, 1
      %v2996 = vsel %vm1108, %v2992, %v2995
      %v2997 = vshrl.u32 %v2929, 16
      %v2999 = vor.u32 %v2997, %v2995
      %v3000 = vshll.u32 %v2931, 16
      %v3002 = vrot.slane %v3000, 1
      %v3003 = vsel %vm1108, %v2999, %v3002
      %v3004 = vshrl.u32 %v2931, 16
      %v3006 = vor.u32 %v3004, %v3002
      %v3007 = vshll.u32 %v2933, 16
      %v3009 = vrot.slane %v3007, 1
      %v3010 = vsel %vm1108, %v3006, %v3009
      %v3011 = vshrl.u32 %v2933, 16
      %v3013 = vor.u32 %v3011, %v3009
      %v3014 = vshll.u32 %v2935, 16
      %v3016 = vrot.slane %v3014, 1
      %v3017 = vsel %vm1108, %v3013, %v3016
      %v3018 = vshrl.u32 %v2935, 16
      %v3020 = vor.u32 %v3018, %v3016
      %v3021 = vshll.u32 %v2937, 16
      %v3023 = vrot.slane %v3021, 1
      %v3024 = vsel %vm1108, %v3020, %v3023
      %v3025 = vshrl.u32 %v2937, 16
      %v3027 = vor.u32 %v3025, %v3023
      %v3028 = vshll.u32 %v2939, 16
      %v3030 = vrot.slane %v3028, 1
      %v3031 = vsel %vm1108, %v3027, %v3030
      %v3032 = vshrl.u32 %v2939, 16
      %v3034 = vor.u32 %v3032, %v3030
      %v3035 = vshll.u32 %v2941, 16
      %v3037 = vrot.slane %v3035, 1
      %v3038 = vsel %vm1108, %v3034, %v3037
      %v3039 = vshrl.u32 %v2941, 16
      %v3041 = vor.u32 %v3039, %v3037
      %v3042 = vshll.u32 %v2943, 16
      %v3044 = vrot.slane %v3042, 1
      %v3045 = vsel %vm1108, %v3041, %v3044
      %v3046 = vshrl.u32 %v2943, 16
      %v3048 = vor.u32 %v3046, %v3044
      %v3049 = vshll.u32 %v2945, 16
      %v3051 = vrot.slane %v3049, 1
      %v3052 = vsel %vm1108, %v3048, %v3051
      %v3053 = vshrl.u32 %v2945, 16
      %v3055 = vor.u32 %v3053, %v3051
      %v3056 = vshll.u32 %v2947, 16
      %v3058 = vrot.slane %v3056, 1
      %v3059 = vsel %vm1108, %v3055, %v3058
      %v3060 = vshrl.u32 %v2947, 16
      %v3062 = vor.u32 %v3060, %v3058
      %v3063 = vshll.u32 %v2949, 16
      %v3065 = vrot.slane %v3063, 1
      %v3066 = vsel %vm1108, %v3062, %v3065
      %v3067 = vshrl.u32 %v2949, 16
      %v3069 = vor.u32 %v3067, %v3065
      %v3070 = vshll.u32 %v2951, 16
      %v3072 = vrot.slane %v3070, 1
      %v3073 = vsel %vm1108, %v3069, %v3072
      %v3074 = vshrl.u32 %v2951, 16
      %v3076 = vor.u32 %v3074, %v3072
      %v3077 = vshll.u32 %v2953, 16
      %v3079 = vrot.slane %v3077, 1
      %v3080 = vsel %vm1108, %v3076, %v3079
      %v3081 = vshrl.u32 %v2953, 16
      %v3083 = vor.u32 %v3081, %v3079
      %v3084 = vshll.u32 %v2955, 16
      %v3086 = vrot.slane %v3084, 1
      %v3087 = vsel %vm1108, %v3083, %v3086
      %v3090 = vunpack.c.l.b16 %v2957
      %v3091 = vunpack.c.l.b16 %v2958
      %v3092 = vpack.c.b16 %v3091, %v3090
      %v3094 = vsel %vm2007, %v2968, 0
      %v3097 = vsel %vm2007, %v2975, 0
      %v3100 = vsel %vm2007, %v2982, 0
      %v3103 = vsel %vm2007, %v2989, 0
      %v3106 = vsel %vm2007, %v2996, 0
      %v3109 = vsel %vm2007, %v3003, 0
      %v3112 = vsel %vm2007, %v3010, 0
      %v3115 = vsel %vm2007, %v3017, 0
      %v3118 = vsel %vm2007, %v3024, 0
      %v3121 = vsel %vm2007, %v3031, 0
      %v3124 = vsel %vm2007, %v3038, 0
      %v3127 = vsel %vm2007, %v3045, 0
      %v3130 = vsel %vm2007, %v3052, 0
      %v3133 = vsel %vm2007, %v3059, 0
      %v3136 = vsel %vm2007, %v3066, 0
      %v3139 = vsel %vm2007, %v3073, 0
      %v3142 = vsel %vm2007, %v3080, 0
      %v3145 = vsel %vm2007, %v3087, 0
      %v3148 = vsel %vm2062, %v3092, 0
      %3150 = vmatpush.bf16.msra.mxu0 0
      %3151 = vmatpush.bf16.msra.mxu0 0
      %3152 = vmatpush.bf16.msra.mxu0 0
      %3153 = vmatpush.bf16.msra.mxu0 0
      %3154 = vmatpush.bf16.msra.mxu0 0
      %3155 = vmatpush.bf16.msra.mxu0 0
      %3156 = vmatpush.bf16.msra.mxu0 0
      %3157 = vmatpush.bf16.msra.mxu0 %v3148
      %3158 = vmatmul.bf16.gmra.mxu0 %v3094
      %v3159 = vpop.f32.mrf.mxu0
      %v3160 = vadd.f32 0.0, %v3159
      %v3161 = vpop.f32.mrf.mxu0
      %v3162 = vadd.f32 0.0, %v3161
      %3163 = vmatmul.bf16.gmra.mxu0 %v3097
      %v3164 = vpop.f32.mrf.mxu0
      %v3165 = vadd.f32 0.0, %v3164
      %v3166 = vpop.f32.mrf.mxu0
      %v3167 = vadd.f32 0.0, %v3166
      %3168 = vmatmul.bf16.gmra.mxu0 %v3100
      %v3169 = vpop.f32.mrf.mxu0
      %v3170 = vadd.f32 0.0, %v3169
      %v3171 = vpop.f32.mrf.mxu0
      %v3172 = vadd.f32 0.0, %v3171
      %3173 = vmatmul.bf16.gmra.mxu0 %v3103
      %v3174 = vpop.f32.mrf.mxu0
      %v3175 = vadd.f32 0.0, %v3174
      %v3176 = vpop.f32.mrf.mxu0
      %v3177 = vadd.f32 0.0, %v3176
      %3178 = vmatmul.bf16.gmra.mxu0 %v3106
      %v3179 = vpop.f32.mrf.mxu0
      %v3180 = vadd.f32 0.0, %v3179
      %v3181 = vpop.f32.mrf.mxu0
      %v3182 = vadd.f32 0.0, %v3181
      %3183 = vmatmul.bf16.gmra.mxu0 %v3109
      %v3184 = vpop.f32.mrf.mxu0
      %v3185 = vadd.f32 0.0, %v3184
      %v3186 = vpop.f32.mrf.mxu0
      %v3187 = vadd.f32 0.0, %v3186
      %3188 = vmatmul.bf16.gmra.mxu0 %v3112
      %v3189 = vpop.f32.mrf.mxu0
      %v3190 = vadd.f32 0.0, %v3189
      %v3191 = vpop.f32.mrf.mxu0
      %v3192 = vadd.f32 0.0, %v3191
      %3193 = vmatmul.bf16.gmra.mxu0 %v3115
      %v3194 = vpop.f32.mrf.mxu0
      %v3195 = vadd.f32 0.0, %v3194
      %v3196 = vpop.f32.mrf.mxu0
      %v3197 = vadd.f32 0.0, %v3196
      %3198 = vmatmul.bf16.gmra.mxu0 %v3118
      %v3199 = vpop.f32.mrf.mxu0
      %v3200 = vadd.f32 0.0, %v3199
      %v3201 = vpop.f32.mrf.mxu0
      %v3202 = vadd.f32 0.0, %v3201
      %3203 = vmatmul.bf16.gmra.mxu0 %v3121
      %v3204 = vpop.f32.mrf.mxu0
      %v3205 = vadd.f32 0.0, %v3204
      %v3206 = vpop.f32.mrf.mxu0
      %v3207 = vadd.f32 0.0, %v3206
      %3208 = vmatmul.bf16.gmra.mxu0 %v3124
      %v3209 = vpop.f32.mrf.mxu0
      %v3210 = vadd.f32 0.0, %v3209
      %v3211 = vpop.f32.mrf.mxu0
      %v3212 = vadd.f32 0.0, %v3211
      %3213 = vmatmul.bf16.gmra.mxu0 %v3127
      %v3214 = vpop.f32.mrf.mxu0
      %v3215 = vadd.f32 0.0, %v3214
      %v3216 = vpop.f32.mrf.mxu0
      %v3217 = vadd.f32 0.0, %v3216
      %3218 = vmatmul.bf16.gmra.mxu0 %v3130
      %v3219 = vpop.f32.mrf.mxu0
      %v3220 = vadd.f32 0.0, %v3219
      %v3221 = vpop.f32.mrf.mxu0
      %v3222 = vadd.f32 0.0, %v3221
      %3223 = vmatmul.bf16.gmra.mxu0 %v3133
      %v3224 = vpop.f32.mrf.mxu0
      %v3225 = vadd.f32 0.0, %v3224
      %v3226 = vpop.f32.mrf.mxu0
      %v3227 = vadd.f32 0.0, %v3226
      %3228 = vmatmul.bf16.gmra.mxu0 %v3136
      %v3229 = vpop.f32.mrf.mxu0
      %v3230 = vadd.f32 0.0, %v3229
      %v3231 = vpop.f32.mrf.mxu0
      %v3232 = vadd.f32 0.0, %v3231
      %3233 = vmatmul.bf16.gmra.mxu0 %v3139
      %v3234 = vpop.f32.mrf.mxu0
      %v3235 = vadd.f32 0.0, %v3234
      %v3236 = vpop.f32.mrf.mxu0
      %v3237 = vadd.f32 0.0, %v3236
      %3238 = vmatmul.bf16.gmra.mxu0 %v3142
      %v3239 = vpop.f32.mrf.mxu0
      %v3240 = vadd.f32 0.0, %v3239
      %v3241 = vpop.f32.mrf.mxu0
      %v3242 = vadd.f32 0.0, %v3241
      %3243 = vmatmul.bf16.gmra.mxu0 %v3145
      %v3244 = vpop.f32.mrf.mxu0
      %v3245 = vadd.f32 0.0, %v3244
      %v3246 = vpop.f32.mrf.mxu0
      %v3247 = vadd.f32 0.0, %v3246
      %3248 = vdwg.mxu0
      %v3249 = vadd.f32 %v2389, %v3160
      %v3250 = vadd.f32 %v2391, %v3162
      %v3251 = vadd.f32 %v2394, %v3165
      %v3252 = vadd.f32 %v2396, %v3167
      %v3253 = vadd.f32 %v2399, %v3170
      %v3254 = vadd.f32 %v2401, %v3172
      %v3255 = vadd.f32 %v2404, %v3175
      %v3256 = vadd.f32 %v2406, %v3177
      %v3257 = vadd.f32 %v2409, %v3180
      %v3258 = vadd.f32 %v2411, %v3182
      %v3259 = vadd.f32 %v2414, %v3185
      %v3260 = vadd.f32 %v2416, %v3187
      %v3261 = vadd.f32 %v2419, %v3190
      %v3262 = vadd.f32 %v2421, %v3192
      %v3263 = vadd.f32 %v2424, %v3195
      %v3264 = vadd.f32 %v2426, %v3197
      %v3265 = vadd.f32 %v2429, %v3200
      %v3266 = vadd.f32 %v2431, %v3202
      %v3267 = vadd.f32 %v2434, %v3205
      %v3268 = vadd.f32 %v2436, %v3207
      %v3269 = vadd.f32 %v2439, %v3210
      %v3270 = vadd.f32 %v2441, %v3212
      %v3271 = vadd.f32 %v2444, %v3215
      %v3272 = vadd.f32 %v2446, %v3217
      %v3273 = vadd.f32 %v2449, %v3220
      %v3274 = vadd.f32 %v2451, %v3222
      %v3275 = vadd.f32 %v2454, %v3225
      %v3276 = vadd.f32 %v2456, %v3227
      %v3277 = vadd.f32 %v2459, %v3230
      %v3278 = vadd.f32 %v2461, %v3232
      %v3279 = vadd.f32 %v2464, %v3235
      %v3280 = vadd.f32 %v2466, %v3237
      %v3281 = vadd.f32 %v2469, %v3240
      %v3282 = vadd.f32 %v2471, %v3242
      %v3283 = vadd.f32 %v2474, %v3245
      %v3284 = vadd.f32 %v2476, %v3247
      %v3285 = vld [vmem:[%s6] sm:$0x1]
      %v3287 = vperm.slane %v3285, 0
      %v3289 = vadd.f32 %v3249, %v3287
      %v3290 = vadd.f32 %v3250, %v3287
      %v3291 = vadd.f32 %v3251, %v3287
      %v3292 = vadd.f32 %v3252, %v3287
      %v3293 = vadd.f32 %v3253, %v3287
      %v3294 = vadd.f32 %v3254, %v3287
      %v3295 = vadd.f32 %v3255, %v3287
      %v3296 = vadd.f32 %v3256, %v3287
      %v3297 = vadd.f32 %v3257, %v3287
      %v3298 = vadd.f32 %v3258, %v3287
      %v3299 = vadd.f32 %v3259, %v3287
      %v3300 = vadd.f32 %v3260, %v3287
      %v3301 = vadd.f32 %v3261, %v3287
      %v3302 = vadd.f32 %v3262, %v3287
      %v3303 = vadd.f32 %v3263, %v3287
      %v3304 = vadd.f32 %v3264, %v3287
      %v3305 = vadd.f32 %v3265, %v3287
      %v3306 = vadd.f32 %v3266, %v3287
      %v3307 = vadd.f32 %v3267, %v3287
      %v3308 = vadd.f32 %v3268, %v3287
      %v3309 = vadd.f32 %v3269, %v3287
      %v3310 = vadd.f32 %v3270, %v3287
      %v3311 = vadd.f32 %v3271, %v3287
      %v3312 = vadd.f32 %v3272, %v3287
      %v3313 = vadd.f32 %v3273, %v3287
      %v3314 = vadd.f32 %v3274, %v3287
      %v3315 = vadd.f32 %v3275, %v3287
      %v3316 = vadd.f32 %v3276, %v3287
      %v3317 = vadd.f32 %v3277, %v3287
      %v3318 = vadd.f32 %v3278, %v3287
      %v3319 = vadd.f32 %v3279, %v3287
      %v3320 = vadd.f32 %v3280, %v3287
      %v3321 = vadd.f32 %v3281, %v3287
      %v3322 = vadd.f32 %v3282, %v3287
      %v3323 = vadd.f32 %v3283, %v3287
      %v3324 = vadd.f32 %v3284, %v3287
      %v3325 = vmax.f32 %v3289, 0.0
      %v3326 = vmax.f32 %v3290, 0.0
      %v3327 = vmax.f32 %v3291, 0.0
      %v3328 = vmax.f32 %v3292, 0.0
      %v3329 = vmax.f32 %v3293, 0.0
      %v3330 = vmax.f32 %v3294, 0.0
      %v3331 = vmax.f32 %v3295, 0.0
      %v3332 = vmax.f32 %v3296, 0.0
      %v3333 = vmax.f32 %v3297, 0.0
      %v3334 = vmax.f32 %v3298, 0.0
      %v3335 = vmax.f32 %v3299, 0.0
      %v3336 = vmax.f32 %v3300, 0.0
      %v3337 = vmax.f32 %v3301, 0.0
      %v3338 = vmax.f32 %v3302, 0.0
      %v3339 = vmax.f32 %v3303, 0.0
      %v3340 = vmax.f32 %v3304, 0.0
      %v3341 = vmax.f32 %v3305, 0.0
      %v3342 = vmax.f32 %v3306, 0.0
      %v3343 = vmax.f32 %v3307, 0.0
      %v3344 = vmax.f32 %v3308, 0.0
      %v3345 = vmax.f32 %v3309, 0.0
      %v3346 = vmax.f32 %v3310, 0.0
      %v3347 = vmax.f32 %v3311, 0.0
      %v3348 = vmax.f32 %v3312, 0.0
      %v3349 = vmax.f32 %v3313, 0.0
      %v3350 = vmax.f32 %v3314, 0.0
      %v3351 = vmax.f32 %v3315, 0.0
      %v3352 = vmax.f32 %v3316, 0.0
      %v3353 = vmax.f32 %v3317, 0.0
      %v3354 = vmax.f32 %v3318, 0.0
      %v3355 = vmax.f32 %v3319, 0.0
      %v3356 = vmax.f32 %v3320, 0.0
      %v3357 = vmax.f32 %v3321, 0.0
      %v3358 = vmax.f32 %v3322, 0.0
      %v3359 = vmax.f32 %v3323, 0.0
      %v3360 = vmax.f32 %v3324, 0.0
      %v3361 = vpack.c.bf16 %v3326, %v3325
      %v3362 = vpack.c.bf16 %v3328, %v3327
      %v3363 = vpack.c.bf16 %v3330, %v3329
      %v3364 = vpack.c.bf16 %v3332, %v3331
      %v3365 = vpack.c.bf16 %v3334, %v3333
      %v3366 = vpack.c.bf16 %v3336, %v3335
      %v3367 = vpack.c.bf16 %v3338, %v3337
      %v3368 = vpack.c.bf16 %v3340, %v3339
      %v3369 = vpack.c.bf16 %v3342, %v3341
      %v3370 = vpack.c.bf16 %v3344, %v3343
      %v3371 = vpack.c.bf16 %v3346, %v3345
      %v3372 = vpack.c.bf16 %v3348, %v3347
      %v3373 = vpack.c.bf16 %v3350, %v3349
      %v3374 = vpack.c.bf16 %v3352, %v3351
      %v3375 = vpack.c.bf16 %v3354, %v3353
      %v3376 = vpack.c.bf16 %v3356, %v3355
      %v3377 = vpack.c.bf16 %v3358, %v3357
      %v3378 = vpack.c.bf16 %v3360, %v3359
      %v3379 = vld [vmem:[%s4] sm:$0x3]
      %v3380 = vld [vmem:[%s7] sm:$0x1]
      %v3382 = vperm.slane %v3380, 0
      %v3385 = vsel %vm1377, %v3361, 0
      %v3388 = vsel %vm1377, %v3362, 0
      %v3391 = vsel %vm1377, %v3363, 0
      %v3394 = vsel %vm1377, %v3364, 0
      %v3397 = vsel %vm1377, %v3365, 0
      %v3400 = vsel %vm1377, %v3366, 0
      %v3403 = vsel %vm1377, %v3367, 0
      %v3406 = vsel %vm1377, %v3368, 0
      %v3409 = vsel %vm1377, %v3369, 0
      %v3412 = vsel %vm1377, %v3370, 0
      %v3415 = vsel %vm1377, %v3371, 0
      %v3418 = vsel %vm1377, %v3372, 0
      %v3421 = vsel %vm1377, %v3373, 0
      %v3424 = vsel %vm1377, %v3374, 0
      %v3427 = vsel %vm1377, %v3375, 0
      %v3430 = vsel %vm1377, %v3376, 0
      %v3433 = vsel %vm1377, %v3377, 0
      %v3436 = vsel %vm1377, %v3378, 0
      %vm3438 = vcmask 1041408
      %v3440 = vsel %vm3438, %v3379, 0
      %3442 = vmatpush.bf16.msra.mxu0 0
      %3443 = vmatpush.bf16.msra.mxu0 0
      %3444 = vmatpush.bf16.msra.mxu0 0
      %3445 = vmatpush.bf16.msra.mxu0 0
      %3446 = vmatpush.bf16.msra.mxu0 0
      %3447 = vmatpush.bf16.msra.mxu0 0
      %3448 = vmatpush.bf16.msra.mxu0 0
      %3449 = vmatpush.bf16.msra.mxu0 %v3440
      %3450 = vmatmul.bf16.gmra.mxu0 %v3385
      %v3451 = vpop.f32.mrf.mxu0
      %v3452 = vadd.f32 %v3382, %v3451
      %v3453 = vpop.f32.mrf.mxu0
      %v3454 = vadd.f32 %v3382, %v3453
      %3455 = vmatmul.bf16.gmra.mxu0 %v3388
      %v3456 = vpop.f32.mrf.mxu0
      %v3457 = vadd.f32 %v3382, %v3456
      %v3458 = vpop.f32.mrf.mxu0
      %v3459 = vadd.f32 %v3382, %v3458
      %3460 = vmatmul.bf16.gmra.mxu0 %v3391
      %v3461 = vpop.f32.mrf.mxu0
      %v3462 = vadd.f32 %v3382, %v3461
      %v3463 = vpop.f32.mrf.mxu0
      %v3464 = vadd.f32 %v3382, %v3463
      %3465 = vmatmul.bf16.gmra.mxu0 %v3394
      %v3466 = vpop.f32.mrf.mxu0
      %v3467 = vadd.f32 %v3382, %v3466
      %v3468 = vpop.f32.mrf.mxu0
      %v3469 = vadd.f32 %v3382, %v3468
      %3470 = vmatmul.bf16.gmra.mxu0 %v3397
      %v3471 = vpop.f32.mrf.mxu0
      %v3472 = vadd.f32 %v3382, %v3471
      %v3473 = vpop.f32.mrf.mxu0
      %v3474 = vadd.f32 %v3382, %v3473
      %3475 = vmatmul.bf16.gmra.mxu0 %v3400
      %v3476 = vpop.f32.mrf.mxu0
      %v3477 = vadd.f32 %v3382, %v3476
      %v3478 = vpop.f32.mrf.mxu0
      %v3479 = vadd.f32 %v3382, %v3478
      %3480 = vmatmul.bf16.gmra.mxu0 %v3403
      %v3481 = vpop.f32.mrf.mxu0
      %v3482 = vadd.f32 %v3382, %v3481
      %v3483 = vpop.f32.mrf.mxu0
      %v3484 = vadd.f32 %v3382, %v3483
      %3485 = vmatmul.bf16.gmra.mxu0 %v3406
      %v3486 = vpop.f32.mrf.mxu0
      %v3487 = vadd.f32 %v3382, %v3486
      %v3488 = vpop.f32.mrf.mxu0
      %v3489 = vadd.f32 %v3382, %v3488
      %3490 = vmatmul.bf16.gmra.mxu0 %v3409
      %v3491 = vpop.f32.mrf.mxu0
      %v3492 = vadd.f32 %v3382, %v3491
      %v3493 = vpop.f32.mrf.mxu0
      %v3494 = vadd.f32 %v3382, %v3493
      %3495 = vmatmul.bf16.gmra.mxu0 %v3412
      %v3496 = vpop.f32.mrf.mxu0
      %v3497 = vadd.f32 %v3382, %v3496
      %v3498 = vpop.f32.mrf.mxu0
      %v3499 = vadd.f32 %v3382, %v3498
      %3500 = vmatmul.bf16.gmra.mxu0 %v3415
      %v3501 = vpop.f32.mrf.mxu0
      %v3502 = vadd.f32 %v3382, %v3501
      %v3503 = vpop.f32.mrf.mxu0
      %v3504 = vadd.f32 %v3382, %v3503
      %3505 = vmatmul.bf16.gmra.mxu0 %v3418
      %v3506 = vpop.f32.mrf.mxu0
      %v3507 = vadd.f32 %v3382, %v3506
      %v3508 = vpop.f32.mrf.mxu0
      %v3509 = vadd.f32 %v3382, %v3508
      %3510 = vmatmul.bf16.gmra.mxu0 %v3421
      %v3511 = vpop.f32.mrf.mxu0
      %v3512 = vadd.f32 %v3382, %v3511
      %v3513 = vpop.f32.mrf.mxu0
      %v3514 = vadd.f32 %v3382, %v3513
      %3515 = vmatmul.bf16.gmra.mxu0 %v3424
      %v3516 = vpop.f32.mrf.mxu0
      %v3517 = vadd.f32 %v3382, %v3516
      %v3518 = vpop.f32.mrf.mxu0
      %v3519 = vadd.f32 %v3382, %v3518
      %3520 = vmatmul.bf16.gmra.mxu0 %v3427
      %v3521 = vpop.f32.mrf.mxu0
      %v3522 = vadd.f32 %v3382, %v3521
      %v3523 = vpop.f32.mrf.mxu0
      %v3524 = vadd.f32 %v3382, %v3523
      %3525 = vmatmul.bf16.gmra.mxu0 %v3430
      %v3526 = vpop.f32.mrf.mxu0
      %v3527 = vadd.f32 %v3382, %v3526
      %v3528 = vpop.f32.mrf.mxu0
      %v3529 = vadd.f32 %v3382, %v3528
      %3530 = vmatmul.bf16.gmra.mxu0 %v3433
      %v3531 = vpop.f32.mrf.mxu0
      %v3532 = vadd.f32 %v3382, %v3531
      %v3533 = vpop.f32.mrf.mxu0
      %v3534 = vadd.f32 %v3382, %v3533
      %3535 = vmatmul.bf16.gmra.mxu0 %v3436
      %v3536 = vpop.f32.mrf.mxu0
      %v3537 = vadd.f32 %v3382, %v3536
      %v3538 = vpop.f32.mrf.mxu0
      %v3539 = vadd.f32 %v3382, %v3538
      %3540 = vdwg.mxu0
      %v3541 = vunpack.c.l.bf16 %v307
      %v3542 = vunpack.c.l.bf16 %v308
      %v3543 = vunpack.c.l.bf16 %v309
      %v3544 = vunpack.c.l.bf16 %v310
      %v3545 = vunpack.c.l.bf16 %v311
      %v3546 = vunpack.c.l.bf16 %v312
      %v3547 = vunpack.c.l.bf16 %v313
      %v3548 = vunpack.c.l.bf16 %v314
      %v3549 = vunpack.c.l.bf16 %v315
      %v3550 = vunpack.c.l.bf16 %v316
      %v3551 = vunpack.c.l.bf16 %v317
      %v3552 = vunpack.c.l.bf16 %v318
      %v3553 = vunpack.c.l.bf16 %v319
      %v3554 = vunpack.c.l.bf16 %v320
      %v3555 = vunpack.c.l.bf16 %v321
      %v3556 = vunpack.c.l.bf16 %v322
      %v3557 = vunpack.c.l.bf16 %v323
      %v3558 = vunpack.c.l.bf16 %v324
      %v3559 = vunpack.c.l.bf16 %v325
      %v3560 = vunpack.c.l.bf16 %v326
      %v3561 = vunpack.c.l.bf16 %v327
      %v3562 = vunpack.c.l.bf16 %v328
      %v3563 = vunpack.c.l.bf16 %v329
      %v3564 = vunpack.c.l.bf16 %v330
      %v3565 = vunpack.c.l.bf16 %v331
      %v3566 = vunpack.c.l.bf16 %v332
      %v3567 = vunpack.c.l.bf16 %v333
      %v3568 = vunpack.c.l.bf16 %v334
      %v3569 = vunpack.c.l.bf16 %v335
      %v3570 = vunpack.c.l.bf16 %v336
      %v3571 = vunpack.c.l.bf16 %v337
      %v3572 = vunpack.c.l.bf16 %v338
      %v3573 = vunpack.c.l.bf16 %v339
      %v3574 = vunpack.c.l.bf16 %v340
      %v3575 = vunpack.c.l.bf16 %v341
      %v3576 = vunpack.c.l.bf16 %v342
      %v3577 = vadd.f32 %v3452, %v3541
      %v3578 = vadd.f32 %v3454, %v3542
      %v3579 = vadd.f32 %v3457, %v3543
      %v3580 = vadd.f32 %v3459, %v3544
      %v3581 = vadd.f32 %v3462, %v3545
      %v3582 = vadd.f32 %v3464, %v3546
      %v3583 = vadd.f32 %v3467, %v3547
      %v3584 = vadd.f32 %v3469, %v3548
      %v3585 = vadd.f32 %v3472, %v3549
      %v3586 = vadd.f32 %v3474, %v3550
      %v3587 = vadd.f32 %v3477, %v3551
      %v3588 = vadd.f32 %v3479, %v3552
      %v3589 = vadd.f32 %v3482, %v3553
      %v3590 = vadd.f32 %v3484, %v3554
      %v3591 = vadd.f32 %v3487, %v3555
      %v3592 = vadd.f32 %v3489, %v3556
      %v3593 = vadd.f32 %v3492, %v3557
      %v3594 = vadd.f32 %v3494, %v3558
      %v3595 = vadd.f32 %v3497, %v3559
      %v3596 = vadd.f32 %v3499, %v3560
      %v3597 = vadd.f32 %v3502, %v3561
      %v3598 = vadd.f32 %v3504, %v3562
      %v3599 = vadd.f32 %v3507, %v3563
      %v3600 = vadd.f32 %v3509, %v3564
      %v3601 = vadd.f32 %v3512, %v3565
      %v3602 = vadd.f32 %v3514, %v3566
      %v3603 = vadd.f32 %v3517, %v3567
      %v3604 = vadd.f32 %v3519, %v3568
      %v3605 = vadd.f32 %v3522, %v3569
      %v3606 = vadd.f32 %v3524, %v3570
      %v3607 = vadd.f32 %v3527, %v3571
      %v3608 = vadd.f32 %v3529, %v3572
      %v3609 = vadd.f32 %v3532, %v3573
      %v3610 = vadd.f32 %v3534, %v3574
      %v3611 = vadd.f32 %v3537, %v3575
      %v3612 = vadd.f32 %v3539, %v3576
      %v3613 = vmax.f32 %v3577, 0.0
      %v3614 = vmax.f32 %v3578, 0.0
      %v3615 = vmax.f32 %v3579, 0.0
      %v3616 = vmax.f32 %v3580, 0.0
      %v3617 = vmax.f32 %v3581, 0.0
      %v3618 = vmax.f32 %v3582, 0.0
      %v3619 = vmax.f32 %v3583, 0.0
      %v3620 = vmax.f32 %v3584, 0.0
      %v3621 = vmax.f32 %v3585, 0.0
      %v3622 = vmax.f32 %v3586, 0.0
      %v3623 = vmax.f32 %v3587, 0.0
      %v3624 = vmax.f32 %v3588, 0.0
      %v3625 = vmax.f32 %v3589, 0.0
      %v3626 = vmax.f32 %v3590, 0.0
      %v3627 = vmax.f32 %v3591, 0.0
      %v3628 = vmax.f32 %v3592, 0.0
      %v3629 = vmax.f32 %v3593, 0.0
      %v3630 = vmax.f32 %v3594, 0.0
      %v3631 = vmax.f32 %v3595, 0.0
      %v3632 = vmax.f32 %v3596, 0.0
      %v3633 = vmax.f32 %v3597, 0.0
      %v3634 = vmax.f32 %v3598, 0.0
      %v3635 = vmax.f32 %v3599, 0.0
      %v3636 = vmax.f32 %v3600, 0.0
      %v3637 = vmax.f32 %v3601, 0.0
      %v3638 = vmax.f32 %v3602, 0.0
      %v3639 = vmax.f32 %v3603, 0.0
      %v3640 = vmax.f32 %v3604, 0.0
      %v3641 = vmax.f32 %v3605, 0.0
      %v3642 = vmax.f32 %v3606, 0.0
      %v3643 = vmax.f32 %v3607, 0.0
      %v3644 = vmax.f32 %v3608, 0.0
      %v3645 = vmax.f32 %v3609, 0.0
      %v3646 = vmax.f32 %v3610, 0.0
      %v3647 = vmax.f32 %v3611, 0.0
      %v3648 = vmax.f32 %v3612, 0.0
      %v3649 = vpack.c.bf16 %v3613, %v3613
      %v3650 = vpack.c.bf16 %v3614, %v3614
      %v3651 = vpack.c.bf16 %v3615, %v3615
      %v3652 = vpack.c.bf16 %v3616, %v3616
      %v3653 = vpack.c.bf16 %v3617, %v3617
      %v3654 = vpack.c.bf16 %v3618, %v3618
      %v3655 = vpack.c.bf16 %v3619, %v3619
      %v3656 = vpack.c.bf16 %v3620, %v3620
      %v3657 = vpack.c.bf16 %v3621, %v3621
      %v3658 = vpack.c.bf16 %v3622, %v3622
      %v3659 = vpack.c.bf16 %v3623, %v3623
      %v3660 = vpack.c.bf16 %v3624, %v3624
      %v3661 = vpack.c.bf16 %v3625, %v3625
      %v3662 = vpack.c.bf16 %v3626, %v3626
      %v3663 = vpack.c.bf16 %v3627, %v3627
      %v3664 = vpack.c.bf16 %v3628, %v3628
      %v3665 = vpack.c.bf16 %v3629, %v3629
      %v3666 = vpack.c.bf16 %v3630, %v3630
      %v3667 = vpack.c.bf16 %v3631, %v3631
      %v3668 = vpack.c.bf16 %v3632, %v3632
      %v3669 = vpack.c.bf16 %v3633, %v3633
      %v3670 = vpack.c.bf16 %v3634, %v3634
      %v3671 = vpack.c.bf16 %v3635, %v3635
      %v3672 = vpack.c.bf16 %v3636, %v3636
      %v3673 = vpack.c.bf16 %v3637, %v3637
      %v3674 = vpack.c.bf16 %v3638, %v3638
      %v3675 = vpack.c.bf16 %v3639, %v3639
      %v3676 = vpack.c.bf16 %v3640, %v3640
      %v3677 = vpack.c.bf16 %v3641, %v3641
      %v3678 = vpack.c.bf16 %v3642, %v3642
      %v3679 = vpack.c.bf16 %v3643, %v3643
      %v3680 = vpack.c.bf16 %v3644, %v3644
      %v3681 = vpack.c.bf16 %v3645, %v3645
      %v3682 = vpack.c.bf16 %v3646, %v3646
      %v3683 = vpack.c.bf16 %v3647, %v3647
      %v3684 = vpack.c.bf16 %v3648, %v3648
      %vm3685 = vcmask 125952
      %3686 = vst.msk [vmem:[%s305] sm:$0xf] %vm3685, %v3649
      %3687 = vst.msk [vmem:[%s305 + $0x4] sm:$0xf] %vm3685, %v3650
      %3688 = vst.msk [vmem:[%s305 + $0x8] sm:$0xf] %vm3685, %v3651
      %3689 = vst.msk [vmem:[%s305 + $0xc] sm:$0xf] %vm3685, %v3652
      %3690 = vst.msk [vmem:[%s305 + $0x10] sm:$0xf] %vm3685, %v3653
      %3691 = vst.msk [vmem:[%s305 + $0x14] sm:$0xf] %vm3685, %v3654
      %3692 = vst.msk [vmem:[%s305 + $0x18] sm:$0xf] %vm3685, %v3655
      %3693 = vst.msk [vmem:[%s305 + $0x1c] sm:$0xf] %vm3685, %v3656
      %3694 = vst.msk [vmem:[%s305 + $0x20] sm:$0xf] %vm3685, %v3657
      %3695 = vst.msk [vmem:[%s305 + $0x24] sm:$0xf] %vm3685, %v3658
      %3696 = vst.msk [vmem:[%s305 + $0x28] sm:$0xf] %vm3685, %v3659
      %3697 = vst.msk [vmem:[%s305 + $0x2c] sm:$0xf] %vm3685, %v3660
      %3698 = vst.msk [vmem:[%s305 + $0x30] sm:$0xf] %vm3685, %v3661
      %3699 = vst.msk [vmem:[%s305 + $0x34] sm:$0xf] %vm3685, %v3662
      %3700 = vst.msk [vmem:[%s305 + $0x38] sm:$0xf] %vm3685, %v3663
      %3701 = vst.msk [vmem:[%s305 + $0x3c] sm:$0xf] %vm3685, %v3664
      %3702 = vst.msk [vmem:[%s305 + $0x40] sm:$0xf] %vm3685, %v3665
      %3703 = vst.msk [vmem:[%s305 + $0x44] sm:$0xf] %vm3685, %v3666
      %3704 = vst.msk [vmem:[%s305 + $0x48] sm:$0xf] %vm3685, %v3667
      %3705 = vst.msk [vmem:[%s305 + $0x4c] sm:$0xf] %vm3685, %v3668
      %3706 = vst.msk [vmem:[%s305 + $0x50] sm:$0xf] %vm3685, %v3669
      %3707 = vst.msk [vmem:[%s305 + $0x54] sm:$0xf] %vm3685, %v3670
      %3708 = vst.msk [vmem:[%s305 + $0x58] sm:$0xf] %vm3685, %v3671
      %3709 = vst.msk [vmem:[%s305 + $0x5c] sm:$0xf] %vm3685, %v3672
      %3710 = vst.msk [vmem:[%s305 + $0x60] sm:$0xf] %vm3685, %v3673
      %3711 = vst.msk [vmem:[%s305 + $0x64] sm:$0xf] %vm3685, %v3674
      %3712 = vst.msk [vmem:[%s305 + $0x68] sm:$0xf] %vm3685, %v3675
      %3713 = vst.msk [vmem:[%s305 + $0x6c] sm:$0xf] %vm3685, %v3676
      %3714 = vst.msk [vmem:[%s305 + $0x70] sm:$0xf] %vm3685, %v3677
      %3715 = vst.msk [vmem:[%s305 + $0x74] sm:$0xf] %vm3685, %v3678
      %3716 = vst.msk [vmem:[%s305 + $0x78] sm:$0xf] %vm3685, %v3679
      %3717 = vst.msk [vmem:[%s305 + $0x7c] sm:$0xf] %vm3685, %v3680
      %3718 = vst.msk [vmem:[%s305 + $0x80] sm:$0xf] %vm3685, %v3681
      %3719 = vst.msk [vmem:[%s305 + $0x84] sm:$0xf] %vm3685, %v3682
      %3720 = vst.msk [vmem:[%s305 + $0x88] sm:$0xf] %vm3685, %v3683
      %3721 = vst.msk [vmem:[%s305 + $0x8c] sm:$0xf] %vm3685, %v3684
      %p3722 = scmp.lt.s32.totalorder %s19, 1
      %s3723 = scalar_select %p3722, %s19, 1
      %s3724 = smul.addr %s3723, 36
      %s3725 = smul.addr %s3724, 4
      %s3726 = scalar_lea.vmem %s8, %s3725
      // Predicated region
      $region53: #{conv_block_forward.1} parent=51 // pred_check
        %p3727 = pneg %p210
      $region54: #{conv_block_forward.1} parent=51 // pred_check_branch
        %3729 = sbr.rel (%p3727) target = $region56
      $region55: #{conv_block_forward.1} parent=51 // pred_region
        _
      $region56: #{conv_block_forward.1} parent=51 // pred_fallthru
        _
    $region52: #{conv_block_forward.1} parent=5 // pred_fallthru
      _
    %p3730 = scmp.le.s32.totalorder 2, %s14
    // Predicated region
    $region57: #{conv_block_forward.1} parent=5 // pred_check
      %p3731 = pneg %p3730
    $region58: #{conv_block_forward.1} parent=5 // pred_check_branch
      %3733 = sbr.rel (%p3731) target = $region60
    $region59: #{conv_block_forward.1} parent=5 // pred_region
      %s3734 = ssub.s32 %s14, 2
      // Predicated region
      $region61: #{conv_block_forward.1} parent=59 // pred_check
        %p3735 = pneg %p216
      $region62: #{conv_block_forward.1} parent=59 // pred_check_branch
        %3737 = sbr.rel (%p3735) target = $region64
      $region63: #{conv_block_forward.1} parent=59 // pred_region
        %p3738 = scmp.lt.s32.totalorder %s20, 1
        %s3739 = scalar_select %p3738, %s20, 1
        %s3740 = smul.addr %s3739, 36
        %s3741 = smul.addr %s3740, 4
        %s3742 = scalar_lea.vmem %s8, %s3741
      $region64: #{conv_block_forward.1} parent=59 // pred_fallthru
        _
    $region60: #{conv_block_forward.1} parent=5 // pred_fallthru
      _
  $region6: #{conv_block_forward.1} parent=0 // loop_footer
    %s18 = sadd.s32 1, %s14
  $region7: #{conv_block_forward.1} parent=0 // loop_footer_branch
    %13 = sbr.rel target = $region3
  $region8: #{conv_block_forward.1} parent=0 // loop_exit
    _

</llo_original>
